<compile_context>
chip_gen: v6e
topology: v6e:2x2x1
jax: 0.10.0
libtpu: 0.0.40
codegen_flags: <defaults>
</compile_context>

<pallas_src>
from functools import partial

import jax
import jax.numpy as jnp
import numpy as np
from jax.experimental import pallas as pl
from jax.experimental.pallas import tpu as pltpu


def aspp_kernel(xp_ref, w0_ref, w3_ref, bb_ref, wp_ref, c4_ref, out_ref, *,
                rates, max_r, tile_h, w, cin, cout):
    """One (batch b, row-tile i) block.

    xp_ref : (Hp, Wp, cin)      padded image of batch b (batch dim squeezed)
    w0_ref : (cin, cout)        1x1 conv weight, BN scale folded in
    w3_ref : (3, 9*cin, cout)   dilated conv weights (taps packed along K)
    bb_ref : (4, 1, cout)       per-branch BN biases (b0..b3)
    wp_ref : (4, cout, cout)    projection weight blocks (project-BN scale folded)
    c4_ref : (1, cout)          per-batch bias = relu-pool-branch @ wp4 + bp
    out_ref: (tile_h*w, cout)
    """
    i = pl.program_id(1)
    row0 = pl.multiple_of(i * tile_h, tile_h)       # first output row of tile
    m = tile_h * w

    def branch(patch_2d, w_mat, bias, wp_blk):
        z = jnp.dot(patch_2d, w_mat, preferred_element_type=jnp.float32)
        f = jnp.maximum(z + bias, 0.0)               # folded BN bias + ReLU
        return jnp.dot(f, wp_blk, preferred_element_type=jnp.float32)

    # --- branch 0: 1x1 conv on the un-padded center window ----------------
    x0 = xp_ref[pl.ds(row0 + max_r, tile_h), max_r:max_r + w, :]
    acc = branch(x0.reshape(m, cin), w0_ref[...], bb_ref[0], wp_ref[0])

    # --- branches 1-3: 3x3 dilated convs, 9 taps packed along K -----------
    for bi, r in enumerate(rates):
        taps = []
        for kh in range(3):
            ro = row0 + max_r + (kh - 1) * r         # dynamic row offset, >= 0
            for kw in range(3):
                co = max_r + (kw - 1) * r            # static col offset, >= 0
                p = xp_ref[pl.ds(ro, tile_h), co:co + w, :]
                taps.append(p.reshape(m, cin))
        xk = jnp.concatenate(taps, axis=-1)          # (m, 9*cin)
        acc = acc + branch(xk, w3_ref[bi], bb_ref[bi + 1], wp_ref[bi + 1])

    # --- branch 4 folded into per-batch bias (includes project-BN bias) ---
    out = jnp.maximum(acc + c4_ref[...], 0.0)        # (m, cout)
    out_ref[...] = out.astype(out_ref.dtype)


def aspp_forward(x_nchw, params, rates, tile_h=8):
    """x_nchw: (N, Cin, H, W) float32 -> (N, Cout, H, W) float32."""
    n, cin, h, w = x_nchw.shape
    cout = params["w0"].shape[1]
    max_r = max(rates)
    assert h % tile_h == 0, "tile_h must divide H"

    x = jnp.transpose(x_nchw, (0, 2, 3, 1)).astype(jnp.float32)   # NHWC

    # ---- wrapper-side weight prep (done once) ----------------------------
    # fold BN scale into the conv weights
    w0 = params["w0"] * params["s0"]                               # (cin, cout)
    w3 = jnp.stack([
        (params[f"w{k}"] * params[f"s{k}"].reshape(1, 1, 1, cout)
         ).reshape(9 * cin, cout)
        for k in (1, 2, 3)])                                       # (3, 9*cin, cout)
    bb = jnp.stack([params["b0"], params["b1"],
                    params["b2"], params["b3"]])                   # (4, 1, cout)

    # projection weight split into per-branch blocks, project-BN scale folded
    wp = (params["wp"] * params["sp"]).reshape(5, cout, cout)
    wp03, wp4 = wp[:4], wp[4]

    # branch 4: global average pool over the *unpadded* image, folded into a
    # per-batch projection bias (projection is linear => exact)
    pool = jnp.mean(x, axis=(1, 2))                                # (n, cin)
    f4 = jnp.maximum(pool @ (params["w4"] * params["s4"]) + params["b4"], 0.0)
    c4 = (f4 @ wp4 + params["bp"]).reshape(n, 1, cout)             # (n, 1, cout)

    # one zero-padded copy at max(rates); halos are sliced inside the kernel
    xp = jnp.pad(x, ((0, 0), (max_r, max_r), (max_r, max_r), (0, 0)))
    hp, wpd = h + 2 * max_r, w + 2 * max_r

    kernel = partial(aspp_kernel, rates=tuple(rates), max_r=max_r,
                     tile_h=tile_h, w=w, cin=cin, cout=cout)

    out_flat = pl.pallas_call(
        kernel,
        grid=(n, h // tile_h),
        in_specs=[
            # padded image of the current batch; index constant across row
            # tiles -> DMA'd once per batch and kept resident.
            pl.BlockSpec((None, hp, wpd, cin), lambda b, i: (b, 0, 0, 0)),
            pl.BlockSpec((cin, cout), lambda b, i: (0, 0)),
            pl.BlockSpec((3, 9 * cin, cout), lambda b, i: (0, 0, 0)),
            pl.BlockSpec((4, 1, cout), lambda b, i: (0, 0, 0)),
            pl.BlockSpec((4, cout, cout), lambda b, i: (0, 0, 0)),
            pl.BlockSpec((None, 1, cout), lambda b, i: (b, 0, 0)),
        ],
        out_specs=pl.BlockSpec((None, tile_h * w, cout), lambda b, i: (b, i, 0)),
        out_shape=jax.ShapeDtypeStruct((n, h * w, cout), jnp.float32),
        compiler_params=pltpu.CompilerParams(
            dimension_semantics=("parallel", "parallel"),
            vmem_limit_bytes=32 * 1024 * 1024),
    )(xp, w0, w3, bb, wp03, c4)

    out = out_flat.reshape(n, h, w, cout)
    return jnp.transpose(out, (0, 3, 1, 2))          # back to NCHW


def init_params(key, cin, cout):
    """Deterministic synthetic parameters. BN folded into (scale, bias)."""
    eps = 1e-5
    keys = jax.random.split(key, 18)
    params = {}

    def bn_fold(kg, kb):
        gamma = jax.random.uniform(kg, (1, cout), jnp.float32, 0.5, 1.5)
        beta = 0.1 * jax.random.normal(kb, (1, cout), jnp.float32)
        running_mean = jnp.zeros((1, cout), jnp.float32)
        running_var = jnp.ones((1, cout), jnp.float32)
        scale = gamma / jnp.sqrt(running_var + eps)
        bias = beta - running_mean * scale
        return scale, bias

    params["w0"] = 0.1 * jax.random.normal(keys[0], (cin, cout), jnp.float32)
    params["w1"] = 0.1 * jax.random.normal(keys[1], (3, 3, cin, cout), jnp.float32)
    params["w2"] = 0.1 * jax.random.normal(keys[2], (3, 3, cin, cout), jnp.float32)
    params["w3"] = 0.1 * jax.random.normal(keys[3], (3, 3, cin, cout), jnp.float32)
    params["w4"] = 0.1 * jax.random.normal(keys[4], (cin, cout), jnp.float32)
    params["wp"] = 0.1 * jax.random.normal(keys[5], (5 * cout, cout), jnp.float32)

    params["s0"], params["b0"] = bn_fold(keys[6], keys[7])
    params["s1"], params["b1"] = bn_fold(keys[8], keys[9])
    params["s2"], params["b2"] = bn_fold(keys[10], keys[11])
    params["s3"], params["b3"] = bn_fold(keys[12], keys[13])
    params["s4"], params["b4"] = bn_fold(keys[14], keys[15])
    params["sp"], params["bp"] = bn_fold(keys[16], keys[17])
    return params


def reference_forward(x_nchw, params, rates):
    """Pure-JAX reference (lax conv) for numerical verification."""
    x = jnp.transpose(x_nchw, (0, 2, 3, 1))  # NHWC

    def bn_relu(z, s, b):
        return jnp.maximum(z * s.reshape(1, 1, 1, -1) + b.reshape(1, 1, 1, -1), 0.0)

    def conv1x1(z, wmat):
        return jnp.einsum("nhwi,io->nhwo", z, wmat)

    def conv3x3(z, wmat, r):
        return jax.lax.conv_general_dilated(
            z, wmat, window_strides=(1, 1), padding=((r, r), (r, r)),
            rhs_dilation=(r, r),
            dimension_numbers=("NHWC", "HWIO", "NHWC"))

    f0 = bn_relu(conv1x1(x, params["w0"]), params["s0"], params["b0"])
    f1 = bn_relu(conv3x3(x, params["w1"], rates[0]), params["s1"], params["b1"])
    f2 = bn_relu(conv3x3(x, params["w2"], rates[1]), params["s2"], params["b2"])
    f3 = bn_relu(conv3x3(x, params["w3"], rates[2]), params["s3"], params["b3"])
    pool = jnp.mean(x, axis=(1, 2), keepdims=True)
    f4 = bn_relu(conv1x1(pool, params["w4"]), params["s4"], params["b4"])
    f4 = jnp.broadcast_to(f4, f0.shape)
    y = jnp.concatenate([f0, f1, f2, f3, f4], axis=-1)
    out = bn_relu(conv1x1(y, params["wp"]), params["sp"], params["bp"])
    return jnp.transpose(out, (0, 3, 1, 2))


if __name__ == "__main__":
    # module-consistent small shapes: in_channels=32 -> out_channels=4
    N, CIN, H, W = 2, 32, 16, 16
    RATES = (2, 4, 6)

    key = jax.random.PRNGKey(0)
    kx, kp = jax.random.split(key)
    x = jax.random.normal(kx, (N, CIN, H, W), jnp.float32)
    params = init_params(kp, CIN, CIN // 8)

    out = jax.block_until_ready(aspp_forward(x, params, RATES))
    ref = jax.block_until_ready(reference_forward(x, params, RATES))

    assert out.shape == (N, CIN // 8, H, W), out.shape
    np.testing.assert_allclose(np.asarray(out), np.asarray(ref),
                               rtol=1e-3, atol=1e-3)

    print("KERNEL_OK")
</pallas_src>

<mosaic_0001>
module attributes {stable_mosaic.version = 11 : i64} {
  func.func @aspp_kernel(%arg0: i32, %arg1: i32, %arg2: memref<1x28x28x32xf32, #tpu.memory_space<vmem>>, %arg3: memref<32x4xf32, #tpu.memory_space<vmem>>, %arg4: memref<3x288x4xf32, #tpu.memory_space<vmem>>, %arg5: memref<4x1x4xf32, #tpu.memory_space<vmem>>, %arg6: memref<4x4x4xf32, #tpu.memory_space<vmem>>, %arg7: memref<1x1x4xf32, #tpu.memory_space<vmem>>, %arg8: memref<1x128x4xf32, #tpu.memory_space<vmem>>) attributes {dimension_semantics = [#tpu.dimension_semantics<parallel>, #tpu.dimension_semantics<parallel>], iteration_bounds = array<i64: 2, 2>, scalar_prefetch = 0 : i64, scratch_operands = 0 : i64, tpu.core_type = #tpu.core_type<tc>, window_params = [{transform_indices = @transform_0, window_bounds = array<i64: 1, 28, 28, 32>}, {pipeline_mode = #tpu.pipeline_mode<synchronous>, transform_indices = @transform_1, window_bounds = array<i64: 32, 4>}, {pipeline_mode = #tpu.pipeline_mode<synchronous>, transform_indices = @transform_2, window_bounds = array<i64: 3, 288, 4>}, {pipeline_mode = #tpu.pipeline_mode<synchronous>, transform_indices = @transform_3, window_bounds = array<i64: 4, 1, 4>}, {pipeline_mode = #tpu.pipeline_mode<synchronous>, transform_indices = @transform_4, window_bounds = array<i64: 4, 4, 4>}, {transform_indices = @transform_5, window_bounds = array<i64: 1, 1, 4>}, {transform_indices = @transform_6, window_bounds = array<i64: 1, 128, 4>}]} {
    %c8_i32 = arith.constant 8 : i32
    %0 = arith.muli %arg1, %c8_i32 : i32
    %1 = tpu.assume_multiple %0, 8 : i32
    %c6_i32 = arith.constant 6 : i32
    %2 = arith.addi %1, %c6_i32 : i32
    %c0 = arith.constant 0 : index
    %3 = arith.index_cast %2 : i32 to index
    %c6 = arith.constant 6 : index
    %c0_0 = arith.constant 0 : index
    %4 = vector.load %arg2[%c0, %3, %c6, %c0_0] : memref<1x28x28x32xf32, #tpu.memory_space<vmem>>, vector<1x8x16x32xf32>
    %5 = vector.shape_cast %4 : vector<1x8x16x32xf32> to vector<8x16x32xf32>
    %6 = vector.shape_cast %5 : vector<8x16x32xf32> to vector<128x32xf32>
    %c0_1 = arith.constant 0 : index
    %c0_2 = arith.constant 0 : index
    %7 = vector.load %arg3[%c0_1, %c0_2] : memref<32x4xf32, #tpu.memory_space<vmem>>, vector<32x4xf32>
    %c0_3 = arith.constant 0 : index
    %c0_4 = arith.constant 0 : index
    %c0_5 = arith.constant 0 : index
    %8 = vector.load %arg5[%c0_3, %c0_4, %c0_5] : memref<4x1x4xf32, #tpu.memory_space<vmem>>, vector<1x1x4xf32>
    %9 = vector.shape_cast %8 : vector<1x1x4xf32> to vector<1x4xf32>
    %c0_6 = arith.constant 0 : index
    %c0_7 = arith.constant 0 : index
    %c0_8 = arith.constant 0 : index
    %10 = vector.load %arg6[%c0_6, %c0_7, %c0_8] : memref<4x4x4xf32, #tpu.memory_space<vmem>>, vector<1x4x4xf32>
    %11 = vector.shape_cast %10 : vector<1x4x4xf32> to vector<4x4xf32>
    %cst = arith.constant dense<0.000000e+00> : vector<128x4xf32>
    %12 = tpu.matmul %6, %7, %cst {dimension_numbers = #tpu.dot_dimension_numbers<[1], [0], [0], [1], [0, 0, 1, 1], [], []>} : vector<128x32xf32>, vector<32x4xf32>, vector<128x4xf32> -> vector<128x4xf32>
    %13 = vector.broadcast %9 : vector<1x4xf32> to vector<128x4xf32>
    %14 = arith.addf %12, %13 : vector<128x4xf32>
    %cst_9 = arith.constant 0.000000e+00 : f32
    %15 = vector.broadcast %cst_9 : f32 to vector<128x4xf32>
    %16 = arith.maximumf %14, %15 : vector<128x4xf32>
    %cst_10 = arith.constant dense<0.000000e+00> : vector<128x4xf32>
    %17 = tpu.matmul %16, %11, %cst_10 {dimension_numbers = #tpu.dot_dimension_numbers<[1], [0], [0], [1], [0, 0, 1, 1], [], []>} : vector<128x4xf32>, vector<4x4xf32>, vector<128x4xf32> -> vector<128x4xf32>
    %c6_i32_11 = arith.constant 6 : i32
    %18 = arith.addi %1, %c6_i32_11 : i32
    %c-2_i32 = arith.constant -2 : i32
    %19 = arith.addi %18, %c-2_i32 : i32
    %c0_12 = arith.constant 0 : index
    %20 = arith.index_cast %19 : i32 to index
    %c4 = arith.constant 4 : index
    %c0_13 = arith.constant 0 : index
    %21 = vector.load %arg2[%c0_12, %20, %c4, %c0_13] : memref<1x28x28x32xf32, #tpu.memory_space<vmem>>, vector<1x8x16x32xf32>
    %22 = vector.shape_cast %21 : vector<1x8x16x32xf32> to vector<8x16x32xf32>
    %23 = vector.shape_cast %22 : vector<8x16x32xf32> to vector<128x32xf32>
    %c0_14 = arith.constant 0 : index
    %24 = arith.index_cast %19 : i32 to index
    %c6_15 = arith.constant 6 : index
    %c0_16 = arith.constant 0 : index
    %25 = vector.load %arg2[%c0_14, %24, %c6_15, %c0_16] : memref<1x28x28x32xf32, #tpu.memory_space<vmem>>, vector<1x8x16x32xf32>
    %26 = vector.shape_cast %25 : vector<1x8x16x32xf32> to vector<8x16x32xf32>
    %27 = vector.shape_cast %26 : vector<8x16x32xf32> to vector<128x32xf32>
    %c0_17 = arith.constant 0 : index
    %28 = arith.index_cast %19 : i32 to index
    %c8 = arith.constant 8 : index
    %c0_18 = arith.constant 0 : index
    %29 = vector.load %arg2[%c0_17, %28, %c8, %c0_18] : memref<1x28x28x32xf32, #tpu.memory_space<vmem>>, vector<1x8x16x32xf32>
    %30 = vector.shape_cast %29 : vector<1x8x16x32xf32> to vector<8x16x32xf32>
    %31 = vector.shape_cast %30 : vector<8x16x32xf32> to vector<128x32xf32>
    %c6_i32_19 = arith.constant 6 : i32
    %32 = arith.addi %1, %c6_i32_19 : i32
    %c0_i32 = arith.constant 0 : i32
    %33 = arith.addi %32, %c0_i32 : i32
    %c0_20 = arith.constant 0 : index
    %34 = arith.index_cast %33 : i32 to index
    %c4_21 = arith.constant 4 : index
    %c0_22 = arith.constant 0 : index
    %35 = vector.load %arg2[%c0_20, %34, %c4_21, %c0_22] : memref<1x28x28x32xf32, #tpu.memory_space<vmem>>, vector<1x8x16x32xf32>
    %36 = vector.shape_cast %35 : vector<1x8x16x32xf32> to vector<8x16x32xf32>
    %37 = vector.shape_cast %36 : vector<8x16x32xf32> to vector<128x32xf32>
    %c0_23 = arith.constant 0 : index
    %38 = arith.index_cast %33 : i32 to index
    %c6_24 = arith.constant 6 : index
    %c0_25 = arith.constant 0 : index
    %39 = vector.load %arg2[%c0_23, %38, %c6_24, %c0_25] : memref<1x28x28x32xf32, #tpu.memory_space<vmem>>, vector<1x8x16x32xf32>
    %40 = vector.shape_cast %39 : vector<1x8x16x32xf32> to vector<8x16x32xf32>
    %41 = vector.shape_cast %40 : vector<8x16x32xf32> to vector<128x32xf32>
    %c0_26 = arith.constant 0 : index
    %42 = arith.index_cast %33 : i32 to index
    %c8_27 = arith.constant 8 : index
    %c0_28 = arith.constant 0 : index
    %43 = vector.load %arg2[%c0_26, %42, %c8_27, %c0_28] : memref<1x28x28x32xf32, #tpu.memory_space<vmem>>, vector<1x8x16x32xf32>
    %44 = vector.shape_cast %43 : vector<1x8x16x32xf32> to vector<8x16x32xf32>
    %45 = vector.shape_cast %44 : vector<8x16x32xf32> to vector<128x32xf32>
    %c6_i32_29 = arith.constant 6 : i32
    %46 = arith.addi %1, %c6_i32_29 : i32
    %c2_i32 = arith.constant 2 : i32
    %47 = arith.addi %46, %c2_i32 : i32
    %c0_30 = arith.constant 0 : index
    %48 = arith.index_cast %47 : i32 to index
    %c4_31 = arith.constant 4 : index
    %c0_32 = arith.constant 0 : index
    %49 = vector.load %arg2[%c0_30, %48, %c4_31, %c0_32] : memref<1x28x28x32xf32, #tpu.memory_space<vmem>>, vector<1x8x16x32xf32>
    %50 = vector.shape_cast %49 : vector<1x8x16x32xf32> to vector<8x16x32xf32>
    %51 = vector.shape_cast %50 : vector<8x16x32xf32> to vector<128x32xf32>
    %c0_33 = arith.constant 0 : index
    %52 = arith.index_cast %47 : i32 to index
    %c6_34 = arith.constant 6 : index
    %c0_35 = arith.constant 0 : index
    %53 = vector.load %arg2[%c0_33, %52, %c6_34, %c0_35] : memref<1x28x28x32xf32, #tpu.memory_space<vmem>>, vector<1x8x16x32xf32>
    %54 = vector.shape_cast %53 : vector<1x8x16x32xf32> to vector<8x16x32xf32>
    %55 = vector.shape_cast %54 : vector<8x16x32xf32> to vector<128x32xf32>
    %c0_36 = arith.constant 0 : index
    %56 = arith.index_cast %47 : i32 to index
    %c8_37 = arith.constant 8 : index
    %c0_38 = arith.constant 0 : index
    %57 = vector.load %arg2[%c0_36, %56, %c8_37, %c0_38] : memref<1x28x28x32xf32, #tpu.memory_space<vmem>>, vector<1x8x16x32xf32>
    %58 = vector.shape_cast %57 : vector<1x8x16x32xf32> to vector<8x16x32xf32>
    %59 = vector.shape_cast %58 : vector<8x16x32xf32> to vector<128x32xf32>
    %60 = tpu.concatenate %23, %27, %31, %37, %41, %45, %51, %55, %59 in 1 : vector<128x32xf32>, vector<128x32xf32>, vector<128x32xf32>, vector<128x32xf32>, vector<128x32xf32>, vector<128x32xf32>, vector<128x32xf32>, vector<128x32xf32>, vector<128x32xf32> -> vector<128x288xf32>
    %c0_39 = arith.constant 0 : index
    %c0_40 = arith.constant 0 : index
    %c0_41 = arith.constant 0 : index
    %61 = vector.load %arg4[%c0_39, %c0_40, %c0_41] : memref<3x288x4xf32, #tpu.memory_space<vmem>>, vector<1x288x4xf32>
    %62 = vector.shape_cast %61 : vector<1x288x4xf32> to vector<288x4xf32>
    %c1 = arith.constant 1 : index
    %c0_42 = arith.constant 0 : index
    %c0_43 = arith.constant 0 : index
    %63 = vector.load %arg5[%c1, %c0_42, %c0_43] : memref<4x1x4xf32, #tpu.memory_space<vmem>>, vector<1x1x4xf32>
    %64 = vector.shape_cast %63 : vector<1x1x4xf32> to vector<1x4xf32>
    %c1_44 = arith.constant 1 : index
    %c0_45 = arith.constant 0 : index
    %c0_46 = arith.constant 0 : index
    %65 = vector.load %arg6[%c1_44, %c0_45, %c0_46] : memref<4x4x4xf32, #tpu.memory_space<vmem>>, vector<1x4x4xf32>
    %66 = vector.shape_cast %65 : vector<1x4x4xf32> to vector<4x4xf32>
    %cst_47 = arith.constant dense<0.000000e+00> : vector<128x4xf32>
    %67 = tpu.matmul %60, %62, %cst_47 {dimension_numbers = #tpu.dot_dimension_numbers<[1], [0], [0], [1], [0, 0, 1, 1], [], []>} : vector<128x288xf32>, vector<288x4xf32>, vector<128x4xf32> -> vector<128x4xf32>
    %68 = vector.broadcast %64 : vector<1x4xf32> to vector<128x4xf32>
    %69 = arith.addf %67, %68 : vector<128x4xf32>
    %cst_48 = arith.constant 0.000000e+00 : f32
    %70 = vector.broadcast %cst_48 : f32 to vector<128x4xf32>
    %71 = arith.maximumf %69, %70 : vector<128x4xf32>
    %cst_49 = arith.constant dense<0.000000e+00> : vector<128x4xf32>
    %72 = tpu.matmul %71, %66, %cst_49 {dimension_numbers = #tpu.dot_dimension_numbers<[1], [0], [0], [1], [0, 0, 1, 1], [], []>} : vector<128x4xf32>, vector<4x4xf32>, vector<128x4xf32> -> vector<128x4xf32>
    %73 = arith.addf %17, %72 : vector<128x4xf32>
    %c6_i32_50 = arith.constant 6 : i32
    %74 = arith.addi %1, %c6_i32_50 : i32
    %c-4_i32 = arith.constant -4 : i32
    %75 = arith.addi %74, %c-4_i32 : i32
    %c0_51 = arith.constant 0 : index
    %76 = arith.index_cast %75 : i32 to index
    %c2 = arith.constant 2 : index
    %c0_52 = arith.constant 0 : index
    %77 = vector.load %arg2[%c0_51, %76, %c2, %c0_52] : memref<1x28x28x32xf32, #tpu.memory_space<vmem>>, vector<1x8x16x32xf32>
    %78 = vector.shape_cast %77 : vector<1x8x16x32xf32> to vector<8x16x32xf32>
    %79 = vector.shape_cast %78 : vector<8x16x32xf32> to vector<128x32xf32>
    %c0_53 = arith.constant 0 : index
    %80 = arith.index_cast %75 : i32 to index
    %c6_54 = arith.constant 6 : index
    %c0_55 = arith.constant 0 : index
    %81 = vector.load %arg2[%c0_53, %80, %c6_54, %c0_55] : memref<1x28x28x32xf32, #tpu.memory_space<vmem>>, vector<1x8x16x32xf32>
    %82 = vector.shape_cast %81 : vector<1x8x16x32xf32> to vector<8x16x32xf32>
    %83 = vector.shape_cast %82 : vector<8x16x32xf32> to vector<128x32xf32>
    %c0_56 = arith.constant 0 : index
    %84 = arith.index_cast %75 : i32 to index
    %c10 = arith.constant 10 : index
    %c0_57 = arith.constant 0 : index
    %85 = vector.load %arg2[%c0_56, %84, %c10, %c0_57] : memref<1x28x28x32xf32, #tpu.memory_space<vmem>>, vector<1x8x16x32xf32>
    %86 = vector.shape_cast %85 : vector<1x8x16x32xf32> to vector<8x16x32xf32>
    %87 = vector.shape_cast %86 : vector<8x16x32xf32> to vector<128x32xf32>
    %c6_i32_58 = arith.constant 6 : i32
    %88 = arith.addi %1, %c6_i32_58 : i32
    %c0_i32_59 = arith.constant 0 : i32
    %89 = arith.addi %88, %c0_i32_59 : i32
    %c0_60 = arith.constant 0 : index
    %90 = arith.index_cast %89 : i32 to index
    %c2_61 = arith.constant 2 : index
    %c0_62 = arith.constant 0 : index
    %91 = vector.load %arg2[%c0_60, %90, %c2_61, %c0_62] : memref<1x28x28x32xf32, #tpu.memory_space<vmem>>, vector<1x8x16x32xf32>
    %92 = vector.shape_cast %91 : vector<1x8x16x32xf32> to vector<8x16x32xf32>
    %93 = vector.shape_cast %92 : vector<8x16x32xf32> to vector<128x32xf32>
    %c0_63 = arith.constant 0 : index
    %94 = arith.index_cast %89 : i32 to index
    %c6_64 = arith.constant 6 : index
    %c0_65 = arith.constant 0 : index
    %95 = vector.load %arg2[%c0_63, %94, %c6_64, %c0_65] : memref<1x28x28x32xf32, #tpu.memory_space<vmem>>, vector<1x8x16x32xf32>
    %96 = vector.shape_cast %95 : vector<1x8x16x32xf32> to vector<8x16x32xf32>
    %97 = vector.shape_cast %96 : vector<8x16x32xf32> to vector<128x32xf32>
    %c0_66 = arith.constant 0 : index
    %98 = arith.index_cast %89 : i32 to index
    %c10_67 = arith.constant 10 : index
    %c0_68 = arith.constant 0 : index
    %99 = vector.load %arg2[%c0_66, %98, %c10_67, %c0_68] : memref<1x28x28x32xf32, #tpu.memory_space<vmem>>, vector<1x8x16x32xf32>
    %100 = vector.shape_cast %99 : vector<1x8x16x32xf32> to vector<8x16x32xf32>
    %101 = vector.shape_cast %100 : vector<8x16x32xf32> to vector<128x32xf32>
    %c6_i32_69 = arith.constant 6 : i32
    %102 = arith.addi %1, %c6_i32_69 : i32
    %c4_i32 = arith.constant 4 : i32
    %103 = arith.addi %102, %c4_i32 : i32
    %c0_70 = arith.constant 0 : index
    %104 = arith.index_cast %103 : i32 to index
    %c2_71 = arith.constant 2 : index
    %c0_72 = arith.constant 0 : index
    %105 = vector.load %arg2[%c0_70, %104, %c2_71, %c0_72] : memref<1x28x28x32xf32, #tpu.memory_space<vmem>>, vector<1x8x16x32xf32>
    %106 = vector.shape_cast %105 : vector<1x8x16x32xf32> to vector<8x16x32xf32>
    %107 = vector.shape_cast %106 : vector<8x16x32xf32> to vector<128x32xf32>
    %c0_73 = arith.constant 0 : index
    %108 = arith.index_cast %103 : i32 to index
    %c6_74 = arith.constant 6 : index
    %c0_75 = arith.constant 0 : index
    %109 = vector.load %arg2[%c0_73, %108, %c6_74, %c0_75] : memref<1x28x28x32xf32, #tpu.memory_space<vmem>>, vector<1x8x16x32xf32>
    %110 = vector.shape_cast %109 : vector<1x8x16x32xf32> to vector<8x16x32xf32>
    %111 = vector.shape_cast %110 : vector<8x16x32xf32> to vector<128x32xf32>
    %c0_76 = arith.constant 0 : index
    %112 = arith.index_cast %103 : i32 to index
    %c10_77 = arith.constant 10 : index
    %c0_78 = arith.constant 0 : index
    %113 = vector.load %arg2[%c0_76, %112, %c10_77, %c0_78] : memref<1x28x28x32xf32, #tpu.memory_space<vmem>>, vector<1x8x16x32xf32>
    %114 = vector.shape_cast %113 : vector<1x8x16x32xf32> to vector<8x16x32xf32>
    %115 = vector.shape_cast %114 : vector<8x16x32xf32> to vector<128x32xf32>
    %116 = tpu.concatenate %79, %83, %87, %93, %97, %101, %107, %111, %115 in 1 : vector<128x32xf32>, vector<128x32xf32>, vector<128x32xf32>, vector<128x32xf32>, vector<128x32xf32>, vector<128x32xf32>, vector<128x32xf32>, vector<128x32xf32>, vector<128x32xf32> -> vector<128x288xf32>
    %c1_79 = arith.constant 1 : index
    %c0_80 = arith.constant 0 : index
    %c0_81 = arith.constant 0 : index
    %117 = vector.load %arg4[%c1_79, %c0_80, %c0_81] : memref<3x288x4xf32, #tpu.memory_space<vmem>>, vector<1x288x4xf32>
    %118 = vector.shape_cast %117 : vector<1x288x4xf32> to vector<288x4xf32>
    %c2_82 = arith.constant 2 : index
    %c0_83 = arith.constant 0 : index
    %c0_84 = arith.constant 0 : index
    %119 = vector.load %arg5[%c2_82, %c0_83, %c0_84] : memref<4x1x4xf32, #tpu.memory_space<vmem>>, vector<1x1x4xf32>
    %120 = vector.shape_cast %119 : vector<1x1x4xf32> to vector<1x4xf32>
    %c2_85 = arith.constant 2 : index
    %c0_86 = arith.constant 0 : index
    %c0_87 = arith.constant 0 : index
    %121 = vector.load %arg6[%c2_85, %c0_86, %c0_87] : memref<4x4x4xf32, #tpu.memory_space<vmem>>, vector<1x4x4xf32>
    %122 = vector.shape_cast %121 : vector<1x4x4xf32> to vector<4x4xf32>
    %cst_88 = arith.constant dense<0.000000e+00> : vector<128x4xf32>
    %123 = tpu.matmul %116, %118, %cst_88 {dimension_numbers = #tpu.dot_dimension_numbers<[1], [0], [0], [1], [0, 0, 1, 1], [], []>} : vector<128x288xf32>, vector<288x4xf32>, vector<128x4xf32> -> vector<128x4xf32>
    %124 = vector.broadcast %120 : vector<1x4xf32> to vector<128x4xf32>
    %125 = arith.addf %123, %124 : vector<128x4xf32>
    %cst_89 = arith.constant 0.000000e+00 : f32
    %126 = vector.broadcast %cst_89 : f32 to vector<128x4xf32>
    %127 = arith.maximumf %125, %126 : vector<128x4xf32>
    %cst_90 = arith.constant dense<0.000000e+00> : vector<128x4xf32>
    %128 = tpu.matmul %127, %122, %cst_90 {dimension_numbers = #tpu.dot_dimension_numbers<[1], [0], [0], [1], [0, 0, 1, 1], [], []>} : vector<128x4xf32>, vector<4x4xf32>, vector<128x4xf32> -> vector<128x4xf32>
    %129 = arith.addf %73, %128 : vector<128x4xf32>
    %c6_i32_91 = arith.constant 6 : i32
    %130 = arith.addi %1, %c6_i32_91 : i32
    %c-6_i32 = arith.constant -6 : i32
    %131 = arith.addi %130, %c-6_i32 : i32
    %c0_92 = arith.constant 0 : index
    %132 = arith.index_cast %131 : i32 to index
    %c0_93 = arith.constant 0 : index
    %c0_94 = arith.constant 0 : index
    %133 = vector.load %arg2[%c0_92, %132, %c0_93, %c0_94] : memref<1x28x28x32xf32, #tpu.memory_space<vmem>>, vector<1x8x16x32xf32>
    %134 = vector.shape_cast %133 : vector<1x8x16x32xf32> to vector<8x16x32xf32>
    %135 = vector.shape_cast %134 : vector<8x16x32xf32> to vector<128x32xf32>
    %c0_95 = arith.constant 0 : index
    %136 = arith.index_cast %131 : i32 to index
    %c6_96 = arith.constant 6 : index
    %c0_97 = arith.constant 0 : index
    %137 = vector.load %arg2[%c0_95, %136, %c6_96, %c0_97] : memref<1x28x28x32xf32, #tpu.memory_space<vmem>>, vector<1x8x16x32xf32>
    %138 = vector.shape_cast %137 : vector<1x8x16x32xf32> to vector<8x16x32xf32>
    %139 = vector.shape_cast %138 : vector<8x16x32xf32> to vector<128x32xf32>
    %c0_98 = arith.constant 0 : index
    %140 = arith.index_cast %131 : i32 to index
    %c12 = arith.constant 12 : index
    %c0_99 = arith.constant 0 : index
    %141 = vector.load %arg2[%c0_98, %140, %c12, %c0_99] : memref<1x28x28x32xf32, #tpu.memory_space<vmem>>, vector<1x8x16x32xf32>
    %142 = vector.shape_cast %141 : vector<1x8x16x32xf32> to vector<8x16x32xf32>
    %143 = vector.shape_cast %142 : vector<8x16x32xf32> to vector<128x32xf32>
    %c6_i32_100 = arith.constant 6 : i32
    %144 = arith.addi %1, %c6_i32_100 : i32
    %c0_i32_101 = arith.constant 0 : i32
    %145 = arith.addi %144, %c0_i32_101 : i32
    %c0_102 = arith.constant 0 : index
    %146 = arith.index_cast %145 : i32 to index
    %c0_103 = arith.constant 0 : index
    %c0_104 = arith.constant 0 : index
    %147 = vector.load %arg2[%c0_102, %146, %c0_103, %c0_104] : memref<1x28x28x32xf32, #tpu.memory_space<vmem>>, vector<1x8x16x32xf32>
    %148 = vector.shape_cast %147 : vector<1x8x16x32xf32> to vector<8x16x32xf32>
    %149 = vector.shape_cast %148 : vector<8x16x32xf32> to vector<128x32xf32>
    %c0_105 = arith.constant 0 : index
    %150 = arith.index_cast %145 : i32 to index
    %c6_106 = arith.constant 6 : index
    %c0_107 = arith.constant 0 : index
    %151 = vector.load %arg2[%c0_105, %150, %c6_106, %c0_107] : memref<1x28x28x32xf32, #tpu.memory_space<vmem>>, vector<1x8x16x32xf32>
    %152 = vector.shape_cast %151 : vector<1x8x16x32xf32> to vector<8x16x32xf32>
    %153 = vector.shape_cast %152 : vector<8x16x32xf32> to vector<128x32xf32>
    %c0_108 = arith.constant 0 : index
    %154 = arith.index_cast %145 : i32 to index
    %c12_109 = arith.constant 12 : index
    %c0_110 = arith.constant 0 : index
    %155 = vector.load %arg2[%c0_108, %154, %c12_109, %c0_110] : memref<1x28x28x32xf32, #tpu.memory_space<vmem>>, vector<1x8x16x32xf32>
    %156 = vector.shape_cast %155 : vector<1x8x16x32xf32> to vector<8x16x32xf32>
    %157 = vector.shape_cast %156 : vector<8x16x32xf32> to vector<128x32xf32>
    %c6_i32_111 = arith.constant 6 : i32
    %158 = arith.addi %1, %c6_i32_111 : i32
    %c6_i32_112 = arith.constant 6 : i32
    %159 = arith.addi %158, %c6_i32_112 : i32
    %c0_113 = arith.constant 0 : index
    %160 = arith.index_cast %159 : i32 to index
    %c0_114 = arith.constant 0 : index
    %c0_115 = arith.constant 0 : index
    %161 = vector.load %arg2[%c0_113, %160, %c0_114, %c0_115] : memref<1x28x28x32xf32, #tpu.memory_space<vmem>>, vector<1x8x16x32xf32>
    %162 = vector.shape_cast %161 : vector<1x8x16x32xf32> to vector<8x16x32xf32>
    %163 = vector.shape_cast %162 : vector<8x16x32xf32> to vector<128x32xf32>
    %c0_116 = arith.constant 0 : index
    %164 = arith.index_cast %159 : i32 to index
    %c6_117 = arith.constant 6 : index
    %c0_118 = arith.constant 0 : index
    %165 = vector.load %arg2[%c0_116, %164, %c6_117, %c0_118] : memref<1x28x28x32xf32, #tpu.memory_space<vmem>>, vector<1x8x16x32xf32>
    %166 = vector.shape_cast %165 : vector<1x8x16x32xf32> to vector<8x16x32xf32>
    %167 = vector.shape_cast %166 : vector<8x16x32xf32> to vector<128x32xf32>
    %c0_119 = arith.constant 0 : index
    %168 = arith.index_cast %159 : i32 to index
    %c12_120 = arith.constant 12 : index
    %c0_121 = arith.constant 0 : index
    %169 = vector.load %arg2[%c0_119, %168, %c12_120, %c0_121] : memref<1x28x28x32xf32, #tpu.memory_space<vmem>>, vector<1x8x16x32xf32>
    %170 = vector.shape_cast %169 : vector<1x8x16x32xf32> to vector<8x16x32xf32>
    %171 = vector.shape_cast %170 : vector<8x16x32xf32> to vector<128x32xf32>
    %172 = tpu.concatenate %135, %139, %143, %149, %153, %157, %163, %167, %171 in 1 : vector<128x32xf32>, vector<128x32xf32>, vector<128x32xf32>, vector<128x32xf32>, vector<128x32xf32>, vector<128x32xf32>, vector<128x32xf32>, vector<128x32xf32>, vector<128x32xf32> -> vector<128x288xf32>
    %c2_122 = arith.constant 2 : index
    %c0_123 = arith.constant 0 : index
    %c0_124 = arith.constant 0 : index
    %173 = vector.load %arg4[%c2_122, %c0_123, %c0_124] : memref<3x288x4xf32, #tpu.memory_space<vmem>>, vector<1x288x4xf32>
    %174 = vector.shape_cast %173 : vector<1x288x4xf32> to vector<288x4xf32>
    %c3 = arith.constant 3 : index
    %c0_125 = arith.constant 0 : index
    %c0_126 = arith.constant 0 : index
    %175 = vector.load %arg5[%c3, %c0_125, %c0_126] : memref<4x1x4xf32, #tpu.memory_space<vmem>>, vector<1x1x4xf32>
    %176 = vector.shape_cast %175 : vector<1x1x4xf32> to vector<1x4xf32>
    %c3_127 = arith.constant 3 : index
    %c0_128 = arith.constant 0 : index
    %c0_129 = arith.constant 0 : index
    %177 = vector.load %arg6[%c3_127, %c0_128, %c0_129] : memref<4x4x4xf32, #tpu.memory_space<vmem>>, vector<1x4x4xf32>
    %178 = vector.shape_cast %177 : vector<1x4x4xf32> to vector<4x4xf32>
    %cst_130 = arith.constant dense<0.000000e+00> : vector<128x4xf32>
    %179 = tpu.matmul %172, %174, %cst_130 {dimension_numbers = #tpu.dot_dimension_numbers<[1], [0], [0], [1], [0, 0, 1, 1], [], []>} : vector<128x288xf32>, vector<288x4xf32>, vector<128x4xf32> -> vector<128x4xf32>
    %180 = vector.broadcast %176 : vector<1x4xf32> to vector<128x4xf32>
    %181 = arith.addf %179, %180 : vector<128x4xf32>
    %cst_131 = arith.constant 0.000000e+00 : f32
    %182 = vector.broadcast %cst_131 : f32 to vector<128x4xf32>
    %183 = arith.maximumf %181, %182 : vector<128x4xf32>
    %cst_132 = arith.constant dense<0.000000e+00> : vector<128x4xf32>
    %184 = tpu.matmul %183, %178, %cst_132 {dimension_numbers = #tpu.dot_dimension_numbers<[1], [0], [0], [1], [0, 0, 1, 1], [], []>} : vector<128x4xf32>, vector<4x4xf32>, vector<128x4xf32> -> vector<128x4xf32>
    %185 = arith.addf %129, %184 : vector<128x4xf32>
    %c0_133 = arith.constant 0 : index
    %c0_134 = arith.constant 0 : index
    %c0_135 = arith.constant 0 : index
    %186 = vector.load %arg7[%c0_133, %c0_134, %c0_135] : memref<1x1x4xf32, #tpu.memory_space<vmem>>, vector<1x1x4xf32>
    %187 = vector.shape_cast %186 : vector<1x1x4xf32> to vector<1x4xf32>
    %188 = vector.broadcast %187 : vector<1x4xf32> to vector<128x4xf32>
    %189 = arith.addf %185, %188 : vector<128x4xf32>
    %cst_136 = arith.constant 0.000000e+00 : f32
    %190 = vector.broadcast %cst_136 : f32 to vector<128x4xf32>
    %191 = arith.maximumf %189, %190 : vector<128x4xf32>
    %c0_137 = arith.constant 0 : index
    %c0_138 = arith.constant 0 : index
    %c0_139 = arith.constant 0 : index
    %192 = vector.load %arg8[%c0_137, %c0_138, %c0_139] : memref<1x128x4xf32, #tpu.memory_space<vmem>>, vector<1x128x4xf32>
    %193 = vector.shape_cast %192 : vector<1x128x4xf32> to vector<128x4xf32>
    %194 = vector.shape_cast %191 : vector<128x4xf32> to vector<1x128x4xf32>
    tpu.vector_store %arg8[%c0_137, %c0_138, %c0_139], %194 {strides = array<i32>} : memref<1x128x4xf32, #tpu.memory_space<vmem>>, vector<1x128x4xf32>,
    return
  }
  func.func @transform_0(%arg0: i32, %arg1: i32) -> (i32, i32, i32, i32) {
    %c0_i32 = arith.constant 0 : i32
    %c0_i32_0 = arith.constant 0 : i32
    %c0_i32_1 = arith.constant 0 : i32
    %c0_i32_2 = arith.constant 0 : i32
    return %arg0, %c0_i32, %c0_i32_0, %c0_i32_1 : i32, i32, i32, i32
  }
  func.func @transform_1(%arg0: i32, %arg1: i32) -> (i32, i32) {
    %c0_i32 = arith.constant 0 : i32
    %c0_i32_0 = arith.constant 0 : i32
    %c0_i32_1 = arith.constant 0 : i32
    return %c0_i32, %c0_i32_0 : i32, i32
  }
  func.func @transform_2(%arg0: i32, %arg1: i32) -> (i32, i32, i32) {
    %c0_i32 = arith.constant 0 : i32
    %c0_i32_0 = arith.constant 0 : i32
    %c0_i32_1 = arith.constant 0 : i32
    %c0_i32_2 = arith.constant 0 : i32
    return %c0_i32, %c0_i32_0, %c0_i32_1 : i32, i32, i32
  }
  func.func @transform_3(%arg0: i32, %arg1: i32) -> (i32, i32, i32) {
    %c0_i32 = arith.constant 0 : i32
    %c0_i32_0 = arith.constant 0 : i32
    %c0_i32_1 = arith.constant 0 : i32
    %c0_i32_2 = arith.constant 0 : i32
    return %c0_i32, %c0_i32_0, %c0_i32_1 : i32, i32, i32
  }
  func.func @transform_4(%arg0: i32, %arg1: i32) -> (i32, i32, i32) {
    %c0_i32 = arith.constant 0 : i32
    %c0_i32_0 = arith.constant 0 : i32
    %c0_i32_1 = arith.constant 0 : i32
    %c0_i32_2 = arith.constant 0 : i32
    return %c0_i32, %c0_i32_0, %c0_i32_1 : i32, i32, i32
  }
  func.func @transform_5(%arg0: i32, %arg1: i32) -> (i32, i32, i32) {
    %c0_i32 = arith.constant 0 : i32
    %c0_i32_0 = arith.constant 0 : i32
    %c0_i32_1 = arith.constant 0 : i32
    return %arg0, %c0_i32, %c0_i32_0 : i32, i32, i32
  }
  func.func @transform_6(%arg0: i32, %arg1: i32) -> (i32, i32, i32) {
    %c0_i32 = arith.constant 0 : i32
    %c0_i32_0 = arith.constant 0 : i32
    return %arg0, %arg1, %c0_i32 : i32, i32, i32
  }
}

</mosaic_0001>

<llo_original>
// kernel: tpu_custom_call.1
$region0: #{tpu_custom_call.1}
  #allocation0 [shape = 'u32[]', space=smem, size = 0x4, offset = 0x4, fixed_abs, tag = 'smem constant byte address 0x4 - core index']
  #allocation1 [shape = 'u32[144,128]{1,0:T(1,128)}', space=vmem, size = 0x12000, scoped, tag = 'internal scratch']
  %s0 = inlined_call_operand.vmem [shape: f32[2,28,28,32], index: 0, kind: input, shape index: {}]
  %s1 = inlined_call_operand.vmem [shape: f32[32,4], index: 1, kind: input, shape index: {}]
  %s2 = inlined_call_operand.vmem [shape: f32[3,288,4], index: 2, kind: input, shape index: {}]
  %s3 = inlined_call_operand.vmem [shape: f32[4,1,4], index: 3, kind: input, shape index: {}]
  %s4 = inlined_call_operand.vmem [shape: f32[4,4,4], index: 4, kind: input, shape index: {}]
  %s5 = inlined_call_operand.vmem [shape: f32[2,1,4], index: 5, kind: input, shape index: {}]
  %s6 = inlined_call_operand.vmem [shape: f32[2,256,4], index: 6, kind: output, shape index: {}]
  %s7 = sld [smem:[#allocation0]]
  $region57: #{tpu_custom_call.1} parent=0
    _
  %s9 = ssub.s32 1, %s7
  %s10 = scalar_select 0, %s9, %s7
  loop: start=0, step=1, limit=6
  $region2: #{tpu_custom_call.1} parent=0 // loop_pre_header
    _
  $region3: #{tpu_custom_call.1} parent=0 // loop_header
    %s12 = sphi 0, %s16
    %p13 = scmp.ge.s32.totalorder %s12, 6
    %s19 = sphi 0, %s31
    %s20 = sphi 0, %s27
    %s21 = sphi 0, %s19
    %s22 = sphi 0, %s20
    %s23 = sphi 0, %s21
    %s24 = sphi 0, %s22
    %s34 = sphi 0, %s36
    %s37 = sphi 0, %s34
    %s38 = sphi 0, %s37
    %s54 = sphi 0, %s38
    %s58 = sphi 0, %s58
    %s60 = sphi 0, %s58
    %s61 = sphi 0, %s60
    %s75 = sphi 0, %s61
    %s79 = sphi 0, %s79
    %s81 = sphi 0, %s79
    %s82 = sphi 0, %s81
    %s96 = sphi 0, %s82
    %s100 = sphi 0, %s100
    %s102 = sphi 0, %s100
    %s103 = sphi 0, %s102
    %s117 = sphi 0, %s103
    %s121 = sphi 0, %s121
    %s123 = sphi 0, %s121
    %s124 = sphi 0, %s123
    %s138 = sphi 0, %s124
    %s144 = sphi 0, %s146
    %s147 = sphi 0, %s144
    %s148 = sphi 0, %s147
    %s164 = sphi 0, %s148
    %s172 = sphi 0, %s174
    %s175 = sphi 0, %s172
    %s176 = sphi 0, %s175
    %s192 = sphi 0, %s176
  $region4: #{tpu_custom_call.1} parent=0 // loop_header_branch
    %15 = sbr.rel (%p13) target = $region8
  $region5: #{tpu_custom_call.1} parent=0 // loop_body
    %s17 = ssub.s32 %s12, 1
    %s18 = ssub.s32 %s12, 2
    %s25 = sadd.s32 1, %s20
    %p26 = scmp.ge.s32.totalorder %s25, 2
    %s27 = scalar_select %p26, 0, %s25
    %s28 = sadd.s32 1, %s19
    %s29 = scalar_select %p26, %s28, %s19
    %p30 = scmp.ge.s32.totalorder %s29, 2
    %s31 = scalar_select %p30, 0, %s29
    %s32 = ssub.s32 %s19, %s31
    %p33 = scmp.eq.s32.totalorder %s32, 0
    %s35 = sadd.s32 %s34, 1
    %s36 = scalar_select %p33, %s34, %s35
    %p39 = pneg %p33
    %p40 = scmp.eq.s32.totalorder %s12, 3
    %p41 = por %p39, %p40
    %p42 = scmp.ne.s32.totalorder %s34, %s37
    %p43 = scmp.eq.s32.totalorder %s12, 0
    %p44 = por %p42, %p43
    %p45 = scmp.ne.s32.totalorder %s34, %s37
    %p46 = scmp.eq.s32.totalorder %s17, 3
    %p47 = por %p45, %p46
    %p48 = scmp.ne.s32.totalorder %s37, %s38
    %p49 = scmp.eq.s32.totalorder %s17, 0
    %p50 = por %p48, %p49
    %p51 = scmp.ne.s32.totalorder %s37, %s38
    %p52 = scmp.eq.s32.totalorder %s18, 3
    %p53 = por %p51, %p52
    %p55 = scmp.ne.s32.totalorder %s38, %s54
    %p56 = scmp.eq.s32.totalorder %s18, 0
    %p57 = por %p55, %p56
    %s59 = sadd.s32 %s58, 1
    %p62 = scmp.eq.s32.totalorder %s12, 3
    %p63 = scmp.ne.s32.totalorder %s58, %s60
    %p64 = scmp.eq.s32.totalorder %s12, 0
    %p65 = por %p63, %p64
    %p66 = scmp.ne.s32.totalorder %s58, %s60
    %p67 = scmp.eq.s32.totalorder %s17, 3
    %p68 = por %p66, %p67
    %p69 = scmp.ne.s32.totalorder %s60, %s61
    %p70 = scmp.eq.s32.totalorder %s17, 0
    %p71 = por %p69, %p70
    %p72 = scmp.ne.s32.totalorder %s60, %s61
    %p73 = scmp.eq.s32.totalorder %s18, 3
    %p74 = por %p72, %p73
    %p76 = scmp.ne.s32.totalorder %s61, %s75
    %p77 = scmp.eq.s32.totalorder %s18, 0
    %p78 = por %p76, %p77
    %s80 = sadd.s32 %s79, 1
    %p83 = scmp.eq.s32.totalorder %s12, 3
    %p84 = scmp.ne.s32.totalorder %s79, %s81
    %p85 = scmp.eq.s32.totalorder %s12, 0
    %p86 = por %p84, %p85
    %p87 = scmp.ne.s32.totalorder %s79, %s81
    %p88 = scmp.eq.s32.totalorder %s17, 3
    %p89 = por %p87, %p88
    %p90 = scmp.ne.s32.totalorder %s81, %s82
    %p91 = scmp.eq.s32.totalorder %s17, 0
    %p92 = por %p90, %p91
    %p93 = scmp.ne.s32.totalorder %s81, %s82
    %p94 = scmp.eq.s32.totalorder %s18, 3
    %p95 = por %p93, %p94
    %p97 = scmp.ne.s32.totalorder %s82, %s96
    %p98 = scmp.eq.s32.totalorder %s18, 0
    %p99 = por %p97, %p98
    %s101 = sadd.s32 %s100, 1
    %p104 = scmp.eq.s32.totalorder %s12, 3
    %p105 = scmp.ne.s32.totalorder %s100, %s102
    %p106 = scmp.eq.s32.totalorder %s12, 0
    %p107 = por %p105, %p106
    %p108 = scmp.ne.s32.totalorder %s100, %s102
    %p109 = scmp.eq.s32.totalorder %s17, 3
    %p110 = por %p108, %p109
    %p111 = scmp.ne.s32.totalorder %s102, %s103
    %p112 = scmp.eq.s32.totalorder %s17, 0
    %p113 = por %p111, %p112
    %p114 = scmp.ne.s32.totalorder %s102, %s103
    %p115 = scmp.eq.s32.totalorder %s18, 3
    %p116 = por %p114, %p115
    %p118 = scmp.ne.s32.totalorder %s103, %s117
    %p119 = scmp.eq.s32.totalorder %s18, 0
    %p120 = por %p118, %p119
    %s122 = sadd.s32 %s121, 1
    %p125 = scmp.eq.s32.totalorder %s12, 3
    %p126 = scmp.ne.s32.totalorder %s121, %s123
    %p127 = scmp.eq.s32.totalorder %s12, 0
    %p128 = por %p126, %p127
    %p129 = scmp.ne.s32.totalorder %s121, %s123
    %p130 = scmp.eq.s32.totalorder %s17, 3
    %p131 = por %p129, %p130
    %p132 = scmp.ne.s32.totalorder %s123, %s124
    %p133 = scmp.eq.s32.totalorder %s17, 0
    %p134 = por %p132, %p133
    %p135 = scmp.ne.s32.totalorder %s123, %s124
    %p136 = scmp.eq.s32.totalorder %s18, 3
    %p137 = por %p135, %p136
    %p139 = scmp.ne.s32.totalorder %s124, %s138
    %p140 = scmp.eq.s32.totalorder %s18, 0
    %p141 = por %p139, %p140
    %s142 = ssub.s32 %s19, %s31
    %p143 = scmp.eq.s32.totalorder %s142, 0
    %s145 = sadd.s32 %s144, 1
    %s146 = scalar_select %p143, %s144, %s145
    %p149 = pneg %p143
    %p150 = scmp.eq.s32.totalorder %s12, 3
    %p151 = por %p149, %p150
    %p152 = scmp.ne.s32.totalorder %s144, %s147
    %p153 = scmp.eq.s32.totalorder %s12, 0
    %p154 = por %p152, %p153
    %p155 = scmp.ne.s32.totalorder %s144, %s147
    %p156 = scmp.eq.s32.totalorder %s17, 3
    %p157 = por %p155, %p156
    %p158 = scmp.ne.s32.totalorder %s147, %s148
    %p159 = scmp.eq.s32.totalorder %s17, 0
    %p160 = por %p158, %p159
    %p161 = scmp.ne.s32.totalorder %s147, %s148
    %p162 = scmp.eq.s32.totalorder %s18, 3
    %p163 = por %p161, %p162
    %p165 = scmp.ne.s32.totalorder %s148, %s164
    %p166 = scmp.eq.s32.totalorder %s18, 0
    %p167 = por %p165, %p166
    %s168 = ssub.s32 %s19, %s31
    %s169 = ssub.s32 %s20, %s27
    %s170 = sor.u32 %s168, %s169
    %p171 = scmp.eq.s32.totalorder %s170, 0
    %s173 = sadd.s32 %s172, 1
    %s174 = scalar_select %p171, %s172, %s173
    %p177 = pneg %p171
    %p178 = scmp.eq.s32.totalorder %s12, 3
    %p179 = por %p177, %p178
    %p180 = scmp.ne.s32.totalorder %s172, %s175
    %p181 = scmp.eq.s32.totalorder %s12, 0
    %p182 = por %p180, %p181
    %p183 = scmp.ne.s32.totalorder %s172, %s175
    %p184 = scmp.eq.s32.totalorder %s17, 3
    %p185 = por %p183, %p184
    %p186 = scmp.ne.s32.totalorder %s175, %s176
    %p187 = scmp.eq.s32.totalorder %s17, 0
    %p188 = por %p186, %p187
    %p189 = scmp.ne.s32.totalorder %s175, %s176
    %p190 = scmp.eq.s32.totalorder %s18, 3
    %p191 = por %p189, %p190
    %p193 = scmp.ne.s32.totalorder %s176, %s192
    %p194 = scmp.eq.s32.totalorder %s18, 0
    %p195 = por %p193, %p194
    %p196 = scmp.le.s32.totalorder 1, %s12
    %p197 = scmp.lt.s32.totalorder %s12, 5
    %p198 = pnand %p196, %p197
    %p199 = pneg %p198
    // Predicated region
    $region9: #{tpu_custom_call.1} parent=5 // pred_check
      _
    $region10: #{tpu_custom_call.1} parent=5 // pred_check_branch
      %201 = sbr.rel (%p198) target = $region12
    $region11: #{tpu_custom_call.1} parent=5 // pred_region
      %s202 = ssub.s32 %s12, 1
      // Predicated region
      $region13: #{tpu_custom_call.1} parent=11 // pred_check
        %p203 = pneg %p71
      $region14: #{tpu_custom_call.1} parent=11 // pred_check_branch
        %205 = sbr.rel (%p203) target = $region16
      $region15: #{tpu_custom_call.1} parent=11 // pred_region
        _
      $region16: #{tpu_custom_call.1} parent=11 // pred_fallthru
        _
      // Predicated region
      $region17: #{tpu_custom_call.1} parent=11 // pred_check
        %p206 = pneg %p92
      $region18: #{tpu_custom_call.1} parent=11 // pred_check_branch
        %208 = sbr.rel (%p206) target = $region20
      $region19: #{tpu_custom_call.1} parent=11 // pred_region
        _
      $region20: #{tpu_custom_call.1} parent=11 // pred_fallthru
        _
      // Predicated region
      $region21: #{tpu_custom_call.1} parent=11 // pred_check
        %p209 = pneg %p113
      $region22: #{tpu_custom_call.1} parent=11 // pred_check_branch
        %211 = sbr.rel (%p209) target = $region24
      $region23: #{tpu_custom_call.1} parent=11 // pred_region
        _
      $region24: #{tpu_custom_call.1} parent=11 // pred_fallthru
        _
      // Predicated region
      $region25: #{tpu_custom_call.1} parent=11 // pred_check
        %p212 = pneg %p134
      $region26: #{tpu_custom_call.1} parent=11 // pred_check_branch
        %214 = sbr.rel (%p212) target = $region28
      $region27: #{tpu_custom_call.1} parent=11 // pred_region
        _
      $region28: #{tpu_custom_call.1} parent=11 // pred_fallthru
        _
    $region12: #{tpu_custom_call.1} parent=5 // pred_fallthru
      _
    %p215 = scmp.lt.s32.totalorder %s12, 4
    // Predicated region
    $region29: #{tpu_custom_call.1} parent=5 // pred_check
      %p216 = pneg %p215
    $region30: #{tpu_custom_call.1} parent=5 // pred_check_branch
      %218 = sbr.rel (%p216) target = $region32
    $region31: #{tpu_custom_call.1} parent=5 // pred_region
      // Predicated region
      $region33: #{tpu_custom_call.1} parent=31 // pred_check
        %p219 = pneg %p44
      $region34: #{tpu_custom_call.1} parent=31 // pred_check_branch
        %221 = sbr.rel (%p219) target = $region36
      $region35: #{tpu_custom_call.1} parent=31 // pred_region
        %p222 = scmp.lt.s32.totalorder %s19, 1
        %s223 = scalar_select %p222, %s19, 1
        %s224 = smul.addr %s223, 112
        %s225 = smul.addr %s224, 8
        %s226 = scalar_lea.vmem %s0, %s225
      $region36: #{tpu_custom_call.1} parent=31 // pred_fallthru
        _
      // Predicated region
      $region37: #{tpu_custom_call.1} parent=31 // pred_check
        %p227 = pneg %p154
      $region38: #{tpu_custom_call.1} parent=31 // pred_check_branch
        %229 = sbr.rel (%p227) target = $region40
      $region39: #{tpu_custom_call.1} parent=31 // pred_region
        %p230 = scmp.lt.s32.totalorder %s19, 1
        %s231 = scalar_select %p230, %s19, 1
        %s232 = scalar_lea.vmem %s5, %s231
      $region40: #{tpu_custom_call.1} parent=31 // pred_fallthru
        _
    $region32: #{tpu_custom_call.1} parent=5 // pred_fallthru
      _
    %p233 = scmp.le.s32.totalorder 1, %s12
    %p234 = scmp.lt.s32.totalorder %s12, 5
    %p235 = pnand %p233, %p234
    %p236 = pneg %p235
    // Predicated region
    $region41: #{tpu_custom_call.1} parent=5 // pred_check
      _
    $region42: #{tpu_custom_call.1} parent=5 // pred_check_branch
      %238 = sbr.rel (%p235) target = $region44
    $region43: #{tpu_custom_call.1} parent=5 // pred_region
      %s239 = ssub.s32 %s12, 1
      %p240 = scmp.lt.s32.totalorder %s21, 1
      %s241 = scalar_select %p240, %s21, 1
      %s242 = smul.addr %s241, 112
      %s243 = smul.addr %s242, 8
      %s244 = scalar_lea.vmem %s0, %s243
      %p245 = pneg %p50
      %p246 = pneg %p47
      %p247 = pneg %p71
      %p248 = pneg %p68
      %p249 = pneg %p92
      %p250 = pneg %p89
      %p251 = pneg %p113
      %p252 = pneg %p110
      %p253 = pneg %p134
      %p254 = pneg %p131
      %p255 = scmp.lt.s32.totalorder %s21, 1
      %s256 = scalar_select %p255, %s21, 1
      %s257 = scalar_lea.vmem %s5, %s256
      %p258 = pneg %p160
      %p259 = pneg %p157
      %p260 = pneg %p188
      %p261 = pneg %p185
      %s262 = smul.u32 16, %s22
      %p263 = scmp.lt.s32.totalorder %s21, 1
      %s264 = scalar_select %p263, %s21, 1
      %p265 = scmp.lt.s32.totalorder %s262, 31
      %s266 = scalar_select %p265, %s262, 31
      %s267 = smul.addr %s264, 32
      %s268 = sadd.s32 %s266, %s267
      %s269 = smul.addr %s268, 8
      %s270 = scalar_lea.vmem %s6, %s269
      %p271 = scmp.lt.s32.totalorder %s21, 1
      %s272 = scalar_select %p271, %s21, 1
      %s273 = smul.addr %s272, 112
      %s274 = smul.addr %s273, 8
      %s275 = scalar_lea.vmem %s0, %s274
      %p276 = scmp.lt.s32.totalorder %s21, 1
      %s277 = scalar_select %p276, %s21, 1
      %s278 = scalar_lea.vmem %s5, %s277
      %s279 = smul.u32 16, %s22
      %p280 = scmp.lt.s32.totalorder %s21, 1
      %s281 = scalar_select %p280, %s21, 1
      %p282 = scmp.lt.s32.totalorder %s279, 31
      %s283 = scalar_select %p282, %s279, 31
      %s284 = smul.addr %s281, 32
      %s285 = sadd.s32 %s283, %s284
      %s286 = smul.addr %s285, 8
      %s287 = scalar_lea.vmem %s6, %s286
      %s288 = smul.u32 16, %s22
      %s289 = smul.u32 %s22, 8
      %s290 = sadd.s32 %s289, 6
      %s291 = smul.u32 %s290, 32
      %s292 = scalar_lea.vmem %s275, %s291
      %v293 = vld [vmem:[%s292 + $0x6] sm:$0xff]
      %v294 = vld [vmem:[%s292 + $0xe] sm:$0xff]
      %v295 = vld [vmem:[%s292 + $0x26] sm:$0xff]
      %v296 = vld [vmem:[%s292 + $0x2e] sm:$0xff]
      %v297 = vld [vmem:[%s292 + $0x46] sm:$0xff]
      %v298 = vld [vmem:[%s292 + $0x4e] sm:$0xff]
      %v299 = vld [vmem:[%s292 + $0x66] sm:$0xff]
      %v300 = vld [vmem:[%s292 + $0x6e] sm:$0xff]
      %v301 = vld [vmem:[%s292 + $0x86] sm:$0xff]
      %v302 = vld [vmem:[%s292 + $0x8e] sm:$0xff]
      %v303 = vld [vmem:[%s292 + $0xa6] sm:$0xff]
      %v304 = vld [vmem:[%s292 + $0xae] sm:$0xff]
      %v305 = vld [vmem:[%s292 + $0xc6] sm:$0xff]
      %v306 = vld [vmem:[%s292 + $0xce] sm:$0xff]
      %v307 = vld [vmem:[%s292 + $0xe6] sm:$0xff]
      %v308 = vld [vmem:[%s292 + $0xee] sm:$0xff]
      %v309 = vld [vmem:[%s1] sm:$0xff]
      %v310 = vld [vmem:[%s1 + $0x8] sm:$0xff]
      %v311 = vld [vmem:[%s1 + $0x10] sm:$0xff]
      %v312 = vld [vmem:[%s1 + $0x18] sm:$0xff]
      %v313 = vld [vmem:[%s3] sm:$0x1]
      %v314 = vld [vmem:[%s4] sm:$0xf]
      %v316 = vlaneseq
      %v317 = vshrl.u32 %v316, 7
      %v318 = vsub.s32 0, %v317
      %v319 = vrot.slane %v313, %v318
      %vm321 = vcmask 261120
      %v323 = vsel %vm321, %v293, 0
      %v326 = vsel %vm321, %v294, 0
      %v329 = vsel %vm321, %v295, 0
      %v332 = vsel %vm321, %v296, 0
      %v335 = vsel %vm321, %v297, 0
      %v338 = vsel %vm321, %v298, 0
      %v341 = vsel %vm321, %v299, 0
      %v344 = vsel %vm321, %v300, 0
      %v347 = vsel %vm321, %v301, 0
      %v350 = vsel %vm321, %v302, 0
      %v353 = vsel %vm321, %v303, 0
      %v356 = vsel %vm321, %v304, 0
      %v359 = vsel %vm321, %v305, 0
      %v362 = vsel %vm321, %v306, 0
      %v365 = vsel %vm321, %v307, 0
      %v368 = vsel %vm321, %v308, 0
      %370 = vmatprep.subr.mxu0 0.0
      %371 = vmatpush1.msra.mxu0 0.0
      %372 = vmatprep.subr.mxu0 0.0
      %373 = vmatpush1.msra.mxu0 0.0
      %374 = vmatprep.subr.mxu0 0.0
      %375 = vmatpush1.msra.mxu0 0.0
      %376 = vmatprep.subr.mxu0 0.0
      %377 = vmatpush1.msra.mxu0 0.0
      %378 = vmatprep.subr.mxu0 0.0
      %379 = vmatpush1.msra.mxu0 0.0
      %380 = vmatprep.subr.mxu0 0.0
      %381 = vmatpush1.msra.mxu0 0.0
      %382 = vmatprep.subr.mxu0 0.0
      %383 = vmatpush1.msra.mxu0 0.0
      %384 = vmatprep.subr.mxu0 0.0
      %385 = vmatpush1.msra.mxu0 0.0
      %386 = vmatprep.subr.mxu0 0.0
      %387 = vmatpush1.msra.mxu0 0.0
      %388 = vmatprep.subr.mxu0 0.0
      %389 = vmatpush1.msra.mxu0 0.0
      %390 = vmatprep.subr.mxu0 0.0
      %391 = vmatpush1.msra.mxu0 0.0
      %392 = vmatprep.subr.mxu0 0.0
      %393 = vmatpush1.msra.mxu0 0.0
      %394 = vmatprep.subr.mxu0 0.0
      %395 = vmatpush1.msra.mxu0 %v312
      %396 = vmatprep.subr.mxu0 0.0
      %397 = vmatpush1.msra.mxu0 %v311
      %398 = vmatprep.subr.mxu0 0.0
      %399 = vmatpush1.msra.mxu0 %v310
      %400 = vmatprep.subr.mxu0 0.0
      %401 = vmatpush1.msra.mxu0 %v309
      %402 = vmatprep.subr.mxu0 0.0
      %403 = vmatpush2.msra.mxu0 0.0
      %404 = vmatprep.subr.mxu0 0.0
      %405 = vmatpush2.msra.mxu0 0.0
      %406 = vmatprep.subr.mxu0 0.0
      %407 = vmatpush2.msra.mxu0 0.0
      %408 = vmatprep.subr.mxu0 0.0
      %409 = vmatpush2.msra.mxu0 0.0
      %410 = vmatprep.subr.mxu0 0.0
      %411 = vmatpush2.msra.mxu0 0.0
      %412 = vmatprep.subr.mxu0 0.0
      %413 = vmatpush2.msra.mxu0 0.0
      %414 = vmatprep.subr.mxu0 0.0
      %415 = vmatpush2.msra.mxu0 0.0
      %416 = vmatprep.subr.mxu0 0.0
      %417 = vmatpush2.msra.mxu0 0.0
      %418 = vmatprep.subr.mxu0 0.0
      %419 = vmatpush2.msra.mxu0 0.0
      %420 = vmatprep.subr.mxu0 0.0
      %421 = vmatpush2.msra.mxu0 0.0
      %422 = vmatprep.subr.mxu0 0.0
      %423 = vmatpush2.msra.mxu0 0.0
      %424 = vmatprep.subr.mxu0 0.0
      %425 = vmatpush2.msra.mxu0 0.0
      %426 = vmatprep.subr.mxu0 0.0
      %427 = vmatpush2.msra.mxu0 0.0
      %428 = vmatprep.subr.mxu0 0.0
      %429 = vmatpush2.msra.mxu0 0.0
      %430 = vmatprep.subr.mxu0 0.0
      %431 = vmatpush2.msra.mxu0 0.0
      %432 = vmatprep.subr.mxu0 0.0
      %433 = vmatpush2.msra.mxu0 0.0
      %434 = vmatprep.mubr.f32.mxu0 0.0
      %435 = vmatmul.mubr.f32.gmra.mxu0 %v323
      %v436 = vpop.f32.mrf.mxu0
      %v437 = vadd.f32 %v319, %v436
      %v438 = vpop.f32.mrf.mxu0
      %439 = vmatprep.mubr.f32.mxu0 0.0
      %440 = vmatmul.mubr.f32.gmra.mxu0 %v326
      %v441 = vpop.f32.mrf.mxu0
      %v442 = vadd.f32 %v319, %v441
      %v443 = vpop.f32.mrf.mxu0
      %444 = vmatprep.mubr.f32.mxu0 0.0
      %445 = vmatmul.mubr.f32.gmra.mxu0 %v329
      %v446 = vpop.f32.mrf.mxu0
      %v447 = vadd.f32 %v319, %v446
      %v448 = vpop.f32.mrf.mxu0
      %449 = vmatprep.mubr.f32.mxu0 0.0
      %450 = vmatmul.mubr.f32.gmra.mxu0 %v332
      %v451 = vpop.f32.mrf.mxu0
      %v452 = vadd.f32 %v319, %v451
      %v453 = vpop.f32.mrf.mxu0
      %454 = vmatprep.mubr.f32.mxu0 0.0
      %455 = vmatmul.mubr.f32.gmra.mxu0 %v335
      %v456 = vpop.f32.mrf.mxu0
      %v457 = vadd.f32 %v319, %v456
      %v458 = vpop.f32.mrf.mxu0
      %459 = vmatprep.mubr.f32.mxu0 0.0
      %460 = vmatmul.mubr.f32.gmra.mxu0 %v338
      %v461 = vpop.f32.mrf.mxu0
      %v462 = vadd.f32 %v319, %v461
      %v463 = vpop.f32.mrf.mxu0
      %464 = vmatprep.mubr.f32.mxu0 0.0
      %465 = vmatmul.mubr.f32.gmra.mxu0 %v341
      %v466 = vpop.f32.mrf.mxu0
      %v467 = vadd.f32 %v319, %v466
      %v468 = vpop.f32.mrf.mxu0
      %469 = vmatprep.mubr.f32.mxu0 0.0
      %470 = vmatmul.mubr.f32.gmra.mxu0 %v344
      %v471 = vpop.f32.mrf.mxu0
      %v472 = vadd.f32 %v319, %v471
      %v473 = vpop.f32.mrf.mxu0
      %474 = vmatprep.mubr.f32.mxu0 0.0
      %475 = vmatmul.mubr.f32.gmra.mxu0 %v347
      %v476 = vpop.f32.mrf.mxu0
      %v477 = vadd.f32 %v319, %v476
      %v478 = vpop.f32.mrf.mxu0
      %479 = vmatprep.mubr.f32.mxu0 0.0
      %480 = vmatmul.mubr.f32.gmra.mxu0 %v350
      %v481 = vpop.f32.mrf.mxu0
      %v482 = vadd.f32 %v319, %v481
      %v483 = vpop.f32.mrf.mxu0
      %484 = vmatprep.mubr.f32.mxu0 0.0
      %485 = vmatmul.mubr.f32.gmra.mxu0 %v353
      %v486 = vpop.f32.mrf.mxu0
      %v487 = vadd.f32 %v319, %v486
      %v488 = vpop.f32.mrf.mxu0
      %489 = vmatprep.mubr.f32.mxu0 0.0
      %490 = vmatmul.mubr.f32.gmra.mxu0 %v356
      %v491 = vpop.f32.mrf.mxu0
      %v492 = vadd.f32 %v319, %v491
      %v493 = vpop.f32.mrf.mxu0
      %494 = vmatprep.mubr.f32.mxu0 0.0
      %495 = vmatmul.mubr.f32.gmra.mxu0 %v359
      %v496 = vpop.f32.mrf.mxu0
      %v497 = vadd.f32 %v319, %v496
      %v498 = vpop.f32.mrf.mxu0
      %499 = vmatprep.mubr.f32.mxu0 0.0
      %500 = vmatmul.mubr.f32.gmra.mxu0 %v362
      %v501 = vpop.f32.mrf.mxu0
      %v502 = vadd.f32 %v319, %v501
      %v503 = vpop.f32.mrf.mxu0
      %504 = vmatprep.mubr.f32.mxu0 0.0
      %505 = vmatmul.mubr.f32.gmra.mxu0 %v365
      %v506 = vpop.f32.mrf.mxu0
      %v507 = vadd.f32 %v319, %v506
      %v508 = vpop.f32.mrf.mxu0
      %509 = vmatprep.mubr.f32.mxu0 0.0
      %510 = vmatmul.mubr.f32.gmra.mxu0 %v368
      %v511 = vpop.f32.mrf.mxu0
      %v512 = vadd.f32 %v319, %v511
      %v513 = vpop.f32.mrf.mxu0
      %514 = vdwg.mxu0
      %v515 = vmax.f32 %v437, 0.0
      %v516 = vmax.f32 %v442, 0.0
      %v517 = vmax.f32 %v447, 0.0
      %v518 = vmax.f32 %v452, 0.0
      %v519 = vmax.f32 %v457, 0.0
      %v520 = vmax.f32 %v462, 0.0
      %v521 = vmax.f32 %v467, 0.0
      %v522 = vmax.f32 %v472, 0.0
      %v523 = vmax.f32 %v477, 0.0
      %v524 = vmax.f32 %v482, 0.0
      %v525 = vmax.f32 %v487, 0.0
      %v526 = vmax.f32 %v492, 0.0
      %v527 = vmax.f32 %v497, 0.0
      %v528 = vmax.f32 %v502, 0.0
      %v529 = vmax.f32 %v507, 0.0
      %v530 = vmax.f32 %v512, 0.0
      %s531 = sadd.s32 %s289, 4
      %s532 = smul.u32 %s531, 32
      %s533 = scalar_lea.vmem %s275, %s532
      %v534 = vld [vmem:[%s533 + $0x4] sm:$0xff]
      %v535 = vld [vmem:[%s533 + $0xc] sm:$0xff]
      %v536 = vld [vmem:[%s533 + $0x24] sm:$0xff]
      %v537 = vld [vmem:[%s533 + $0x2c] sm:$0xff]
      %v538 = vld [vmem:[%s533 + $0x44] sm:$0xff]
      %v539 = vld [vmem:[%s533 + $0x4c] sm:$0xff]
      %v540 = vld [vmem:[%s533 + $0x64] sm:$0xff]
      %v541 = vld [vmem:[%s533 + $0x6c] sm:$0xff]
      %v542 = vld [vmem:[%s533 + $0x84] sm:$0xff]
      %v543 = vld [vmem:[%s533 + $0x8c] sm:$0xff]
      %v544 = vld [vmem:[%s533 + $0xa4] sm:$0xff]
      %v545 = vld [vmem:[%s533 + $0xac] sm:$0xff]
      %v546 = vld [vmem:[%s533 + $0xc4] sm:$0xff]
      %v547 = vld [vmem:[%s533 + $0xcc] sm:$0xff]
      %v548 = vld [vmem:[%s533 + $0xe4] sm:$0xff]
      %v549 = vld [vmem:[%s533 + $0xec] sm:$0xff]
      %v550 = vld [vmem:[%s533 + $0x6] sm:$0xff]
      %v551 = vld [vmem:[%s533 + $0xe] sm:$0xff]
      %v552 = vld [vmem:[%s533 + $0x26] sm:$0xff]
      %v553 = vld [vmem:[%s533 + $0x2e] sm:$0xff]
      %v554 = vld [vmem:[%s533 + $0x46] sm:$0xff]
      %v555 = vld [vmem:[%s533 + $0x4e] sm:$0xff]
      %v556 = vld [vmem:[%s533 + $0x66] sm:$0xff]
      %v557 = vld [vmem:[%s533 + $0x6e] sm:$0xff]
      %v558 = vld [vmem:[%s533 + $0x86] sm:$0xff]
      %v559 = vld [vmem:[%s533 + $0x8e] sm:$0xff]
      %v560 = vld [vmem:[%s533 + $0xa6] sm:$0xff]
      %v561 = vld [vmem:[%s533 + $0xae] sm:$0xff]
      %v562 = vld [vmem:[%s533 + $0xc6] sm:$0xff]
      %v563 = vld [vmem:[%s533 + $0xce] sm:$0xff]
      %v564 = vld [vmem:[%s533 + $0xe6] sm:$0xff]
      %v565 = vld [vmem:[%s533 + $0xee] sm:$0xff]
      %v566 = vld [vmem:[%s533 + $0x8] sm:$0xff]
      %v567 = vld [vmem:[%s533 + $0x10] sm:$0xff]
      %v568 = vld [vmem:[%s533 + $0x28] sm:$0xff]
      %v569 = vld [vmem:[%s533 + $0x30] sm:$0xff]
      %v570 = vld [vmem:[%s533 + $0x48] sm:$0xff]
      %v571 = vld [vmem:[%s533 + $0x50] sm:$0xff]
      %v572 = vld [vmem:[%s533 + $0x68] sm:$0xff]
      %v573 = vld [vmem:[%s533 + $0x70] sm:$0xff]
      %v574 = vld [vmem:[%s533 + $0x88] sm:$0xff]
      %v575 = vld [vmem:[%s533 + $0x90] sm:$0xff]
      %v576 = vld [vmem:[%s533 + $0xa8] sm:$0xff]
      %v577 = vld [vmem:[%s533 + $0xb0] sm:$0xff]
      %v578 = vld [vmem:[%s533 + $0xc8] sm:$0xff]
      %v579 = vld [vmem:[%s533 + $0xd0] sm:$0xff]
      %v580 = vld [vmem:[%s533 + $0xe8] sm:$0xff]
      %v581 = vld [vmem:[%s533 + $0xf0] sm:$0xff]
      %v582 = vld [vmem:[%s292 + $0x4] sm:$0xff]
      %v583 = vld [vmem:[%s292 + $0xc] sm:$0xff]
      %v584 = vld [vmem:[%s292 + $0x24] sm:$0xff]
      %v585 = vld [vmem:[%s292 + $0x2c] sm:$0xff]
      %v586 = vld [vmem:[%s292 + $0x44] sm:$0xff]
      %v587 = vld [vmem:[%s292 + $0x4c] sm:$0xff]
      %v588 = vld [vmem:[%s292 + $0x64] sm:$0xff]
      %v589 = vld [vmem:[%s292 + $0x6c] sm:$0xff]
      %v590 = vld [vmem:[%s292 + $0x84] sm:$0xff]
      %v591 = vld [vmem:[%s292 + $0x8c] sm:$0xff]
      %v592 = vld [vmem:[%s292 + $0xa4] sm:$0xff]
      %v593 = vld [vmem:[%s292 + $0xac] sm:$0xff]
      %v594 = vld [vmem:[%s292 + $0xc4] sm:$0xff]
      %v595 = vld [vmem:[%s292 + $0xcc] sm:$0xff]
      %v596 = vld [vmem:[%s292 + $0xe4] sm:$0xff]
      %v597 = vld [vmem:[%s292 + $0xec] sm:$0xff]
      %v598 = vld [vmem:[%s292 + $0x8] sm:$0xff]
      %v599 = vld [vmem:[%s292 + $0x10] sm:$0xff]
      %v600 = vld [vmem:[%s292 + $0x28] sm:$0xff]
      %v601 = vld [vmem:[%s292 + $0x30] sm:$0xff]
      %v602 = vld [vmem:[%s292 + $0x48] sm:$0xff]
      %v603 = vld [vmem:[%s292 + $0x50] sm:$0xff]
      %v604 = vld [vmem:[%s292 + $0x68] sm:$0xff]
      %v605 = vld [vmem:[%s292 + $0x70] sm:$0xff]
      %v606 = vld [vmem:[%s292 + $0x88] sm:$0xff]
      %v607 = vld [vmem:[%s292 + $0x90] sm:$0xff]
      %v608 = vld [vmem:[%s292 + $0xa8] sm:$0xff]
      %v609 = vld [vmem:[%s292 + $0xb0] sm:$0xff]
      %v610 = vld [vmem:[%s292 + $0xc8] sm:$0xff]
      %v611 = vld [vmem:[%s292 + $0xd0] sm:$0xff]
      %v612 = vld [vmem:[%s292 + $0xe8] sm:$0xff]
      %v613 = vld [vmem:[%s292 + $0xf0] sm:$0xff]
      %s614 = sadd.s32 %s289, 8
      %s615 = smul.u32 %s614, 32
      %s616 = scalar_lea.vmem %s275, %s615
      %v617 = vld [vmem:[%s616 + $0x4] sm:$0xff]
      %v618 = vld [vmem:[%s616 + $0xc] sm:$0xff]
      %v619 = vld [vmem:[%s616 + $0x24] sm:$0xff]
      %v620 = vld [vmem:[%s616 + $0x2c] sm:$0xff]
      %v621 = vld [vmem:[%s616 + $0x44] sm:$0xff]
      %v622 = vld [vmem:[%s616 + $0x4c] sm:$0xff]
      %v623 = vld [vmem:[%s616 + $0x64] sm:$0xff]
      %v624 = vld [vmem:[%s616 + $0x6c] sm:$0xff]
      %v625 = vld [vmem:[%s616 + $0x84] sm:$0xff]
      %v626 = vld [vmem:[%s616 + $0x8c] sm:$0xff]
      %v627 = vld [vmem:[%s616 + $0xa4] sm:$0xff]
      %v628 = vld [vmem:[%s616 + $0xac] sm:$0xff]
      %v629 = vld [vmem:[%s616 + $0xc4] sm:$0xff]
      %v630 = vld [vmem:[%s616 + $0xcc] sm:$0xff]
      %v631 = vld [vmem:[%s616 + $0xe4] sm:$0xff]
      %v632 = vld [vmem:[%s616 + $0xec] sm:$0xff]
      %v633 = vld [vmem:[%s616 + $0x6] sm:$0xff]
      %v634 = vld [vmem:[%s616 + $0xe] sm:$0xff]
      %v635 = vld [vmem:[%s616 + $0x26] sm:$0xff]
      %v636 = vld [vmem:[%s616 + $0x2e] sm:$0xff]
      %v637 = vld [vmem:[%s616 + $0x46] sm:$0xff]
      %v638 = vld [vmem:[%s616 + $0x4e] sm:$0xff]
      %v639 = vld [vmem:[%s616 + $0x66] sm:$0xff]
      %v640 = vld [vmem:[%s616 + $0x6e] sm:$0xff]
      %v641 = vld [vmem:[%s616 + $0x86] sm:$0xff]
      %v642 = vld [vmem:[%s616 + $0x8e] sm:$0xff]
      %v643 = vld [vmem:[%s616 + $0xa6] sm:$0xff]
      %v644 = vld [vmem:[%s616 + $0xae] sm:$0xff]
      %v645 = vld [vmem:[%s616 + $0xc6] sm:$0xff]
      %v646 = vld [vmem:[%s616 + $0xce] sm:$0xff]
      %v647 = vld [vmem:[%s616 + $0xe6] sm:$0xff]
      %v648 = vld [vmem:[%s616 + $0xee] sm:$0xff]
      %v649 = vld [vmem:[%s616 + $0x8] sm:$0xff]
      %v650 = vld [vmem:[%s616 + $0x10] sm:$0xff]
      %v651 = vld [vmem:[%s616 + $0x28] sm:$0xff]
      %v652 = vld [vmem:[%s616 + $0x30] sm:$0xff]
      %v653 = vld [vmem:[%s616 + $0x48] sm:$0xff]
      %v654 = vld [vmem:[%s616 + $0x50] sm:$0xff]
      %v655 = vld [vmem:[%s616 + $0x68] sm:$0xff]
      %v656 = vld [vmem:[%s616 + $0x70] sm:$0xff]
      %v657 = vld [vmem:[%s616 + $0x88] sm:$0xff]
      %v658 = vld [vmem:[%s616 + $0x90] sm:$0xff]
      %v659 = vld [vmem:[%s616 + $0xa8] sm:$0xff]
      %v660 = vld [vmem:[%s616 + $0xb0] sm:$0xff]
      %v661 = vld [vmem:[%s616 + $0xc8] sm:$0xff]
      %v662 = vld [vmem:[%s616 + $0xd0] sm:$0xff]
      %v663 = vld [vmem:[%s616 + $0xe8] sm:$0xff]
      %v664 = vld [vmem:[%s616 + $0xf0] sm:$0xff]
      %681 = vrot.lane.b32.xlu0 %v550, 32
      %v682 = vpop.permute.xlu0 %681
      %683 = vrot.lane.b32.xlu0 %v551, 32
      %v684 = vpop.permute.xlu0 %683
      %685 = vrot.lane.b32.xlu0 %v552, 32
      %v686 = vpop.permute.xlu0 %685
      %687 = vrot.lane.b32.xlu0 %v553, 32
      %v688 = vpop.permute.xlu0 %687
      %689 = vrot.lane.b32.xlu0 %v554, 32
      %v690 = vpop.permute.xlu0 %689
      %691 = vrot.lane.b32.xlu0 %v555, 32
      %v692 = vpop.permute.xlu0 %691
      %693 = vrot.lane.b32.xlu0 %v556, 32
      %v694 = vpop.permute.xlu0 %693
      %695 = vrot.lane.b32.xlu0 %v557, 32
      %v696 = vpop.permute.xlu0 %695
      %697 = vrot.lane.b32.xlu0 %v558, 32
      %v698 = vpop.permute.xlu0 %697
      %699 = vrot.lane.b32.xlu0 %v559, 32
      %v700 = vpop.permute.xlu0 %699
      %701 = vrot.lane.b32.xlu0 %v560, 32
      %v702 = vpop.permute.xlu0 %701
      %703 = vrot.lane.b32.xlu0 %v561, 32
      %v704 = vpop.permute.xlu0 %703
      %705 = vrot.lane.b32.xlu0 %v562, 32
      %v706 = vpop.permute.xlu0 %705
      %707 = vrot.lane.b32.xlu0 %v563, 32
      %v708 = vpop.permute.xlu0 %707
      %709 = vrot.lane.b32.xlu0 %v564, 32
      %v710 = vpop.permute.xlu0 %709
      %711 = vrot.lane.b32.xlu0 %v565, 32
      %v712 = vpop.permute.xlu0 %711
      %745 = vrot.lane.b32.xlu0 %v566, 64
      %v746 = vpop.permute.xlu0 %745
      %747 = vrot.lane.b32.xlu0 %v567, 64
      %v748 = vpop.permute.xlu0 %747
      %749 = vrot.lane.b32.xlu0 %v568, 64
      %v750 = vpop.permute.xlu0 %749
      %751 = vrot.lane.b32.xlu0 %v569, 64
      %v752 = vpop.permute.xlu0 %751
      %753 = vrot.lane.b32.xlu0 %v570, 64
      %v754 = vpop.permute.xlu0 %753
      %755 = vrot.lane.b32.xlu0 %v571, 64
      %v756 = vpop.permute.xlu0 %755
      %757 = vrot.lane.b32.xlu0 %v572, 64
      %v758 = vpop.permute.xlu0 %757
      %759 = vrot.lane.b32.xlu0 %v573, 64
      %v760 = vpop.permute.xlu0 %759
      %761 = vrot.lane.b32.xlu0 %v574, 64
      %v762 = vpop.permute.xlu0 %761
      %763 = vrot.lane.b32.xlu0 %v575, 64
      %v764 = vpop.permute.xlu0 %763
      %765 = vrot.lane.b32.xlu0 %v576, 64
      %v766 = vpop.permute.xlu0 %765
      %767 = vrot.lane.b32.xlu0 %v577, 64
      %v768 = vpop.permute.xlu0 %767
      %769 = vrot.lane.b32.xlu0 %v578, 64
      %v770 = vpop.permute.xlu0 %769
      %771 = vrot.lane.b32.xlu0 %v579, 64
      %v772 = vpop.permute.xlu0 %771
      %773 = vrot.lane.b32.xlu0 %v580, 64
      %v774 = vpop.permute.xlu0 %773
      %775 = vrot.lane.b32.xlu0 %v581, 64
      %v776 = vpop.permute.xlu0 %775
      %809 = vrot.lane.b32.xlu0 %v582, 96
      %v810 = vpop.permute.xlu0 %809
      %811 = vrot.lane.b32.xlu0 %v583, 96
      %v812 = vpop.permute.xlu0 %811
      %813 = vrot.lane.b32.xlu0 %v584, 96
      %v814 = vpop.permute.xlu0 %813
      %815 = vrot.lane.b32.xlu0 %v585, 96
      %v816 = vpop.permute.xlu0 %815
      %817 = vrot.lane.b32.xlu0 %v586, 96
      %v818 = vpop.permute.xlu0 %817
      %819 = vrot.lane.b32.xlu0 %v587, 96
      %v820 = vpop.permute.xlu0 %819
      %821 = vrot.lane.b32.xlu0 %v588, 96
      %v822 = vpop.permute.xlu0 %821
      %823 = vrot.lane.b32.xlu0 %v589, 96
      %v824 = vpop.permute.xlu0 %823
      %825 = vrot.lane.b32.xlu0 %v590, 96
      %v826 = vpop.permute.xlu0 %825
      %827 = vrot.lane.b32.xlu0 %v591, 96
      %v828 = vpop.permute.xlu0 %827
      %829 = vrot.lane.b32.xlu0 %v592, 96
      %v830 = vpop.permute.xlu0 %829
      %831 = vrot.lane.b32.xlu0 %v593, 96
      %v832 = vpop.permute.xlu0 %831
      %833 = vrot.lane.b32.xlu0 %v594, 96
      %v834 = vpop.permute.xlu0 %833
      %835 = vrot.lane.b32.xlu0 %v595, 96
      %v836 = vpop.permute.xlu0 %835
      %837 = vrot.lane.b32.xlu0 %v596, 96
      %v838 = vpop.permute.xlu0 %837
      %839 = vrot.lane.b32.xlu0 %v597, 96
      %v840 = vpop.permute.xlu0 %839
      %873 = vrot.lane.b32.xlu0 %v598, 32
      %v874 = vpop.permute.xlu0 %873
      %875 = vrot.lane.b32.xlu0 %v599, 32
      %v876 = vpop.permute.xlu0 %875
      %877 = vrot.lane.b32.xlu0 %v600, 32
      %v878 = vpop.permute.xlu0 %877
      %879 = vrot.lane.b32.xlu0 %v601, 32
      %v880 = vpop.permute.xlu0 %879
      %881 = vrot.lane.b32.xlu0 %v602, 32
      %v882 = vpop.permute.xlu0 %881
      %883 = vrot.lane.b32.xlu0 %v603, 32
      %v884 = vpop.permute.xlu0 %883
      %885 = vrot.lane.b32.xlu0 %v604, 32
      %v886 = vpop.permute.xlu0 %885
      %887 = vrot.lane.b32.xlu0 %v605, 32
      %v888 = vpop.permute.xlu0 %887
      %889 = vrot.lane.b32.xlu0 %v606, 32
      %v890 = vpop.permute.xlu0 %889
      %891 = vrot.lane.b32.xlu0 %v607, 32
      %v892 = vpop.permute.xlu0 %891
      %893 = vrot.lane.b32.xlu0 %v608, 32
      %v894 = vpop.permute.xlu0 %893
      %895 = vrot.lane.b32.xlu0 %v609, 32
      %v896 = vpop.permute.xlu0 %895
      %897 = vrot.lane.b32.xlu0 %v610, 32
      %v898 = vpop.permute.xlu0 %897
      %899 = vrot.lane.b32.xlu0 %v611, 32
      %v900 = vpop.permute.xlu0 %899
      %901 = vrot.lane.b32.xlu0 %v612, 32
      %v902 = vpop.permute.xlu0 %901
      %903 = vrot.lane.b32.xlu0 %v613, 32
      %v904 = vpop.permute.xlu0 %903
      %937 = vrot.lane.b32.xlu0 %v617, 64
      %v938 = vpop.permute.xlu0 %937
      %939 = vrot.lane.b32.xlu0 %v618, 64
      %v940 = vpop.permute.xlu0 %939
      %941 = vrot.lane.b32.xlu0 %v619, 64
      %v942 = vpop.permute.xlu0 %941
      %943 = vrot.lane.b32.xlu0 %v620, 64
      %v944 = vpop.permute.xlu0 %943
      %945 = vrot.lane.b32.xlu0 %v621, 64
      %v946 = vpop.permute.xlu0 %945
      %947 = vrot.lane.b32.xlu0 %v622, 64
      %v948 = vpop.permute.xlu0 %947
      %949 = vrot.lane.b32.xlu0 %v623, 64
      %v950 = vpop.permute.xlu0 %949
      %951 = vrot.lane.b32.xlu0 %v624, 64
      %v952 = vpop.permute.xlu0 %951
      %953 = vrot.lane.b32.xlu0 %v625, 64
      %v954 = vpop.permute.xlu0 %953
      %955 = vrot.lane.b32.xlu0 %v626, 64
      %v956 = vpop.permute.xlu0 %955
      %957 = vrot.lane.b32.xlu0 %v627, 64
      %v958 = vpop.permute.xlu0 %957
      %959 = vrot.lane.b32.xlu0 %v628, 64
      %v960 = vpop.permute.xlu0 %959
      %961 = vrot.lane.b32.xlu0 %v629, 64
      %v962 = vpop.permute.xlu0 %961
      %963 = vrot.lane.b32.xlu0 %v630, 64
      %v964 = vpop.permute.xlu0 %963
      %965 = vrot.lane.b32.xlu0 %v631, 64
      %v966 = vpop.permute.xlu0 %965
      %967 = vrot.lane.b32.xlu0 %v632, 64
      %v968 = vpop.permute.xlu0 %967
      %1001 = vrot.lane.b32.xlu0 %v633, 96
      %v1002 = vpop.permute.xlu0 %1001
      %1003 = vrot.lane.b32.xlu0 %v634, 96
      %v1004 = vpop.permute.xlu0 %1003
      %1005 = vrot.lane.b32.xlu0 %v635, 96
      %v1006 = vpop.permute.xlu0 %1005
      %1007 = vrot.lane.b32.xlu0 %v636, 96
      %v1008 = vpop.permute.xlu0 %1007
      %1009 = vrot.lane.b32.xlu0 %v637, 96
      %v1010 = vpop.permute.xlu0 %1009
      %1011 = vrot.lane.b32.xlu0 %v638, 96
      %v1012 = vpop.permute.xlu0 %1011
      %1013 = vrot.lane.b32.xlu0 %v639, 96
      %v1014 = vpop.permute.xlu0 %1013
      %1015 = vrot.lane.b32.xlu0 %v640, 96
      %v1016 = vpop.permute.xlu0 %1015
      %1017 = vrot.lane.b32.xlu0 %v641, 96
      %v1018 = vpop.permute.xlu0 %1017
      %1019 = vrot.lane.b32.xlu0 %v642, 96
      %v1020 = vpop.permute.xlu0 %1019
      %1021 = vrot.lane.b32.xlu0 %v643, 96
      %v1022 = vpop.permute.xlu0 %1021
      %1023 = vrot.lane.b32.xlu0 %v644, 96
      %v1024 = vpop.permute.xlu0 %1023
      %1025 = vrot.lane.b32.xlu0 %v645, 96
      %v1026 = vpop.permute.xlu0 %1025
      %1027 = vrot.lane.b32.xlu0 %v646, 96
      %v1028 = vpop.permute.xlu0 %1027
      %1029 = vrot.lane.b32.xlu0 %v647, 96
      %v1030 = vpop.permute.xlu0 %1029
      %1031 = vrot.lane.b32.xlu0 %v648, 96
      %v1032 = vpop.permute.xlu0 %1031
      %v1049 = vsel %vm321, %v534, %v682
      %v1050 = vsel %vm321, %v535, %v684
      %v1051 = vsel %vm321, %v536, %v686
      %v1052 = vsel %vm321, %v537, %v688
      %v1053 = vsel %vm321, %v538, %v690
      %v1054 = vsel %vm321, %v539, %v692
      %v1055 = vsel %vm321, %v540, %v694
      %v1056 = vsel %vm321, %v541, %v696
      %v1057 = vsel %vm321, %v542, %v698
      %v1058 = vsel %vm321, %v543, %v700
      %v1059 = vsel %vm321, %v544, %v702
      %v1060 = vsel %vm321, %v545, %v704
      %v1061 = vsel %vm321, %v546, %v706
      %v1062 = vsel %vm321, %v547, %v708
      %v1063 = vsel %vm321, %v548, %v710
      %v1064 = vsel %vm321, %v549, %v712
      %vm1065 = vcmask 523264
      %v1066 = vsel %vm1065, %v1049, %v746
      %v1067 = vsel %vm1065, %v1050, %v748
      %v1068 = vsel %vm1065, %v1051, %v750
      %v1069 = vsel %vm1065, %v1052, %v752
      %v1070 = vsel %vm1065, %v1053, %v754
      %v1071 = vsel %vm1065, %v1054, %v756
      %v1072 = vsel %vm1065, %v1055, %v758
      %v1073 = vsel %vm1065, %v1056, %v760
      %v1074 = vsel %vm1065, %v1057, %v762
      %v1075 = vsel %vm1065, %v1058, %v764
      %v1076 = vsel %vm1065, %v1059, %v766
      %v1077 = vsel %vm1065, %v1060, %v768
      %v1078 = vsel %vm1065, %v1061, %v770
      %v1079 = vsel %vm1065, %v1062, %v772
      %v1080 = vsel %vm1065, %v1063, %v774
      %v1081 = vsel %vm1065, %v1064, %v776
      %vm1082 = vcmask 785408
      %v1083 = vsel %vm1082, %v1066, %v810
      %v1084 = vsel %vm1082, %v1067, %v812
      %v1085 = vsel %vm1082, %v1068, %v814
      %v1086 = vsel %vm1082, %v1069, %v816
      %v1087 = vsel %vm1082, %v1070, %v818
      %v1088 = vsel %vm1082, %v1071, %v820
      %v1089 = vsel %vm1082, %v1072, %v822
      %v1090 = vsel %vm1082, %v1073, %v824
      %v1091 = vsel %vm1082, %v1074, %v826
      %v1092 = vsel %vm1082, %v1075, %v828
      %v1093 = vsel %vm1082, %v1076, %v830
      %v1094 = vsel %vm1082, %v1077, %v832
      %v1095 = vsel %vm1082, %v1078, %v834
      %v1096 = vsel %vm1082, %v1079, %v836
      %v1097 = vsel %vm1082, %v1080, %v838
      %v1098 = vsel %vm1082, %v1081, %v840
      %v1099 = vsel %vm321, %v293, %v874
      %v1100 = vsel %vm321, %v294, %v876
      %v1101 = vsel %vm321, %v295, %v878
      %v1102 = vsel %vm321, %v296, %v880
      %v1103 = vsel %vm321, %v297, %v882
      %v1104 = vsel %vm321, %v298, %v884
      %v1105 = vsel %vm321, %v299, %v886
      %v1106 = vsel %vm321, %v300, %v888
      %v1107 = vsel %vm321, %v301, %v890
      %v1108 = vsel %vm321, %v302, %v892
      %v1109 = vsel %vm321, %v303, %v894
      %v1110 = vsel %vm321, %v304, %v896
      %v1111 = vsel %vm321, %v305, %v898
      %v1112 = vsel %vm321, %v306, %v900
      %v1113 = vsel %vm321, %v307, %v902
      %v1114 = vsel %vm321, %v308, %v904
      %v1115 = vsel %vm1065, %v1099, %v938
      %v1116 = vsel %vm1065, %v1100, %v940
      %v1117 = vsel %vm1065, %v1101, %v942
      %v1118 = vsel %vm1065, %v1102, %v944
      %v1119 = vsel %vm1065, %v1103, %v946
      %v1120 = vsel %vm1065, %v1104, %v948
      %v1121 = vsel %vm1065, %v1105, %v950
      %v1122 = vsel %vm1065, %v1106, %v952
      %v1123 = vsel %vm1065, %v1107, %v954
      %v1124 = vsel %vm1065, %v1108, %v956
      %v1125 = vsel %vm1065, %v1109, %v958
      %v1126 = vsel %vm1065, %v1110, %v960
      %v1127 = vsel %vm1065, %v1111, %v962
      %v1128 = vsel %vm1065, %v1112, %v964
      %v1129 = vsel %vm1065, %v1113, %v966
      %v1130 = vsel %vm1065, %v1114, %v968
      %v1131 = vsel %vm1082, %v1115, %v1002
      %v1132 = vsel %vm1082, %v1116, %v1004
      %v1133 = vsel %vm1082, %v1117, %v1006
      %v1134 = vsel %vm1082, %v1118, %v1008
      %v1135 = vsel %vm1082, %v1119, %v1010
      %v1136 = vsel %vm1082, %v1120, %v1012
      %v1137 = vsel %vm1082, %v1121, %v1014
      %v1138 = vsel %vm1082, %v1122, %v1016
      %v1139 = vsel %vm1082, %v1123, %v1018
      %v1140 = vsel %vm1082, %v1124, %v1020
      %v1141 = vsel %vm1082, %v1125, %v1022
      %v1142 = vsel %vm1082, %v1126, %v1024
      %v1143 = vsel %vm1082, %v1127, %v1026
      %v1144 = vsel %vm1082, %v1128, %v1028
      %v1145 = vsel %vm1082, %v1129, %v1030
      %v1146 = vsel %vm1082, %v1130, %v1032
      %v1147 = vld [vmem:[%s2] sm:$0xff]
      %v1148 = vld [vmem:[%s2 + $0x8] sm:$0xff]
      %v1149 = vld [vmem:[%s2 + $0x10] sm:$0xff]
      %v1150 = vld [vmem:[%s2 + $0x18] sm:$0xff]
      %v1151 = vld [vmem:[%s2 + $0x20] sm:$0xff]
      %v1152 = vld [vmem:[%s2 + $0x28] sm:$0xff]
      %v1153 = vld [vmem:[%s2 + $0x30] sm:$0xff]
      %v1154 = vld [vmem:[%s2 + $0x38] sm:$0xff]
      %v1155 = vld [vmem:[%s2 + $0x40] sm:$0xff]
      %v1156 = vld [vmem:[%s2 + $0x48] sm:$0xff]
      %v1157 = vld [vmem:[%s2 + $0x50] sm:$0xff]
      %v1158 = vld [vmem:[%s2 + $0x58] sm:$0xff]
      %v1159 = vld [vmem:[%s2 + $0x60] sm:$0xff]
      %v1160 = vld [vmem:[%s2 + $0x68] sm:$0xff]
      %v1161 = vld [vmem:[%s2 + $0x70] sm:$0xff]
      %v1162 = vld [vmem:[%s2 + $0x78] sm:$0xff]
      %v1163 = vld [vmem:[%s2 + $0x80] sm:$0xff]
      %v1164 = vld [vmem:[%s2 + $0x88] sm:$0xff]
      %v1165 = vld [vmem:[%s2 + $0x90] sm:$0xff]
      %v1166 = vld [vmem:[%s2 + $0x98] sm:$0xff]
      %v1167 = vld [vmem:[%s2 + $0xa0] sm:$0xff]
      %v1168 = vld [vmem:[%s2 + $0xa8] sm:$0xff]
      %v1169 = vld [vmem:[%s2 + $0xb0] sm:$0xff]
      %v1170 = vld [vmem:[%s2 + $0xb8] sm:$0xff]
      %v1171 = vld [vmem:[%s2 + $0xc0] sm:$0xff]
      %v1172 = vld [vmem:[%s2 + $0xc8] sm:$0xff]
      %v1173 = vld [vmem:[%s2 + $0xd0] sm:$0xff]
      %v1174 = vld [vmem:[%s2 + $0xd8] sm:$0xff]
      %v1175 = vld [vmem:[%s2 + $0xe0] sm:$0xff]
      %v1176 = vld [vmem:[%s2 + $0xe8] sm:$0xff]
      %v1177 = vld [vmem:[%s2 + $0xf0] sm:$0xff]
      %v1178 = vld [vmem:[%s2 + $0xf8] sm:$0xff]
      %v1179 = vld [vmem:[%s2 + $0x100] sm:$0xff]
      %v1180 = vld [vmem:[%s2 + $0x108] sm:$0xff]
      %v1181 = vld [vmem:[%s2 + $0x110] sm:$0xff]
      %v1182 = vld [vmem:[%s2 + $0x118] sm:$0xff]
      %s1183 = scalar_lea.vmem %s3, 1
      %v1184 = vld [vmem:[%s1183] sm:$0x1]
      %s1185 = scalar_lea.vmem %s4, 4
      %v1186 = vld [vmem:[%s1185] sm:$0xf]
      %v1188 = vlaneseq
      %v1189 = vshrl.u32 %v1188, 7
      %v1190 = vsub.s32 0, %v1189
      %v1191 = vrot.slane %v1184, %v1190
      %v1194 = vsel %vm321, %v649, 0
      %v1197 = vsel %vm321, %v650, 0
      %v1200 = vsel %vm321, %v651, 0
      %v1203 = vsel %vm321, %v652, 0
      %v1206 = vsel %vm321, %v653, 0
      %v1209 = vsel %vm321, %v654, 0
      %v1212 = vsel %vm321, %v655, 0
      %v1215 = vsel %vm321, %v656, 0
      %v1218 = vsel %vm321, %v657, 0
      %v1221 = vsel %vm321, %v658, 0
      %v1224 = vsel %vm321, %v659, 0
      %v1227 = vsel %vm321, %v660, 0
      %v1230 = vsel %vm321, %v661, 0
      %v1233 = vsel %vm321, %v662, 0
      %v1236 = vsel %vm321, %v663, 0
      %v1239 = vsel %vm321, %v664, 0
      %1241 = vmatprep.subr.mxu0 0.0
      %1242 = vmatpush1.msra.mxu0 %v1162
      %1243 = vmatprep.subr.mxu0 0.0
      %1244 = vmatpush1.msra.mxu0 %v1161
      %1245 = vmatprep.subr.mxu0 0.0
      %1246 = vmatpush1.msra.mxu0 %v1160
      %1247 = vmatprep.subr.mxu0 0.0
      %1248 = vmatpush1.msra.mxu0 %v1159
      %1249 = vmatprep.subr.mxu0 0.0
      %1250 = vmatpush1.msra.mxu0 %v1158
      %1251 = vmatprep.subr.mxu0 0.0
      %1252 = vmatpush1.msra.mxu0 %v1157
      %1253 = vmatprep.subr.mxu0 0.0
      %1254 = vmatpush1.msra.mxu0 %v1156
      %1255 = vmatprep.subr.mxu0 0.0
      %1256 = vmatpush1.msra.mxu0 %v1155
      %1257 = vmatprep.subr.mxu0 0.0
      %1258 = vmatpush1.msra.mxu0 %v1154
      %1259 = vmatprep.subr.mxu0 0.0
      %1260 = vmatpush1.msra.mxu0 %v1153
      %1261 = vmatprep.subr.mxu0 0.0
      %1262 = vmatpush1.msra.mxu0 %v1152
      %1263 = vmatprep.subr.mxu0 0.0
      %1264 = vmatpush1.msra.mxu0 %v1151
      %1265 = vmatprep.subr.mxu0 0.0
      %1266 = vmatpush1.msra.mxu0 %v1150
      %1267 = vmatprep.subr.mxu0 0.0
      %1268 = vmatpush1.msra.mxu0 %v1149
      %1269 = vmatprep.subr.mxu0 0.0
      %1270 = vmatpush1.msra.mxu0 %v1148
      %1271 = vmatprep.subr.mxu0 0.0
      %1272 = vmatpush1.msra.mxu0 %v1147
      %1273 = vmatprep.subr.mxu0 0.0
      %1274 = vmatpush2.msra.mxu0 %v1178
      %1275 = vmatprep.subr.mxu0 0.0
      %1276 = vmatpush2.msra.mxu0 %v1177
      %1277 = vmatprep.subr.mxu0 0.0
      %1278 = vmatpush2.msra.mxu0 %v1176
      %1279 = vmatprep.subr.mxu0 0.0
      %1280 = vmatpush2.msra.mxu0 %v1175
      %1281 = vmatprep.subr.mxu0 0.0
      %1282 = vmatpush2.msra.mxu0 %v1174
      %1283 = vmatprep.subr.mxu0 0.0
      %1284 = vmatpush2.msra.mxu0 %v1173
      %1285 = vmatprep.subr.mxu0 0.0
      %1286 = vmatpush2.msra.mxu0 %v1172
      %1287 = vmatprep.subr.mxu0 0.0
      %1288 = vmatpush2.msra.mxu0 %v1171
      %1289 = vmatprep.subr.mxu0 0.0
      %1290 = vmatpush2.msra.mxu0 %v1170
      %1291 = vmatprep.subr.mxu0 0.0
      %1292 = vmatpush2.msra.mxu0 %v1169
      %1293 = vmatprep.subr.mxu0 0.0
      %1294 = vmatpush2.msra.mxu0 %v1168
      %1295 = vmatprep.subr.mxu0 0.0
      %1296 = vmatpush2.msra.mxu0 %v1167
      %1297 = vmatprep.subr.mxu0 0.0
      %1298 = vmatpush2.msra.mxu0 %v1166
      %1299 = vmatprep.subr.mxu0 0.0
      %1300 = vmatpush2.msra.mxu0 %v1165
      %1301 = vmatprep.subr.mxu0 0.0
      %1302 = vmatpush2.msra.mxu0 %v1164
      %1303 = vmatprep.subr.mxu0 0.0
      %1304 = vmatpush2.msra.mxu0 %v1163
      %1305 = vmatprep.mubr.f32.mxu0 %v1131
      %1306 = vmatmul.mubr.f32.gmra.mxu0 %v1083
      %v1307 = vpop.f32.mrf.mxu0
      %v1308 = vadd.f32 %v1191, %v1307
      %v1309 = vpop.f32.mrf.mxu0
      %1310 = vmatprep.mubr.f32.mxu0 %v1132
      %1311 = vmatmul.mubr.f32.gmra.mxu0 %v1084
      %v1312 = vpop.f32.mrf.mxu0
      %v1313 = vadd.f32 %v1191, %v1312
      %v1314 = vpop.f32.mrf.mxu0
      %1315 = vmatprep.mubr.f32.mxu0 %v1133
      %1316 = vmatmul.mubr.f32.gmra.mxu0 %v1085
      %v1317 = vpop.f32.mrf.mxu0
      %v1318 = vadd.f32 %v1191, %v1317
      %v1319 = vpop.f32.mrf.mxu0
      %1320 = vmatprep.mubr.f32.mxu0 %v1134
      %1321 = vmatmul.mubr.f32.gmra.mxu0 %v1086
      %v1322 = vpop.f32.mrf.mxu0
      %v1323 = vadd.f32 %v1191, %v1322
      %v1324 = vpop.f32.mrf.mxu0
      %1325 = vmatprep.mubr.f32.mxu0 %v1135
      %1326 = vmatmul.mubr.f32.gmra.mxu0 %v1087
      %v1327 = vpop.f32.mrf.mxu0
      %v1328 = vadd.f32 %v1191, %v1327
      %v1329 = vpop.f32.mrf.mxu0
      %1330 = vmatprep.mubr.f32.mxu0 %v1136
      %1331 = vmatmul.mubr.f32.gmra.mxu0 %v1088
      %v1332 = vpop.f32.mrf.mxu0
      %v1333 = vadd.f32 %v1191, %v1332
      %v1334 = vpop.f32.mrf.mxu0
      %1335 = vmatprep.mubr.f32.mxu0 %v1137
      %1336 = vmatmul.mubr.f32.gmra.mxu0 %v1089
      %v1337 = vpop.f32.mrf.mxu0
      %v1338 = vadd.f32 %v1191, %v1337
      %v1339 = vpop.f32.mrf.mxu0
      %1340 = vmatprep.mubr.f32.mxu0 %v1138
      %1341 = vmatmul.mubr.f32.gmra.mxu0 %v1090
      %v1342 = vpop.f32.mrf.mxu0
      %v1343 = vadd.f32 %v1191, %v1342
      %v1344 = vpop.f32.mrf.mxu0
      %1345 = vmatprep.mubr.f32.mxu0 %v1139
      %1346 = vmatmul.mubr.f32.gmra.mxu0 %v1091
      %v1347 = vpop.f32.mrf.mxu0
      %v1348 = vadd.f32 %v1191, %v1347
      %v1349 = vpop.f32.mrf.mxu0
      %1350 = vmatprep.mubr.f32.mxu0 %v1140
      %1351 = vmatmul.mubr.f32.gmra.mxu0 %v1092
      %v1352 = vpop.f32.mrf.mxu0
      %v1353 = vadd.f32 %v1191, %v1352
      %v1354 = vpop.f32.mrf.mxu0
      %1355 = vmatprep.mubr.f32.mxu0 %v1141
      %1356 = vmatmul.mubr.f32.gmra.mxu0 %v1093
      %v1357 = vpop.f32.mrf.mxu0
      %v1358 = vadd.f32 %v1191, %v1357
      %v1359 = vpop.f32.mrf.mxu0
      %1360 = vmatprep.mubr.f32.mxu0 %v1142
      %1361 = vmatmul.mubr.f32.gmra.mxu0 %v1094
      %v1362 = vpop.f32.mrf.mxu0
      %v1363 = vadd.f32 %v1191, %v1362
      %v1364 = vpop.f32.mrf.mxu0
      %1365 = vmatprep.mubr.f32.mxu0 %v1143
      %1366 = vmatmul.mubr.f32.gmra.mxu0 %v1095
      %v1367 = vpop.f32.mrf.mxu0
      %v1368 = vadd.f32 %v1191, %v1367
      %v1369 = vpop.f32.mrf.mxu0
      %1370 = vmatprep.mubr.f32.mxu0 %v1144
      %1371 = vmatmul.mubr.f32.gmra.mxu0 %v1096
      %v1372 = vpop.f32.mrf.mxu0
      %v1373 = vadd.f32 %v1191, %v1372
      %v1374 = vpop.f32.mrf.mxu0
      %1375 = vmatprep.mubr.f32.mxu0 %v1145
      %1376 = vmatmul.mubr.f32.gmra.mxu0 %v1097
      %v1377 = vpop.f32.mrf.mxu0
      %v1378 = vadd.f32 %v1191, %v1377
      %v1379 = vpop.f32.mrf.mxu0
      %1380 = vmatprep.mubr.f32.mxu0 %v1146
      %1381 = vmatmul.mubr.f32.gmra.mxu0 %v1098
      %v1382 = vpop.f32.mrf.mxu0
      %v1383 = vadd.f32 %v1191, %v1382
      %v1384 = vpop.f32.mrf.mxu0
      %1385 = vdwg.mxu0
      %1386 = vmatprep.subr.mxu0 0.0
      %1387 = vmatpush1.msra.mxu0 0.0
      %1388 = vmatprep.subr.mxu0 0.0
      %1389 = vmatpush1.msra.mxu0 0.0
      %1390 = vmatprep.subr.mxu0 0.0
      %1391 = vmatpush1.msra.mxu0 0.0
      %1392 = vmatprep.subr.mxu0 0.0
      %1393 = vmatpush1.msra.mxu0 0.0
      %1394 = vmatprep.subr.mxu0 0.0
      %1395 = vmatpush1.msra.mxu0 0.0
      %1396 = vmatprep.subr.mxu0 0.0
      %1397 = vmatpush1.msra.mxu0 0.0
      %1398 = vmatprep.subr.mxu0 0.0
      %1399 = vmatpush1.msra.mxu0 0.0
      %1400 = vmatprep.subr.mxu0 0.0
      %1401 = vmatpush1.msra.mxu0 0.0
      %1402 = vmatprep.subr.mxu0 0.0
      %1403 = vmatpush1.msra.mxu0 0.0
      %1404 = vmatprep.subr.mxu0 0.0
      %1405 = vmatpush1.msra.mxu0 0.0
      %1406 = vmatprep.subr.mxu0 0.0
      %1407 = vmatpush1.msra.mxu0 0.0
      %1408 = vmatprep.subr.mxu0 0.0
      %1409 = vmatpush1.msra.mxu0 0.0
      %1410 = vmatprep.subr.mxu0 0.0
      %1411 = vmatpush1.msra.mxu0 %v1182
      %1412 = vmatprep.subr.mxu0 0.0
      %1413 = vmatpush1.msra.mxu0 %v1181
      %1414 = vmatprep.subr.mxu0 0.0
      %1415 = vmatpush1.msra.mxu0 %v1180
      %1416 = vmatprep.subr.mxu0 0.0
      %1417 = vmatpush1.msra.mxu0 %v1179
      %1418 = vmatprep.subr.mxu0 0.0
      %1419 = vmatpush2.msra.mxu0 0.0
      %1420 = vmatprep.subr.mxu0 0.0
      %1421 = vmatpush2.msra.mxu0 0.0
      %1422 = vmatprep.subr.mxu0 0.0
      %1423 = vmatpush2.msra.mxu0 0.0
      %1424 = vmatprep.subr.mxu0 0.0
      %1425 = vmatpush2.msra.mxu0 0.0
      %1426 = vmatprep.subr.mxu0 0.0
      %1427 = vmatpush2.msra.mxu0 0.0
      %1428 = vmatprep.subr.mxu0 0.0
      %1429 = vmatpush2.msra.mxu0 0.0
      %1430 = vmatprep.subr.mxu0 0.0
      %1431 = vmatpush2.msra.mxu0 0.0
      %1432 = vmatprep.subr.mxu0 0.0
      %1433 = vmatpush2.msra.mxu0 0.0
      %1434 = vmatprep.subr.mxu0 0.0
      %1435 = vmatpush2.msra.mxu0 0.0
      %1436 = vmatprep.subr.mxu0 0.0
      %1437 = vmatpush2.msra.mxu0 0.0
      %1438 = vmatprep.subr.mxu0 0.0
      %1439 = vmatpush2.msra.mxu0 0.0
      %1440 = vmatprep.subr.mxu0 0.0
      %1441 = vmatpush2.msra.mxu0 0.0
      %1442 = vmatprep.subr.mxu0 0.0
      %1443 = vmatpush2.msra.mxu0 0.0
      %1444 = vmatprep.subr.mxu0 0.0
      %1445 = vmatpush2.msra.mxu0 0.0
      %1446 = vmatprep.subr.mxu0 0.0
      %1447 = vmatpush2.msra.mxu0 0.0
      %1448 = vmatprep.subr.mxu0 0.0
      %1449 = vmatpush2.msra.mxu0 0.0
      %1450 = vmatprep.mubr.f32.mxu0 0.0
      %1451 = vmatmul.mubr.f32.gmra.mxu0 %v1194
      %v1452 = vpop.f32.mrf.mxu0
      %v1453 = vadd.f32 %v1308, %v1452
      %v1454 = vpop.f32.mrf.mxu0
      %1455 = vmatprep.mubr.f32.mxu0 0.0
      %1456 = vmatmul.mubr.f32.gmra.mxu0 %v1197
      %v1457 = vpop.f32.mrf.mxu0
      %v1458 = vadd.f32 %v1313, %v1457
      %v1459 = vpop.f32.mrf.mxu0
      %1460 = vmatprep.mubr.f32.mxu0 0.0
      %1461 = vmatmul.mubr.f32.gmra.mxu0 %v1200
      %v1462 = vpop.f32.mrf.mxu0
      %v1463 = vadd.f32 %v1318, %v1462
      %v1464 = vpop.f32.mrf.mxu0
      %1465 = vmatprep.mubr.f32.mxu0 0.0
      %1466 = vmatmul.mubr.f32.gmra.mxu0 %v1203
      %v1467 = vpop.f32.mrf.mxu0
      %v1468 = vadd.f32 %v1323, %v1467
      %v1469 = vpop.f32.mrf.mxu0
      %1470 = vmatprep.mubr.f32.mxu0 0.0
      %1471 = vmatmul.mubr.f32.gmra.mxu0 %v1206
      %v1472 = vpop.f32.mrf.mxu0
      %v1473 = vadd.f32 %v1328, %v1472
      %v1474 = vpop.f32.mrf.mxu0
      %1475 = vmatprep.mubr.f32.mxu0 0.0
      %1476 = vmatmul.mubr.f32.gmra.mxu0 %v1209
      %v1477 = vpop.f32.mrf.mxu0
      %v1478 = vadd.f32 %v1333, %v1477
      %v1479 = vpop.f32.mrf.mxu0
      %1480 = vmatprep.mubr.f32.mxu0 0.0
      %1481 = vmatmul.mubr.f32.gmra.mxu0 %v1212
      %v1482 = vpop.f32.mrf.mxu0
      %v1483 = vadd.f32 %v1338, %v1482
      %v1484 = vpop.f32.mrf.mxu0
      %1485 = vmatprep.mubr.f32.mxu0 0.0
      %1486 = vmatmul.mubr.f32.gmra.mxu0 %v1215
      %v1487 = vpop.f32.mrf.mxu0
      %v1488 = vadd.f32 %v1343, %v1487
      %v1489 = vpop.f32.mrf.mxu0
      %1490 = vmatprep.mubr.f32.mxu0 0.0
      %1491 = vmatmul.mubr.f32.gmra.mxu0 %v1218
      %v1492 = vpop.f32.mrf.mxu0
      %v1493 = vadd.f32 %v1348, %v1492
      %v1494 = vpop.f32.mrf.mxu0
      %1495 = vmatprep.mubr.f32.mxu0 0.0
      %1496 = vmatmul.mubr.f32.gmra.mxu0 %v1221
      %v1497 = vpop.f32.mrf.mxu0
      %v1498 = vadd.f32 %v1353, %v1497
      %v1499 = vpop.f32.mrf.mxu0
      %1500 = vmatprep.mubr.f32.mxu0 0.0
      %1501 = vmatmul.mubr.f32.gmra.mxu0 %v1224
      %v1502 = vpop.f32.mrf.mxu0
      %v1503 = vadd.f32 %v1358, %v1502
      %v1504 = vpop.f32.mrf.mxu0
      %1505 = vmatprep.mubr.f32.mxu0 0.0
      %1506 = vmatmul.mubr.f32.gmra.mxu0 %v1227
      %v1507 = vpop.f32.mrf.mxu0
      %v1508 = vadd.f32 %v1363, %v1507
      %v1509 = vpop.f32.mrf.mxu0
      %1510 = vmatprep.mubr.f32.mxu0 0.0
      %1511 = vmatmul.mubr.f32.gmra.mxu0 %v1230
      %v1512 = vpop.f32.mrf.mxu0
      %v1513 = vadd.f32 %v1368, %v1512
      %v1514 = vpop.f32.mrf.mxu0
      %1515 = vmatprep.mubr.f32.mxu0 0.0
      %1516 = vmatmul.mubr.f32.gmra.mxu0 %v1233
      %v1517 = vpop.f32.mrf.mxu0
      %v1518 = vadd.f32 %v1373, %v1517
      %v1519 = vpop.f32.mrf.mxu0
      %1520 = vmatprep.mubr.f32.mxu0 0.0
      %1521 = vmatmul.mubr.f32.gmra.mxu0 %v1236
      %v1522 = vpop.f32.mrf.mxu0
      %v1523 = vadd.f32 %v1378, %v1522
      %v1524 = vpop.f32.mrf.mxu0
      %1525 = vmatprep.mubr.f32.mxu0 0.0
      %1526 = vmatmul.mubr.f32.gmra.mxu0 %v1239
      %v1527 = vpop.f32.mrf.mxu0
      %v1528 = vadd.f32 %v1383, %v1527
      %v1529 = vpop.f32.mrf.mxu0
      %1530 = vdwg.mxu0
      %v1531 = vmax.f32 %v1453, 0.0
      %v1532 = vmax.f32 %v1458, 0.0
      %v1533 = vmax.f32 %v1463, 0.0
      %v1534 = vmax.f32 %v1468, 0.0
      %v1535 = vmax.f32 %v1473, 0.0
      %v1536 = vmax.f32 %v1478, 0.0
      %v1537 = vmax.f32 %v1483, 0.0
      %v1538 = vmax.f32 %v1488, 0.0
      %v1539 = vmax.f32 %v1493, 0.0
      %v1540 = vmax.f32 %v1498, 0.0
      %v1541 = vmax.f32 %v1503, 0.0
      %v1542 = vmax.f32 %v1508, 0.0
      %v1543 = vmax.f32 %v1513, 0.0
      %v1544 = vmax.f32 %v1518, 0.0
      %v1545 = vmax.f32 %v1523, 0.0
      %v1546 = vmax.f32 %v1528, 0.0
      %vm1547 = vcmask 31744
      %v1549 = vsel %vm1547, %v1531, 0
      %v1552 = vsel %vm1547, %v1532, 0
      %v1555 = vsel %vm1547, %v1533, 0
      %v1558 = vsel %vm1547, %v1534, 0
      %v1561 = vsel %vm1547, %v1535, 0
      %v1564 = vsel %vm1547, %v1536, 0
      %v1567 = vsel %vm1547, %v1537, 0
      %v1570 = vsel %vm1547, %v1538, 0
      %v1573 = vsel %vm1547, %v1539, 0
      %v1576 = vsel %vm1547, %v1540, 0
      %v1579 = vsel %vm1547, %v1541, 0
      %v1582 = vsel %vm1547, %v1542, 0
      %v1585 = vsel %vm1547, %v1543, 0
      %v1588 = vsel %vm1547, %v1544, 0
      %v1591 = vsel %vm1547, %v1545, 0
      %v1594 = vsel %vm1547, %v1546, 0
      %vm1596 = vcmask 1043456
      %v1598 = vsel %vm1596, %v1186, 0
      %1600 = vmatprep.subr.mxu0 0.0
      %1601 = vmatpush1.msra.mxu0 0.0
      %1602 = vmatprep.subr.mxu0 0.0
      %1603 = vmatpush1.msra.mxu0 0.0
      %1604 = vmatprep.subr.mxu0 0.0
      %1605 = vmatpush1.msra.mxu0 0.0
      %1606 = vmatprep.subr.mxu0 0.0
      %1607 = vmatpush1.msra.mxu0 0.0
      %1608 = vmatprep.subr.mxu0 0.0
      %1609 = vmatpush1.msra.mxu0 0.0
      %1610 = vmatprep.subr.mxu0 0.0
      %1611 = vmatpush1.msra.mxu0 0.0
      %1612 = vmatprep.subr.mxu0 0.0
      %1613 = vmatpush1.msra.mxu0 0.0
      %1614 = vmatprep.subr.mxu0 0.0
      %1615 = vmatpush1.msra.mxu0 0.0
      %1616 = vmatprep.subr.mxu0 0.0
      %1617 = vmatpush1.msra.mxu0 0.0
      %1618 = vmatprep.subr.mxu0 0.0
      %1619 = vmatpush1.msra.mxu0 0.0
      %1620 = vmatprep.subr.mxu0 0.0
      %1621 = vmatpush1.msra.mxu0 0.0
      %1622 = vmatprep.subr.mxu0 0.0
      %1623 = vmatpush1.msra.mxu0 0.0
      %1624 = vmatprep.subr.mxu0 0.0
      %1625 = vmatpush1.msra.mxu0 0.0
      %1626 = vmatprep.subr.mxu0 0.0
      %1627 = vmatpush1.msra.mxu0 0.0
      %1628 = vmatprep.subr.mxu0 0.0
      %1629 = vmatpush1.msra.mxu0 0.0
      %1630 = vmatprep.subr.mxu0 0.0
      %1631 = vmatpush1.msra.mxu0 %v1598
      %1632 = vmatprep.subr.mxu0 0.0
      %1633 = vmatpush2.msra.mxu0 0.0
      %1634 = vmatprep.subr.mxu0 0.0
      %1635 = vmatpush2.msra.mxu0 0.0
      %1636 = vmatprep.subr.mxu0 0.0
      %1637 = vmatpush2.msra.mxu0 0.0
      %1638 = vmatprep.subr.mxu0 0.0
      %1639 = vmatpush2.msra.mxu0 0.0
      %1640 = vmatprep.subr.mxu0 0.0
      %1641 = vmatpush2.msra.mxu0 0.0
      %1642 = vmatprep.subr.mxu0 0.0
      %1643 = vmatpush2.msra.mxu0 0.0
      %1644 = vmatprep.subr.mxu0 0.0
      %1645 = vmatpush2.msra.mxu0 0.0
      %1646 = vmatprep.subr.mxu0 0.0
      %1647 = vmatpush2.msra.mxu0 0.0
      %1648 = vmatprep.subr.mxu0 0.0
      %1649 = vmatpush2.msra.mxu0 0.0
      %1650 = vmatprep.subr.mxu0 0.0
      %1651 = vmatpush2.msra.mxu0 0.0
      %1652 = vmatprep.subr.mxu0 0.0
      %1653 = vmatpush2.msra.mxu0 0.0
      %1654 = vmatprep.subr.mxu0 0.0
      %1655 = vmatpush2.msra.mxu0 0.0
      %1656 = vmatprep.subr.mxu0 0.0
      %1657 = vmatpush2.msra.mxu0 0.0
      %1658 = vmatprep.subr.mxu0 0.0
      %1659 = vmatpush2.msra.mxu0 0.0
      %1660 = vmatprep.subr.mxu0 0.0
      %1661 = vmatpush2.msra.mxu0 0.0
      %1662 = vmatprep.subr.mxu0 0.0
      %1663 = vmatpush2.msra.mxu0 0.0
      %1664 = vmatprep.mubr.f32.mxu0 0.0
      %1665 = vmatmul.mubr.f32.gmra.mxu0 %v1549
      %v1666 = vpop.f32.mrf.mxu0
      %v1667 = vadd.f32 0.0, %v1666
      %v1668 = vpop.f32.mrf.mxu0
      %1669 = vmatprep.mubr.f32.mxu0 0.0
      %1670 = vmatmul.mubr.f32.gmra.mxu0 %v1552
      %v1671 = vpop.f32.mrf.mxu0
      %v1672 = vadd.f32 0.0, %v1671
      %v1673 = vpop.f32.mrf.mxu0
      %1674 = vmatprep.mubr.f32.mxu0 0.0
      %1675 = vmatmul.mubr.f32.gmra.mxu0 %v1555
      %v1676 = vpop.f32.mrf.mxu0
      %v1677 = vadd.f32 0.0, %v1676
      %v1678 = vpop.f32.mrf.mxu0
      %1679 = vmatprep.mubr.f32.mxu0 0.0
      %1680 = vmatmul.mubr.f32.gmra.mxu0 %v1558
      %v1681 = vpop.f32.mrf.mxu0
      %v1682 = vadd.f32 0.0, %v1681
      %v1683 = vpop.f32.mrf.mxu0
      %1684 = vmatprep.mubr.f32.mxu0 0.0
      %1685 = vmatmul.mubr.f32.gmra.mxu0 %v1561
      %v1686 = vpop.f32.mrf.mxu0
      %v1687 = vadd.f32 0.0, %v1686
      %v1688 = vpop.f32.mrf.mxu0
      %1689 = vmatprep.mubr.f32.mxu0 0.0
      %1690 = vmatmul.mubr.f32.gmra.mxu0 %v1564
      %v1691 = vpop.f32.mrf.mxu0
      %v1692 = vadd.f32 0.0, %v1691
      %v1693 = vpop.f32.mrf.mxu0
      %1694 = vmatprep.mubr.f32.mxu0 0.0
      %1695 = vmatmul.mubr.f32.gmra.mxu0 %v1567
      %v1696 = vpop.f32.mrf.mxu0
      %v1697 = vadd.f32 0.0, %v1696
      %v1698 = vpop.f32.mrf.mxu0
      %1699 = vmatprep.mubr.f32.mxu0 0.0
      %1700 = vmatmul.mubr.f32.gmra.mxu0 %v1570
      %v1701 = vpop.f32.mrf.mxu0
      %v1702 = vadd.f32 0.0, %v1701
      %v1703 = vpop.f32.mrf.mxu0
      %1704 = vmatprep.mubr.f32.mxu0 0.0
      %1705 = vmatmul.mubr.f32.gmra.mxu0 %v1573
      %v1706 = vpop.f32.mrf.mxu0
      %v1707 = vadd.f32 0.0, %v1706
      %v1708 = vpop.f32.mrf.mxu0
      %1709 = vmatprep.mubr.f32.mxu0 0.0
      %1710 = vmatmul.mubr.f32.gmra.mxu0 %v1576
      %v1711 = vpop.f32.mrf.mxu0
      %v1712 = vadd.f32 0.0, %v1711
      %v1713 = vpop.f32.mrf.mxu0
      %1714 = vmatprep.mubr.f32.mxu0 0.0
      %1715 = vmatmul.mubr.f32.gmra.mxu0 %v1579
      %v1716 = vpop.f32.mrf.mxu0
      %v1717 = vadd.f32 0.0, %v1716
      %v1718 = vpop.f32.mrf.mxu0
      %1719 = vmatprep.mubr.f32.mxu0 0.0
      %1720 = vmatmul.mubr.f32.gmra.mxu0 %v1582
      %v1721 = vpop.f32.mrf.mxu0
      %v1722 = vadd.f32 0.0, %v1721
      %v1723 = vpop.f32.mrf.mxu0
      %1724 = vmatprep.mubr.f32.mxu0 0.0
      %1725 = vmatmul.mubr.f32.gmra.mxu0 %v1585
      %v1726 = vpop.f32.mrf.mxu0
      %v1727 = vadd.f32 0.0, %v1726
      %v1728 = vpop.f32.mrf.mxu0
      %1729 = vmatprep.mubr.f32.mxu0 0.0
      %1730 = vmatmul.mubr.f32.gmra.mxu0 %v1588
      %v1731 = vpop.f32.mrf.mxu0
      %v1732 = vadd.f32 0.0, %v1731
      %v1733 = vpop.f32.mrf.mxu0
      %1734 = vmatprep.mubr.f32.mxu0 0.0
      %1735 = vmatmul.mubr.f32.gmra.mxu0 %v1591
      %v1736 = vpop.f32.mrf.mxu0
      %v1737 = vadd.f32 0.0, %v1736
      %v1738 = vpop.f32.mrf.mxu0
      %1739 = vmatprep.mubr.f32.mxu0 0.0
      %1740 = vmatmul.mubr.f32.gmra.mxu0 %v1594
      %v1741 = vpop.f32.mrf.mxu0
      %v1742 = vadd.f32 0.0, %v1741
      %v1743 = vpop.f32.mrf.mxu0
      %1744 = vdwg.mxu0
      %v1746 = vsel %vm1547, %v515, 0
      %v1749 = vsel %vm1547, %v516, 0
      %v1752 = vsel %vm1547, %v517, 0
      %v1755 = vsel %vm1547, %v518, 0
      %v1758 = vsel %vm1547, %v519, 0
      %v1761 = vsel %vm1547, %v520, 0
      %v1764 = vsel %vm1547, %v521, 0
      %v1767 = vsel %vm1547, %v522, 0
      %v1770 = vsel %vm1547, %v523, 0
      %v1773 = vsel %vm1547, %v524, 0
      %v1776 = vsel %vm1547, %v525, 0
      %v1779 = vsel %vm1547, %v526, 0
      %v1782 = vsel %vm1547, %v527, 0
      %v1785 = vsel %vm1547, %v528, 0
      %v1788 = vsel %vm1547, %v529, 0
      %v1791 = vsel %vm1547, %v530, 0
      %v1794 = vsel %vm1596, %v314, 0
      %1796 = vmatprep.subr.mxu0 0.0
      %1797 = vmatpush1.msra.mxu0 0.0
      %1798 = vmatprep.subr.mxu0 0.0
      %1799 = vmatpush1.msra.mxu0 0.0
      %1800 = vmatprep.subr.mxu0 0.0
      %1801 = vmatpush1.msra.mxu0 0.0
      %1802 = vmatprep.subr.mxu0 0.0
      %1803 = vmatpush1.msra.mxu0 0.0
      %1804 = vmatprep.subr.mxu0 0.0
      %1805 = vmatpush1.msra.mxu0 0.0
      %1806 = vmatprep.subr.mxu0 0.0
      %1807 = vmatpush1.msra.mxu0 0.0
      %1808 = vmatprep.subr.mxu0 0.0
      %1809 = vmatpush1.msra.mxu0 0.0
      %1810 = vmatprep.subr.mxu0 0.0
      %1811 = vmatpush1.msra.mxu0 0.0
      %1812 = vmatprep.subr.mxu0 0.0
      %1813 = vmatpush1.msra.mxu0 0.0
      %1814 = vmatprep.subr.mxu0 0.0
      %1815 = vmatpush1.msra.mxu0 0.0
      %1816 = vmatprep.subr.mxu0 0.0
      %1817 = vmatpush1.msra.mxu0 0.0
      %1818 = vmatprep.subr.mxu0 0.0
      %1819 = vmatpush1.msra.mxu0 0.0
      %1820 = vmatprep.subr.mxu0 0.0
      %1821 = vmatpush1.msra.mxu0 0.0
      %1822 = vmatprep.subr.mxu0 0.0
      %1823 = vmatpush1.msra.mxu0 0.0
      %1824 = vmatprep.subr.mxu0 0.0
      %1825 = vmatpush1.msra.mxu0 0.0
      %1826 = vmatprep.subr.mxu0 0.0
      %1827 = vmatpush1.msra.mxu0 %v1794
      %1828 = vmatprep.subr.mxu0 0.0
      %1829 = vmatpush2.msra.mxu0 0.0
      %1830 = vmatprep.subr.mxu0 0.0
      %1831 = vmatpush2.msra.mxu0 0.0
      %1832 = vmatprep.subr.mxu0 0.0
      %1833 = vmatpush2.msra.mxu0 0.0
      %1834 = vmatprep.subr.mxu0 0.0
      %1835 = vmatpush2.msra.mxu0 0.0
      %1836 = vmatprep.subr.mxu0 0.0
      %1837 = vmatpush2.msra.mxu0 0.0
      %1838 = vmatprep.subr.mxu0 0.0
      %1839 = vmatpush2.msra.mxu0 0.0
      %1840 = vmatprep.subr.mxu0 0.0
      %1841 = vmatpush2.msra.mxu0 0.0
      %1842 = vmatprep.subr.mxu0 0.0
      %1843 = vmatpush2.msra.mxu0 0.0
      %1844 = vmatprep.subr.mxu0 0.0
      %1845 = vmatpush2.msra.mxu0 0.0
      %1846 = vmatprep.subr.mxu0 0.0
      %1847 = vmatpush2.msra.mxu0 0.0
      %1848 = vmatprep.subr.mxu0 0.0
      %1849 = vmatpush2.msra.mxu0 0.0
      %1850 = vmatprep.subr.mxu0 0.0
      %1851 = vmatpush2.msra.mxu0 0.0
      %1852 = vmatprep.subr.mxu0 0.0
      %1853 = vmatpush2.msra.mxu0 0.0
      %1854 = vmatprep.subr.mxu0 0.0
      %1855 = vmatpush2.msra.mxu0 0.0
      %1856 = vmatprep.subr.mxu0 0.0
      %1857 = vmatpush2.msra.mxu0 0.0
      %1858 = vmatprep.subr.mxu0 0.0
      %1859 = vmatpush2.msra.mxu0 0.0
      %1860 = vmatprep.mubr.f32.mxu0 0.0
      %1861 = vmatmul.mubr.f32.gmra.mxu0 %v1746
      %v1862 = vpop.f32.mrf.mxu0
      %v1863 = vadd.f32 %v1667, %v1862
      %v1864 = vpop.f32.mrf.mxu0
      %1865 = vmatprep.mubr.f32.mxu0 0.0
      %1866 = vmatmul.mubr.f32.gmra.mxu0 %v1749
      %v1867 = vpop.f32.mrf.mxu0
      %v1868 = vadd.f32 %v1672, %v1867
      %v1869 = vpop.f32.mrf.mxu0
      %1870 = vmatprep.mubr.f32.mxu0 0.0
      %1871 = vmatmul.mubr.f32.gmra.mxu0 %v1752
      %v1872 = vpop.f32.mrf.mxu0
      %v1873 = vadd.f32 %v1677, %v1872
      %v1874 = vpop.f32.mrf.mxu0
      %1875 = vmatprep.mubr.f32.mxu0 0.0
      %1876 = vmatmul.mubr.f32.gmra.mxu0 %v1755
      %v1877 = vpop.f32.mrf.mxu0
      %v1878 = vadd.f32 %v1682, %v1877
      %v1879 = vpop.f32.mrf.mxu0
      %1880 = vmatprep.mubr.f32.mxu0 0.0
      %1881 = vmatmul.mubr.f32.gmra.mxu0 %v1758
      %v1882 = vpop.f32.mrf.mxu0
      %v1883 = vadd.f32 %v1687, %v1882
      %v1884 = vpop.f32.mrf.mxu0
      %1885 = vmatprep.mubr.f32.mxu0 0.0
      %1886 = vmatmul.mubr.f32.gmra.mxu0 %v1761
      %v1887 = vpop.f32.mrf.mxu0
      %v1888 = vadd.f32 %v1692, %v1887
      %v1889 = vpop.f32.mrf.mxu0
      %1890 = vmatprep.mubr.f32.mxu0 0.0
      %1891 = vmatmul.mubr.f32.gmra.mxu0 %v1764
      %v1892 = vpop.f32.mrf.mxu0
      %v1893 = vadd.f32 %v1697, %v1892
      %v1894 = vpop.f32.mrf.mxu0
      %1895 = vmatprep.mubr.f32.mxu0 0.0
      %1896 = vmatmul.mubr.f32.gmra.mxu0 %v1767
      %v1897 = vpop.f32.mrf.mxu0
      %v1898 = vadd.f32 %v1702, %v1897
      %v1899 = vpop.f32.mrf.mxu0
      %1900 = vmatprep.mubr.f32.mxu0 0.0
      %1901 = vmatmul.mubr.f32.gmra.mxu0 %v1770
      %v1902 = vpop.f32.mrf.mxu0
      %v1903 = vadd.f32 %v1707, %v1902
      %v1904 = vpop.f32.mrf.mxu0
      %1905 = vmatprep.mubr.f32.mxu0 0.0
      %1906 = vmatmul.mubr.f32.gmra.mxu0 %v1773
      %v1907 = vpop.f32.mrf.mxu0
      %v1908 = vadd.f32 %v1712, %v1907
      %v1909 = vpop.f32.mrf.mxu0
      %1910 = vmatprep.mubr.f32.mxu0 0.0
      %1911 = vmatmul.mubr.f32.gmra.mxu0 %v1776
      %v1912 = vpop.f32.mrf.mxu0
      %v1913 = vadd.f32 %v1717, %v1912
      %v1914 = vpop.f32.mrf.mxu0
      %1915 = vmatprep.mubr.f32.mxu0 0.0
      %1916 = vmatmul.mubr.f32.gmra.mxu0 %v1779
      %v1917 = vpop.f32.mrf.mxu0
      %v1918 = vadd.f32 %v1722, %v1917
      %v1919 = vpop.f32.mrf.mxu0
      %1920 = vmatprep.mubr.f32.mxu0 0.0
      %1921 = vmatmul.mubr.f32.gmra.mxu0 %v1782
      %v1922 = vpop.f32.mrf.mxu0
      %v1923 = vadd.f32 %v1727, %v1922
      %v1924 = vpop.f32.mrf.mxu0
      %1925 = vmatprep.mubr.f32.mxu0 0.0
      %1926 = vmatmul.mubr.f32.gmra.mxu0 %v1785
      %v1927 = vpop.f32.mrf.mxu0
      %v1928 = vadd.f32 %v1732, %v1927
      %v1929 = vpop.f32.mrf.mxu0
      %1930 = vmatprep.mubr.f32.mxu0 0.0
      %1931 = vmatmul.mubr.f32.gmra.mxu0 %v1788
      %v1932 = vpop.f32.mrf.mxu0
      %v1933 = vadd.f32 %v1737, %v1932
      %v1934 = vpop.f32.mrf.mxu0
      %1935 = vmatprep.mubr.f32.mxu0 0.0
      %1936 = vmatmul.mubr.f32.gmra.mxu0 %v1791
      %v1937 = vpop.f32.mrf.mxu0
      %v1938 = vadd.f32 %v1742, %v1937
      %v1939 = vpop.f32.mrf.mxu0
      %1940 = vdwg.mxu0
      %s1941 = sadd.s32 %s289, 2
      %s1942 = smul.u32 %s1941, 32
      %s1943 = scalar_lea.vmem %s275, %s1942
      %v1944 = vld [vmem:[%s1943 + $0x2] sm:$0xff]
      %v1945 = vld [vmem:[%s1943 + $0xa] sm:$0xff]
      %v1946 = vld [vmem:[%s1943 + $0x22] sm:$0xff]
      %v1947 = vld [vmem:[%s1943 + $0x2a] sm:$0xff]
      %v1948 = vld [vmem:[%s1943 + $0x42] sm:$0xff]
      %v1949 = vld [vmem:[%s1943 + $0x4a] sm:$0xff]
      %v1950 = vld [vmem:[%s1943 + $0x62] sm:$0xff]
      %v1951 = vld [vmem:[%s1943 + $0x6a] sm:$0xff]
      %v1952 = vld [vmem:[%s1943 + $0x82] sm:$0xff]
      %v1953 = vld [vmem:[%s1943 + $0x8a] sm:$0xff]
      %v1954 = vld [vmem:[%s1943 + $0xa2] sm:$0xff]
      %v1955 = vld [vmem:[%s1943 + $0xaa] sm:$0xff]
      %v1956 = vld [vmem:[%s1943 + $0xc2] sm:$0xff]
      %v1957 = vld [vmem:[%s1943 + $0xca] sm:$0xff]
      %v1958 = vld [vmem:[%s1943 + $0xe2] sm:$0xff]
      %v1959 = vld [vmem:[%s1943 + $0xea] sm:$0xff]
      %v1960 = vld [vmem:[%s1943 + $0x6] sm:$0xff]
      %v1961 = vld [vmem:[%s1943 + $0xe] sm:$0xff]
      %v1962 = vld [vmem:[%s1943 + $0x26] sm:$0xff]
      %v1963 = vld [vmem:[%s1943 + $0x2e] sm:$0xff]
      %v1964 = vld [vmem:[%s1943 + $0x46] sm:$0xff]
      %v1965 = vld [vmem:[%s1943 + $0x4e] sm:$0xff]
      %v1966 = vld [vmem:[%s1943 + $0x66] sm:$0xff]
      %v1967 = vld [vmem:[%s1943 + $0x6e] sm:$0xff]
      %v1968 = vld [vmem:[%s1943 + $0x86] sm:$0xff]
      %v1969 = vld [vmem:[%s1943 + $0x8e] sm:$0xff]
      %v1970 = vld [vmem:[%s1943 + $0xa6] sm:$0xff]
      %v1971 = vld [vmem:[%s1943 + $0xae] sm:$0xff]
      %v1972 = vld [vmem:[%s1943 + $0xc6] sm:$0xff]
      %v1973 = vld [vmem:[%s1943 + $0xce] sm:$0xff]
      %v1974 = vld [vmem:[%s1943 + $0xe6] sm:$0xff]
      %v1975 = vld [vmem:[%s1943 + $0xee] sm:$0xff]
      %v1976 = vld [vmem:[%s1943 + $0x12] sm:$0xff]
      %v1977 = vld [vmem:[%s1943 + $0x32] sm:$0xff]
      %v1978 = vld [vmem:[%s1943 + $0x52] sm:$0xff]
      %v1979 = vld [vmem:[%s1943 + $0x72] sm:$0xff]
      %v1980 = vld [vmem:[%s1943 + $0x92] sm:$0xff]
      %v1981 = vld [vmem:[%s1943 + $0xb2] sm:$0xff]
      %v1982 = vld [vmem:[%s1943 + $0xd2] sm:$0xff]
      %v1983 = vld [vmem:[%s1943 + $0xf2] sm:$0xff]
      %v1984 = vld [vmem:[%s292 + $0x2] sm:$0xff]
      %v1985 = vld [vmem:[%s292 + $0xa] sm:$0xff]
      %v1986 = vld [vmem:[%s292 + $0x22] sm:$0xff]
      %v1987 = vld [vmem:[%s292 + $0x2a] sm:$0xff]
      %v1988 = vld [vmem:[%s292 + $0x42] sm:$0xff]
      %v1989 = vld [vmem:[%s292 + $0x4a] sm:$0xff]
      %v1990 = vld [vmem:[%s292 + $0x62] sm:$0xff]
      %v1991 = vld [vmem:[%s292 + $0x6a] sm:$0xff]
      %v1992 = vld [vmem:[%s292 + $0x82] sm:$0xff]
      %v1993 = vld [vmem:[%s292 + $0x8a] sm:$0xff]
      %v1994 = vld [vmem:[%s292 + $0xa2] sm:$0xff]
      %v1995 = vld [vmem:[%s292 + $0xaa] sm:$0xff]
      %v1996 = vld [vmem:[%s292 + $0xc2] sm:$0xff]
      %v1997 = vld [vmem:[%s292 + $0xca] sm:$0xff]
      %v1998 = vld [vmem:[%s292 + $0xe2] sm:$0xff]
      %v1999 = vld [vmem:[%s292 + $0xea] sm:$0xff]
      %v2000 = vld [vmem:[%s292 + $0x12] sm:$0xff]
      %v2001 = vld [vmem:[%s292 + $0x32] sm:$0xff]
      %v2002 = vld [vmem:[%s292 + $0x52] sm:$0xff]
      %v2003 = vld [vmem:[%s292 + $0x72] sm:$0xff]
      %v2004 = vld [vmem:[%s292 + $0x92] sm:$0xff]
      %v2005 = vld [vmem:[%s292 + $0xb2] sm:$0xff]
      %v2006 = vld [vmem:[%s292 + $0xd2] sm:$0xff]
      %v2007 = vld [vmem:[%s292 + $0xf2] sm:$0xff]
      %s2008 = sadd.s32 %s289, 10
      %s2009 = smul.u32 %s2008, 32
      %s2010 = scalar_lea.vmem %s275, %s2009
      %v2011 = vld [vmem:[%s2010 + $0x2] sm:$0xff]
      %v2012 = vld [vmem:[%s2010 + $0xa] sm:$0xff]
      %v2013 = vld [vmem:[%s2010 + $0x22] sm:$0xff]
      %v2014 = vld [vmem:[%s2010 + $0x2a] sm:$0xff]
      %v2015 = vld [vmem:[%s2010 + $0x42] sm:$0xff]
      %v2016 = vld [vmem:[%s2010 + $0x4a] sm:$0xff]
      %v2017 = vld [vmem:[%s2010 + $0x62] sm:$0xff]
      %v2018 = vld [vmem:[%s2010 + $0x6a] sm:$0xff]
      %v2019 = vld [vmem:[%s2010 + $0x82] sm:$0xff]
      %v2020 = vld [vmem:[%s2010 + $0x8a] sm:$0xff]
      %v2021 = vld [vmem:[%s2010 + $0xa2] sm:$0xff]
      %v2022 = vld [vmem:[%s2010 + $0xaa] sm:$0xff]
      %v2023 = vld [vmem:[%s2010 + $0xc2] sm:$0xff]
      %v2024 = vld [vmem:[%s2010 + $0xca] sm:$0xff]
      %v2025 = vld [vmem:[%s2010 + $0xe2] sm:$0xff]
      %v2026 = vld [vmem:[%s2010 + $0xea] sm:$0xff]
      %v2027 = vld [vmem:[%s2010 + $0x6] sm:$0xff]
      %v2028 = vld [vmem:[%s2010 + $0xe] sm:$0xff]
      %v2029 = vld [vmem:[%s2010 + $0x26] sm:$0xff]
      %v2030 = vld [vmem:[%s2010 + $0x2e] sm:$0xff]
      %v2031 = vld [vmem:[%s2010 + $0x46] sm:$0xff]
      %v2032 = vld [vmem:[%s2010 + $0x4e] sm:$0xff]
      %v2033 = vld [vmem:[%s2010 + $0x66] sm:$0xff]
      %v2034 = vld [vmem:[%s2010 + $0x6e] sm:$0xff]
      %v2035 = vld [vmem:[%s2010 + $0x86] sm:$0xff]
      %v2036 = vld [vmem:[%s2010 + $0x8e] sm:$0xff]
      %v2037 = vld [vmem:[%s2010 + $0xa6] sm:$0xff]
      %v2038 = vld [vmem:[%s2010 + $0xae] sm:$0xff]
      %v2039 = vld [vmem:[%s2010 + $0xc6] sm:$0xff]
      %v2040 = vld [vmem:[%s2010 + $0xce] sm:$0xff]
      %v2041 = vld [vmem:[%s2010 + $0xe6] sm:$0xff]
      %v2042 = vld [vmem:[%s2010 + $0xee] sm:$0xff]
      %v2043 = vld [vmem:[%s2010 + $0x12] sm:$0xff]
      %v2044 = vld [vmem:[%s2010 + $0x32] sm:$0xff]
      %v2045 = vld [vmem:[%s2010 + $0x52] sm:$0xff]
      %v2046 = vld [vmem:[%s2010 + $0x72] sm:$0xff]
      %v2047 = vld [vmem:[%s2010 + $0x92] sm:$0xff]
      %v2048 = vld [vmem:[%s2010 + $0xb2] sm:$0xff]
      %v2049 = vld [vmem:[%s2010 + $0xd2] sm:$0xff]
      %v2050 = vld [vmem:[%s2010 + $0xf2] sm:$0xff]
      %2067 = vrot.lane.b32.xlu0 %v1960, 32
      %v2068 = vpop.permute.xlu0 %2067
      %2069 = vrot.lane.b32.xlu0 %v1961, 32
      %v2070 = vpop.permute.xlu0 %2069
      %2071 = vrot.lane.b32.xlu0 %v1962, 32
      %v2072 = vpop.permute.xlu0 %2071
      %2073 = vrot.lane.b32.xlu0 %v1963, 32
      %v2074 = vpop.permute.xlu0 %2073
      %2075 = vrot.lane.b32.xlu0 %v1964, 32
      %v2076 = vpop.permute.xlu0 %2075
      %2077 = vrot.lane.b32.xlu0 %v1965, 32
      %v2078 = vpop.permute.xlu0 %2077
      %2079 = vrot.lane.b32.xlu0 %v1966, 32
      %v2080 = vpop.permute.xlu0 %2079
      %2081 = vrot.lane.b32.xlu0 %v1967, 32
      %v2082 = vpop.permute.xlu0 %2081
      %2083 = vrot.lane.b32.xlu0 %v1968, 32
      %v2084 = vpop.permute.xlu0 %2083
      %2085 = vrot.lane.b32.xlu0 %v1969, 32
      %v2086 = vpop.permute.xlu0 %2085
      %2087 = vrot.lane.b32.xlu0 %v1970, 32
      %v2088 = vpop.permute.xlu0 %2087
      %2089 = vrot.lane.b32.xlu0 %v1971, 32
      %v2090 = vpop.permute.xlu0 %2089
      %2091 = vrot.lane.b32.xlu0 %v1972, 32
      %v2092 = vpop.permute.xlu0 %2091
      %2093 = vrot.lane.b32.xlu0 %v1973, 32
      %v2094 = vpop.permute.xlu0 %2093
      %2095 = vrot.lane.b32.xlu0 %v1974, 32
      %v2096 = vpop.permute.xlu0 %2095
      %2097 = vrot.lane.b32.xlu0 %v1975, 32
      %v2098 = vpop.permute.xlu0 %2097
      %2131 = vrot.lane.b32.xlu0 %v1945, 64
      %v2132 = vpop.permute.xlu0 %2131
      %2133 = vrot.lane.b32.xlu0 %v1976, 64
      %v2134 = vpop.permute.xlu0 %2133
      %2135 = vrot.lane.b32.xlu0 %v1947, 64
      %v2136 = vpop.permute.xlu0 %2135
      %2137 = vrot.lane.b32.xlu0 %v1977, 64
      %v2138 = vpop.permute.xlu0 %2137
      %2139 = vrot.lane.b32.xlu0 %v1949, 64
      %v2140 = vpop.permute.xlu0 %2139
      %2141 = vrot.lane.b32.xlu0 %v1978, 64
      %v2142 = vpop.permute.xlu0 %2141
      %2143 = vrot.lane.b32.xlu0 %v1951, 64
      %v2144 = vpop.permute.xlu0 %2143
      %2145 = vrot.lane.b32.xlu0 %v1979, 64
      %v2146 = vpop.permute.xlu0 %2145
      %2147 = vrot.lane.b32.xlu0 %v1953, 64
      %v2148 = vpop.permute.xlu0 %2147
      %2149 = vrot.lane.b32.xlu0 %v1980, 64
      %v2150 = vpop.permute.xlu0 %2149
      %2151 = vrot.lane.b32.xlu0 %v1955, 64
      %v2152 = vpop.permute.xlu0 %2151
      %2153 = vrot.lane.b32.xlu0 %v1981, 64
      %v2154 = vpop.permute.xlu0 %2153
      %2155 = vrot.lane.b32.xlu0 %v1957, 64
      %v2156 = vpop.permute.xlu0 %2155
      %2157 = vrot.lane.b32.xlu0 %v1982, 64
      %v2158 = vpop.permute.xlu0 %2157
      %2159 = vrot.lane.b32.xlu0 %v1959, 64
      %v2160 = vpop.permute.xlu0 %2159
      %2161 = vrot.lane.b32.xlu0 %v1983, 64
      %v2162 = vpop.permute.xlu0 %2161
      %2195 = vrot.lane.b32.xlu0 %v1984, 96
      %v2196 = vpop.permute.xlu0 %2195
      %2197 = vrot.lane.b32.xlu0 %v1985, 96
      %v2198 = vpop.permute.xlu0 %2197
      %2199 = vrot.lane.b32.xlu0 %v1986, 96
      %v2200 = vpop.permute.xlu0 %2199
      %2201 = vrot.lane.b32.xlu0 %v1987, 96
      %v2202 = vpop.permute.xlu0 %2201
      %2203 = vrot.lane.b32.xlu0 %v1988, 96
      %v2204 = vpop.permute.xlu0 %2203
      %2205 = vrot.lane.b32.xlu0 %v1989, 96
      %v2206 = vpop.permute.xlu0 %2205
      %2207 = vrot.lane.b32.xlu0 %v1990, 96
      %v2208 = vpop.permute.xlu0 %2207
      %2209 = vrot.lane.b32.xlu0 %v1991, 96
      %v2210 = vpop.permute.xlu0 %2209
      %2211 = vrot.lane.b32.xlu0 %v1992, 96
      %v2212 = vpop.permute.xlu0 %2211
      %2213 = vrot.lane.b32.xlu0 %v1993, 96
      %v2214 = vpop.permute.xlu0 %2213
      %2215 = vrot.lane.b32.xlu0 %v1994, 96
      %v2216 = vpop.permute.xlu0 %2215
      %2217 = vrot.lane.b32.xlu0 %v1995, 96
      %v2218 = vpop.permute.xlu0 %2217
      %2219 = vrot.lane.b32.xlu0 %v1996, 96
      %v2220 = vpop.permute.xlu0 %2219
      %2221 = vrot.lane.b32.xlu0 %v1997, 96
      %v2222 = vpop.permute.xlu0 %2221
      %2223 = vrot.lane.b32.xlu0 %v1998, 96
      %v2224 = vpop.permute.xlu0 %2223
      %2225 = vrot.lane.b32.xlu0 %v1999, 96
      %v2226 = vpop.permute.xlu0 %2225
      %2251 = vrot.lane.b32.xlu0 %v1985, 32
      %v2252 = vpop.permute.xlu0 %2251
      %2253 = vrot.lane.b32.xlu0 %v2000, 32
      %v2254 = vpop.permute.xlu0 %2253
      %2255 = vrot.lane.b32.xlu0 %v1987, 32
      %v2256 = vpop.permute.xlu0 %2255
      %2257 = vrot.lane.b32.xlu0 %v2001, 32
      %v2258 = vpop.permute.xlu0 %2257
      %2259 = vrot.lane.b32.xlu0 %v1989, 32
      %v2260 = vpop.permute.xlu0 %2259
      %2261 = vrot.lane.b32.xlu0 %v2002, 32
      %v2262 = vpop.permute.xlu0 %2261
      %2263 = vrot.lane.b32.xlu0 %v1991, 32
      %v2264 = vpop.permute.xlu0 %2263
      %2265 = vrot.lane.b32.xlu0 %v2003, 32
      %v2266 = vpop.permute.xlu0 %2265
      %2267 = vrot.lane.b32.xlu0 %v1993, 32
      %v2268 = vpop.permute.xlu0 %2267
      %2269 = vrot.lane.b32.xlu0 %v2004, 32
      %v2270 = vpop.permute.xlu0 %2269
      %2271 = vrot.lane.b32.xlu0 %v1995, 32
      %v2272 = vpop.permute.xlu0 %2271
      %2273 = vrot.lane.b32.xlu0 %v2005, 32
      %v2274 = vpop.permute.xlu0 %2273
      %2275 = vrot.lane.b32.xlu0 %v1997, 32
      %v2276 = vpop.permute.xlu0 %2275
      %2277 = vrot.lane.b32.xlu0 %v2006, 32
      %v2278 = vpop.permute.xlu0 %2277
      %2279 = vrot.lane.b32.xlu0 %v1999, 32
      %v2280 = vpop.permute.xlu0 %2279
      %2281 = vrot.lane.b32.xlu0 %v2007, 32
      %v2282 = vpop.permute.xlu0 %2281
      %2315 = vrot.lane.b32.xlu0 %v2011, 64
      %v2316 = vpop.permute.xlu0 %2315
      %2317 = vrot.lane.b32.xlu0 %v2012, 64
      %v2318 = vpop.permute.xlu0 %2317
      %2319 = vrot.lane.b32.xlu0 %v2013, 64
      %v2320 = vpop.permute.xlu0 %2319
      %2321 = vrot.lane.b32.xlu0 %v2014, 64
      %v2322 = vpop.permute.xlu0 %2321
      %2323 = vrot.lane.b32.xlu0 %v2015, 64
      %v2324 = vpop.permute.xlu0 %2323
      %2325 = vrot.lane.b32.xlu0 %v2016, 64
      %v2326 = vpop.permute.xlu0 %2325
      %2327 = vrot.lane.b32.xlu0 %v2017, 64
      %v2328 = vpop.permute.xlu0 %2327
      %2329 = vrot.lane.b32.xlu0 %v2018, 64
      %v2330 = vpop.permute.xlu0 %2329
      %2331 = vrot.lane.b32.xlu0 %v2019, 64
      %v2332 = vpop.permute.xlu0 %2331
      %2333 = vrot.lane.b32.xlu0 %v2020, 64
      %v2334 = vpop.permute.xlu0 %2333
      %2335 = vrot.lane.b32.xlu0 %v2021, 64
      %v2336 = vpop.permute.xlu0 %2335
      %2337 = vrot.lane.b32.xlu0 %v2022, 64
      %v2338 = vpop.permute.xlu0 %2337
      %2339 = vrot.lane.b32.xlu0 %v2023, 64
      %v2340 = vpop.permute.xlu0 %2339
      %2341 = vrot.lane.b32.xlu0 %v2024, 64
      %v2342 = vpop.permute.xlu0 %2341
      %2343 = vrot.lane.b32.xlu0 %v2025, 64
      %v2344 = vpop.permute.xlu0 %2343
      %2345 = vrot.lane.b32.xlu0 %v2026, 64
      %v2346 = vpop.permute.xlu0 %2345
      %2379 = vrot.lane.b32.xlu0 %v2027, 96
      %v2380 = vpop.permute.xlu0 %2379
      %2381 = vrot.lane.b32.xlu0 %v2028, 96
      %v2382 = vpop.permute.xlu0 %2381
      %2383 = vrot.lane.b32.xlu0 %v2029, 96
      %v2384 = vpop.permute.xlu0 %2383
      %2385 = vrot.lane.b32.xlu0 %v2030, 96
      %v2386 = vpop.permute.xlu0 %2385
      %2387 = vrot.lane.b32.xlu0 %v2031, 96
      %v2388 = vpop.permute.xlu0 %2387
      %2389 = vrot.lane.b32.xlu0 %v2032, 96
      %v2390 = vpop.permute.xlu0 %2389
      %2391 = vrot.lane.b32.xlu0 %v2033, 96
      %v2392 = vpop.permute.xlu0 %2391
      %2393 = vrot.lane.b32.xlu0 %v2034, 96
      %v2394 = vpop.permute.xlu0 %2393
      %2395 = vrot.lane.b32.xlu0 %v2035, 96
      %v2396 = vpop.permute.xlu0 %2395
      %2397 = vrot.lane.b32.xlu0 %v2036, 96
      %v2398 = vpop.permute.xlu0 %2397
      %2399 = vrot.lane.b32.xlu0 %v2037, 96
      %v2400 = vpop.permute.xlu0 %2399
      %2401 = vrot.lane.b32.xlu0 %v2038, 96
      %v2402 = vpop.permute.xlu0 %2401
      %2403 = vrot.lane.b32.xlu0 %v2039, 96
      %v2404 = vpop.permute.xlu0 %2403
      %2405 = vrot.lane.b32.xlu0 %v2040, 96
      %v2406 = vpop.permute.xlu0 %2405
      %2407 = vrot.lane.b32.xlu0 %v2041, 96
      %v2408 = vpop.permute.xlu0 %2407
      %2409 = vrot.lane.b32.xlu0 %v2042, 96
      %v2410 = vpop.permute.xlu0 %2409
      %v2427 = vsel %vm321, %v1944, %v2068
      %v2428 = vsel %vm321, %v1945, %v2070
      %v2429 = vsel %vm321, %v1946, %v2072
      %v2430 = vsel %vm321, %v1947, %v2074
      %v2431 = vsel %vm321, %v1948, %v2076
      %v2432 = vsel %vm321, %v1949, %v2078
      %v2433 = vsel %vm321, %v1950, %v2080
      %v2434 = vsel %vm321, %v1951, %v2082
      %v2435 = vsel %vm321, %v1952, %v2084
      %v2436 = vsel %vm321, %v1953, %v2086
      %v2437 = vsel %vm321, %v1954, %v2088
      %v2438 = vsel %vm321, %v1955, %v2090
      %v2439 = vsel %vm321, %v1956, %v2092
      %v2440 = vsel %vm321, %v1957, %v2094
      %v2441 = vsel %vm321, %v1958, %v2096
      %v2442 = vsel %vm321, %v1959, %v2098
      %v2443 = vsel %vm1065, %v2427, %v2132
      %v2444 = vsel %vm1065, %v2428, %v2134
      %v2445 = vsel %vm1065, %v2429, %v2136
      %v2446 = vsel %vm1065, %v2430, %v2138
      %v2447 = vsel %vm1065, %v2431, %v2140
      %v2448 = vsel %vm1065, %v2432, %v2142
      %v2449 = vsel %vm1065, %v2433, %v2144
      %v2450 = vsel %vm1065, %v2434, %v2146
      %v2451 = vsel %vm1065, %v2435, %v2148
      %v2452 = vsel %vm1065, %v2436, %v2150
      %v2453 = vsel %vm1065, %v2437, %v2152
      %v2454 = vsel %vm1065, %v2438, %v2154
      %v2455 = vsel %vm1065, %v2439, %v2156
      %v2456 = vsel %vm1065, %v2440, %v2158
      %v2457 = vsel %vm1065, %v2441, %v2160
      %v2458 = vsel %vm1065, %v2442, %v2162
      %v2459 = vsel %vm1082, %v2443, %v2196
      %v2460 = vsel %vm1082, %v2444, %v2198
      %v2461 = vsel %vm1082, %v2445, %v2200
      %v2462 = vsel %vm1082, %v2446, %v2202
      %v2463 = vsel %vm1082, %v2447, %v2204
      %v2464 = vsel %vm1082, %v2448, %v2206
      %v2465 = vsel %vm1082, %v2449, %v2208
      %v2466 = vsel %vm1082, %v2450, %v2210
      %v2467 = vsel %vm1082, %v2451, %v2212
      %v2468 = vsel %vm1082, %v2452, %v2214
      %v2469 = vsel %vm1082, %v2453, %v2216
      %v2470 = vsel %vm1082, %v2454, %v2218
      %v2471 = vsel %vm1082, %v2455, %v2220
      %v2472 = vsel %vm1082, %v2456, %v2222
      %v2473 = vsel %vm1082, %v2457, %v2224
      %v2474 = vsel %vm1082, %v2458, %v2226
      %v2475 = vsel %vm321, %v293, %v2252
      %v2476 = vsel %vm321, %v294, %v2254
      %v2477 = vsel %vm321, %v295, %v2256
      %v2478 = vsel %vm321, %v296, %v2258
      %v2479 = vsel %vm321, %v297, %v2260
      %v2480 = vsel %vm321, %v298, %v2262
      %v2481 = vsel %vm321, %v299, %v2264
      %v2482 = vsel %vm321, %v300, %v2266
      %v2483 = vsel %vm321, %v301, %v2268
      %v2484 = vsel %vm321, %v302, %v2270
      %v2485 = vsel %vm321, %v303, %v2272
      %v2486 = vsel %vm321, %v304, %v2274
      %v2487 = vsel %vm321, %v305, %v2276
      %v2488 = vsel %vm321, %v306, %v2278
      %v2489 = vsel %vm321, %v307, %v2280
      %v2490 = vsel %vm321, %v308, %v2282
      %v2491 = vsel %vm1065, %v2475, %v2316
      %v2492 = vsel %vm1065, %v2476, %v2318
      %v2493 = vsel %vm1065, %v2477, %v2320
      %v2494 = vsel %vm1065, %v2478, %v2322
      %v2495 = vsel %vm1065, %v2479, %v2324
      %v2496 = vsel %vm1065, %v2480, %v2326
      %v2497 = vsel %vm1065, %v2481, %v2328
      %v2498 = vsel %vm1065, %v2482, %v2330
      %v2499 = vsel %vm1065, %v2483, %v2332
      %v2500 = vsel %vm1065, %v2484, %v2334
      %v2501 = vsel %vm1065, %v2485, %v2336
      %v2502 = vsel %vm1065, %v2486, %v2338
      %v2503 = vsel %vm1065, %v2487, %v2340
      %v2504 = vsel %vm1065, %v2488, %v2342
      %v2505 = vsel %vm1065, %v2489, %v2344
      %v2506 = vsel %vm1065, %v2490, %v2346
      %v2507 = vsel %vm1082, %v2491, %v2380
      %v2508 = vsel %vm1082, %v2492, %v2382
      %v2509 = vsel %vm1082, %v2493, %v2384
      %v2510 = vsel %vm1082, %v2494, %v2386
      %v2511 = vsel %vm1082, %v2495, %v2388
      %v2512 = vsel %vm1082, %v2496, %v2390
      %v2513 = vsel %vm1082, %v2497, %v2392
      %v2514 = vsel %vm1082, %v2498, %v2394
      %v2515 = vsel %vm1082, %v2499, %v2396
      %v2516 = vsel %vm1082, %v2500, %v2398
      %v2517 = vsel %vm1082, %v2501, %v2400
      %v2518 = vsel %vm1082, %v2502, %v2402
      %v2519 = vsel %vm1082, %v2503, %v2404
      %v2520 = vsel %vm1082, %v2504, %v2406
      %v2521 = vsel %vm1082, %v2505, %v2408
      %v2522 = vsel %vm1082, %v2506, %v2410
      %s2523 = scalar_lea.vmem %s2, 288
      %v2524 = vld [vmem:[%s2523] sm:$0xff]
      %v2525 = vld [vmem:[%s2523 + $0x8] sm:$0xff]
      %v2526 = vld [vmem:[%s2523 + $0x10] sm:$0xff]
      %v2527 = vld [vmem:[%s2523 + $0x18] sm:$0xff]
      %v2528 = vld [vmem:[%s2523 + $0x20] sm:$0xff]
      %v2529 = vld [vmem:[%s2523 + $0x28] sm:$0xff]
      %v2530 = vld [vmem:[%s2523 + $0x30] sm:$0xff]
      %v2531 = vld [vmem:[%s2523 + $0x38] sm:$0xff]
      %v2532 = vld [vmem:[%s2523 + $0x40] sm:$0xff]
      %v2533 = vld [vmem:[%s2523 + $0x48] sm:$0xff]
      %v2534 = vld [vmem:[%s2523 + $0x50] sm:$0xff]
      %v2535 = vld [vmem:[%s2523 + $0x58] sm:$0xff]
      %v2536 = vld [vmem:[%s2523 + $0x60] sm:$0xff]
      %v2537 = vld [vmem:[%s2523 + $0x68] sm:$0xff]
      %v2538 = vld [vmem:[%s2523 + $0x70] sm:$0xff]
      %v2539 = vld [vmem:[%s2523 + $0x78] sm:$0xff]
      %v2540 = vld [vmem:[%s2523 + $0x80] sm:$0xff]
      %v2541 = vld [vmem:[%s2523 + $0x88] sm:$0xff]
      %v2542 = vld [vmem:[%s2523 + $0x90] sm:$0xff]
      %v2543 = vld [vmem:[%s2523 + $0x98] sm:$0xff]
      %v2544 = vld [vmem:[%s2523 + $0xa0] sm:$0xff]
      %v2545 = vld [vmem:[%s2523 + $0xa8] sm:$0xff]
      %v2546 = vld [vmem:[%s2523 + $0xb0] sm:$0xff]
      %v2547 = vld [vmem:[%s2523 + $0xb8] sm:$0xff]
      %v2548 = vld [vmem:[%s2523 + $0xc0] sm:$0xff]
      %v2549 = vld [vmem:[%s2523 + $0xc8] sm:$0xff]
      %v2550 = vld [vmem:[%s2523 + $0xd0] sm:$0xff]
      %v2551 = vld [vmem:[%s2523 + $0xd8] sm:$0xff]
      %v2552 = vld [vmem:[%s2523 + $0xe0] sm:$0xff]
      %v2553 = vld [vmem:[%s2523 + $0xe8] sm:$0xff]
      %v2554 = vld [vmem:[%s2523 + $0xf0] sm:$0xff]
      %v2555 = vld [vmem:[%s2523 + $0xf8] sm:$0xff]
      %v2556 = vld [vmem:[%s2523 + $0x100] sm:$0xff]
      %v2557 = vld [vmem:[%s2523 + $0x108] sm:$0xff]
      %v2558 = vld [vmem:[%s2523 + $0x110] sm:$0xff]
      %v2559 = vld [vmem:[%s2523 + $0x118] sm:$0xff]
      %s2560 = scalar_lea.vmem %s3, 2
      %v2561 = vld [vmem:[%s2560] sm:$0x1]
      %s2562 = scalar_lea.vmem %s4, 8
      %v2563 = vld [vmem:[%s2562] sm:$0xf]
      %v2565 = vlaneseq
      %v2566 = vshrl.u32 %v2565, 7
      %v2567 = vsub.s32 0, %v2566
      %v2568 = vrot.slane %v2561, %v2567
      %v2570 = vsel %vm321, %v2012, 0
      %v2573 = vsel %vm321, %v2043, 0
      %v2575 = vsel %vm321, %v2014, 0
      %v2578 = vsel %vm321, %v2044, 0
      %v2580 = vsel %vm321, %v2016, 0
      %v2583 = vsel %vm321, %v2045, 0
      %v2585 = vsel %vm321, %v2018, 0
      %v2588 = vsel %vm321, %v2046, 0
      %v2590 = vsel %vm321, %v2020, 0
      %v2593 = vsel %vm321, %v2047, 0
      %v2595 = vsel %vm321, %v2022, 0
      %v2598 = vsel %vm321, %v2048, 0
      %v2600 = vsel %vm321, %v2024, 0
      %v2603 = vsel %vm321, %v2049, 0
      %v2605 = vsel %vm321, %v2026, 0
      %v2608 = vsel %vm321, %v2050, 0
      %2610 = vmatprep.subr.mxu0 0.0
      %2611 = vmatpush1.msra.mxu0 %v2539
      %2612 = vmatprep.subr.mxu0 0.0
      %2613 = vmatpush1.msra.mxu0 %v2538
      %2614 = vmatprep.subr.mxu0 0.0
      %2615 = vmatpush1.msra.mxu0 %v2537
      %2616 = vmatprep.subr.mxu0 0.0
      %2617 = vmatpush1.msra.mxu0 %v2536
      %2618 = vmatprep.subr.mxu0 0.0
      %2619 = vmatpush1.msra.mxu0 %v2535
      %2620 = vmatprep.subr.mxu0 0.0
      %2621 = vmatpush1.msra.mxu0 %v2534
      %2622 = vmatprep.subr.mxu0 0.0
      %2623 = vmatpush1.msra.mxu0 %v2533
      %2624 = vmatprep.subr.mxu0 0.0
      %2625 = vmatpush1.msra.mxu0 %v2532
      %2626 = vmatprep.subr.mxu0 0.0
      %2627 = vmatpush1.msra.mxu0 %v2531
      %2628 = vmatprep.subr.mxu0 0.0
      %2629 = vmatpush1.msra.mxu0 %v2530
      %2630 = vmatprep.subr.mxu0 0.0
      %2631 = vmatpush1.msra.mxu0 %v2529
      %2632 = vmatprep.subr.mxu0 0.0
      %2633 = vmatpush1.msra.mxu0 %v2528
      %2634 = vmatprep.subr.mxu0 0.0
      %2635 = vmatpush1.msra.mxu0 %v2527
      %2636 = vmatprep.subr.mxu0 0.0
      %2637 = vmatpush1.msra.mxu0 %v2526
      %2638 = vmatprep.subr.mxu0 0.0
      %2639 = vmatpush1.msra.mxu0 %v2525
      %2640 = vmatprep.subr.mxu0 0.0
      %2641 = vmatpush1.msra.mxu0 %v2524
      %2642 = vmatprep.subr.mxu0 0.0
      %2643 = vmatpush2.msra.mxu0 %v2555
      %2644 = vmatprep.subr.mxu0 0.0
      %2645 = vmatpush2.msra.mxu0 %v2554
      %2646 = vmatprep.subr.mxu0 0.0
      %2647 = vmatpush2.msra.mxu0 %v2553
      %2648 = vmatprep.subr.mxu0 0.0
      %2649 = vmatpush2.msra.mxu0 %v2552
      %2650 = vmatprep.subr.mxu0 0.0
      %2651 = vmatpush2.msra.mxu0 %v2551
      %2652 = vmatprep.subr.mxu0 0.0
      %2653 = vmatpush2.msra.mxu0 %v2550
      %2654 = vmatprep.subr.mxu0 0.0
      %2655 = vmatpush2.msra.mxu0 %v2549
      %2656 = vmatprep.subr.mxu0 0.0
      %2657 = vmatpush2.msra.mxu0 %v2548
      %2658 = vmatprep.subr.mxu0 0.0
      %2659 = vmatpush2.msra.mxu0 %v2547
      %2660 = vmatprep.subr.mxu0 0.0
      %2661 = vmatpush2.msra.mxu0 %v2546
      %2662 = vmatprep.subr.mxu0 0.0
      %2663 = vmatpush2.msra.mxu0 %v2545
      %2664 = vmatprep.subr.mxu0 0.0
      %2665 = vmatpush2.msra.mxu0 %v2544
      %2666 = vmatprep.subr.mxu0 0.0
      %2667 = vmatpush2.msra.mxu0 %v2543
      %2668 = vmatprep.subr.mxu0 0.0
      %2669 = vmatpush2.msra.mxu0 %v2542
      %2670 = vmatprep.subr.mxu0 0.0
      %2671 = vmatpush2.msra.mxu0 %v2541
      %2672 = vmatprep.subr.mxu0 0.0
      %2673 = vmatpush2.msra.mxu0 %v2540
      %2674 = vmatprep.mubr.f32.mxu0 %v2507
      %2675 = vmatmul.mubr.f32.gmra.mxu0 %v2459
      %v2676 = vpop.f32.mrf.mxu0
      %v2677 = vadd.f32 %v2568, %v2676
      %v2678 = vpop.f32.mrf.mxu0
      %2679 = vmatprep.mubr.f32.mxu0 %v2508
      %2680 = vmatmul.mubr.f32.gmra.mxu0 %v2460
      %v2681 = vpop.f32.mrf.mxu0
      %v2682 = vadd.f32 %v2568, %v2681
      %v2683 = vpop.f32.mrf.mxu0
      %2684 = vmatprep.mubr.f32.mxu0 %v2509
      %2685 = vmatmul.mubr.f32.gmra.mxu0 %v2461
      %v2686 = vpop.f32.mrf.mxu0
      %v2687 = vadd.f32 %v2568, %v2686
      %v2688 = vpop.f32.mrf.mxu0
      %2689 = vmatprep.mubr.f32.mxu0 %v2510
      %2690 = vmatmul.mubr.f32.gmra.mxu0 %v2462
      %v2691 = vpop.f32.mrf.mxu0
      %v2692 = vadd.f32 %v2568, %v2691
      %v2693 = vpop.f32.mrf.mxu0
      %2694 = vmatprep.mubr.f32.mxu0 %v2511
      %2695 = vmatmul.mubr.f32.gmra.mxu0 %v2463
      %v2696 = vpop.f32.mrf.mxu0
      %v2697 = vadd.f32 %v2568, %v2696
      %v2698 = vpop.f32.mrf.mxu0
      %2699 = vmatprep.mubr.f32.mxu0 %v2512
      %2700 = vmatmul.mubr.f32.gmra.mxu0 %v2464
      %v2701 = vpop.f32.mrf.mxu0
      %v2702 = vadd.f32 %v2568, %v2701
      %v2703 = vpop.f32.mrf.mxu0
      %2704 = vmatprep.mubr.f32.mxu0 %v2513
      %2705 = vmatmul.mubr.f32.gmra.mxu0 %v2465
      %v2706 = vpop.f32.mrf.mxu0
      %v2707 = vadd.f32 %v2568, %v2706
      %v2708 = vpop.f32.mrf.mxu0
      %2709 = vmatprep.mubr.f32.mxu0 %v2514
      %2710 = vmatmul.mubr.f32.gmra.mxu0 %v2466
      %v2711 = vpop.f32.mrf.mxu0
      %v2712 = vadd.f32 %v2568, %v2711
      %v2713 = vpop.f32.mrf.mxu0
      %2714 = vmatprep.mubr.f32.mxu0 %v2515
      %2715 = vmatmul.mubr.f32.gmra.mxu0 %v2467
      %v2716 = vpop.f32.mrf.mxu0
      %v2717 = vadd.f32 %v2568, %v2716
      %v2718 = vpop.f32.mrf.mxu0
      %2719 = vmatprep.mubr.f32.mxu0 %v2516
      %2720 = vmatmul.mubr.f32.gmra.mxu0 %v2468
      %v2721 = vpop.f32.mrf.mxu0
      %v2722 = vadd.f32 %v2568, %v2721
      %v2723 = vpop.f32.mrf.mxu0
      %2724 = vmatprep.mubr.f32.mxu0 %v2517
      %2725 = vmatmul.mubr.f32.gmra.mxu0 %v2469
      %v2726 = vpop.f32.mrf.mxu0
      %v2727 = vadd.f32 %v2568, %v2726
      %v2728 = vpop.f32.mrf.mxu0
      %2729 = vmatprep.mubr.f32.mxu0 %v2518
      %2730 = vmatmul.mubr.f32.gmra.mxu0 %v2470
      %v2731 = vpop.f32.mrf.mxu0
      %v2732 = vadd.f32 %v2568, %v2731
      %v2733 = vpop.f32.mrf.mxu0
      %2734 = vmatprep.mubr.f32.mxu0 %v2519
      %2735 = vmatmul.mubr.f32.gmra.mxu0 %v2471
      %v2736 = vpop.f32.mrf.mxu0
      %v2737 = vadd.f32 %v2568, %v2736
      %v2738 = vpop.f32.mrf.mxu0
      %2739 = vmatprep.mubr.f32.mxu0 %v2520
      %2740 = vmatmul.mubr.f32.gmra.mxu0 %v2472
      %v2741 = vpop.f32.mrf.mxu0
      %v2742 = vadd.f32 %v2568, %v2741
      %v2743 = vpop.f32.mrf.mxu0
      %2744 = vmatprep.mubr.f32.mxu0 %v2521
      %2745 = vmatmul.mubr.f32.gmra.mxu0 %v2473
      %v2746 = vpop.f32.mrf.mxu0
      %v2747 = vadd.f32 %v2568, %v2746
      %v2748 = vpop.f32.mrf.mxu0
      %2749 = vmatprep.mubr.f32.mxu0 %v2522
      %2750 = vmatmul.mubr.f32.gmra.mxu0 %v2474
      %v2751 = vpop.f32.mrf.mxu0
      %v2752 = vadd.f32 %v2568, %v2751
      %v2753 = vpop.f32.mrf.mxu0
      %2754 = vdwg.mxu0
      %2755 = vmatprep.subr.mxu0 0.0
      %2756 = vmatpush1.msra.mxu0 0.0
      %2757 = vmatprep.subr.mxu0 0.0
      %2758 = vmatpush1.msra.mxu0 0.0
      %2759 = vmatprep.subr.mxu0 0.0
      %2760 = vmatpush1.msra.mxu0 0.0
      %2761 = vmatprep.subr.mxu0 0.0
      %2762 = vmatpush1.msra.mxu0 0.0
      %2763 = vmatprep.subr.mxu0 0.0
      %2764 = vmatpush1.msra.mxu0 0.0
      %2765 = vmatprep.subr.mxu0 0.0
      %2766 = vmatpush1.msra.mxu0 0.0
      %2767 = vmatprep.subr.mxu0 0.0
      %2768 = vmatpush1.msra.mxu0 0.0
      %2769 = vmatprep.subr.mxu0 0.0
      %2770 = vmatpush1.msra.mxu0 0.0
      %2771 = vmatprep.subr.mxu0 0.0
      %2772 = vmatpush1.msra.mxu0 0.0
      %2773 = vmatprep.subr.mxu0 0.0
      %2774 = vmatpush1.msra.mxu0 0.0
      %2775 = vmatprep.subr.mxu0 0.0
      %2776 = vmatpush1.msra.mxu0 0.0
      %2777 = vmatprep.subr.mxu0 0.0
      %2778 = vmatpush1.msra.mxu0 0.0
      %2779 = vmatprep.subr.mxu0 0.0
      %2780 = vmatpush1.msra.mxu0 %v2559
      %2781 = vmatprep.subr.mxu0 0.0
      %2782 = vmatpush1.msra.mxu0 %v2558
      %2783 = vmatprep.subr.mxu0 0.0
      %2784 = vmatpush1.msra.mxu0 %v2557
      %2785 = vmatprep.subr.mxu0 0.0
      %2786 = vmatpush1.msra.mxu0 %v2556
      %2787 = vmatprep.subr.mxu0 0.0
      %2788 = vmatpush2.msra.mxu0 0.0
      %2789 = vmatprep.subr.mxu0 0.0
      %2790 = vmatpush2.msra.mxu0 0.0
      %2791 = vmatprep.subr.mxu0 0.0
      %2792 = vmatpush2.msra.mxu0 0.0
      %2793 = vmatprep.subr.mxu0 0.0
      %2794 = vmatpush2.msra.mxu0 0.0
      %2795 = vmatprep.subr.mxu0 0.0
      %2796 = vmatpush2.msra.mxu0 0.0
      %2797 = vmatprep.subr.mxu0 0.0
      %2798 = vmatpush2.msra.mxu0 0.0
      %2799 = vmatprep.subr.mxu0 0.0
      %2800 = vmatpush2.msra.mxu0 0.0
      %2801 = vmatprep.subr.mxu0 0.0
      %2802 = vmatpush2.msra.mxu0 0.0
      %2803 = vmatprep.subr.mxu0 0.0
      %2804 = vmatpush2.msra.mxu0 0.0
      %2805 = vmatprep.subr.mxu0 0.0
      %2806 = vmatpush2.msra.mxu0 0.0
      %2807 = vmatprep.subr.mxu0 0.0
      %2808 = vmatpush2.msra.mxu0 0.0
      %2809 = vmatprep.subr.mxu0 0.0
      %2810 = vmatpush2.msra.mxu0 0.0
      %2811 = vmatprep.subr.mxu0 0.0
      %2812 = vmatpush2.msra.mxu0 0.0
      %2813 = vmatprep.subr.mxu0 0.0
      %2814 = vmatpush2.msra.mxu0 0.0
      %2815 = vmatprep.subr.mxu0 0.0
      %2816 = vmatpush2.msra.mxu0 0.0
      %2817 = vmatprep.subr.mxu0 0.0
      %2818 = vmatpush2.msra.mxu0 0.0
      %2819 = vmatprep.mubr.f32.mxu0 0.0
      %2820 = vmatmul.mubr.f32.gmra.mxu0 %v2570
      %v2821 = vpop.f32.mrf.mxu0
      %v2822 = vadd.f32 %v2677, %v2821
      %v2823 = vpop.f32.mrf.mxu0
      %2824 = vmatprep.mubr.f32.mxu0 0.0
      %2825 = vmatmul.mubr.f32.gmra.mxu0 %v2573
      %v2826 = vpop.f32.mrf.mxu0
      %v2827 = vadd.f32 %v2682, %v2826
      %v2828 = vpop.f32.mrf.mxu0
      %2829 = vmatprep.mubr.f32.mxu0 0.0
      %2830 = vmatmul.mubr.f32.gmra.mxu0 %v2575
      %v2831 = vpop.f32.mrf.mxu0
      %v2832 = vadd.f32 %v2687, %v2831
      %v2833 = vpop.f32.mrf.mxu0
      %2834 = vmatprep.mubr.f32.mxu0 0.0
      %2835 = vmatmul.mubr.f32.gmra.mxu0 %v2578
      %v2836 = vpop.f32.mrf.mxu0
      %v2837 = vadd.f32 %v2692, %v2836
      %v2838 = vpop.f32.mrf.mxu0
      %2839 = vmatprep.mubr.f32.mxu0 0.0
      %2840 = vmatmul.mubr.f32.gmra.mxu0 %v2580
      %v2841 = vpop.f32.mrf.mxu0
      %v2842 = vadd.f32 %v2697, %v2841
      %v2843 = vpop.f32.mrf.mxu0
      %2844 = vmatprep.mubr.f32.mxu0 0.0
      %2845 = vmatmul.mubr.f32.gmra.mxu0 %v2583
      %v2846 = vpop.f32.mrf.mxu0
      %v2847 = vadd.f32 %v2702, %v2846
      %v2848 = vpop.f32.mrf.mxu0
      %2849 = vmatprep.mubr.f32.mxu0 0.0
      %2850 = vmatmul.mubr.f32.gmra.mxu0 %v2585
      %v2851 = vpop.f32.mrf.mxu0
      %v2852 = vadd.f32 %v2707, %v2851
      %v2853 = vpop.f32.mrf.mxu0
      %2854 = vmatprep.mubr.f32.mxu0 0.0
      %2855 = vmatmul.mubr.f32.gmra.mxu0 %v2588
      %v2856 = vpop.f32.mrf.mxu0
      %v2857 = vadd.f32 %v2712, %v2856
      %v2858 = vpop.f32.mrf.mxu0
      %2859 = vmatprep.mubr.f32.mxu0 0.0
      %2860 = vmatmul.mubr.f32.gmra.mxu0 %v2590
      %v2861 = vpop.f32.mrf.mxu0
      %v2862 = vadd.f32 %v2717, %v2861
      %v2863 = vpop.f32.mrf.mxu0
      %2864 = vmatprep.mubr.f32.mxu0 0.0
      %2865 = vmatmul.mubr.f32.gmra.mxu0 %v2593
      %v2866 = vpop.f32.mrf.mxu0
      %v2867 = vadd.f32 %v2722, %v2866
      %v2868 = vpop.f32.mrf.mxu0
      %2869 = vmatprep.mubr.f32.mxu0 0.0
      %2870 = vmatmul.mubr.f32.gmra.mxu0 %v2595
      %v2871 = vpop.f32.mrf.mxu0
      %v2872 = vadd.f32 %v2727, %v2871
      %v2873 = vpop.f32.mrf.mxu0
      %2874 = vmatprep.mubr.f32.mxu0 0.0
      %2875 = vmatmul.mubr.f32.gmra.mxu0 %v2598
      %v2876 = vpop.f32.mrf.mxu0
      %v2877 = vadd.f32 %v2732, %v2876
      %v2878 = vpop.f32.mrf.mxu0
      %2879 = vmatprep.mubr.f32.mxu0 0.0
      %2880 = vmatmul.mubr.f32.gmra.mxu0 %v2600
      %v2881 = vpop.f32.mrf.mxu0
      %v2882 = vadd.f32 %v2737, %v2881
      %v2883 = vpop.f32.mrf.mxu0
      %2884 = vmatprep.mubr.f32.mxu0 0.0
      %2885 = vmatmul.mubr.f32.gmra.mxu0 %v2603
      %v2886 = vpop.f32.mrf.mxu0
      %v2887 = vadd.f32 %v2742, %v2886
      %v2888 = vpop.f32.mrf.mxu0
      %2889 = vmatprep.mubr.f32.mxu0 0.0
      %2890 = vmatmul.mubr.f32.gmra.mxu0 %v2605
      %v2891 = vpop.f32.mrf.mxu0
      %v2892 = vadd.f32 %v2747, %v2891
      %v2893 = vpop.f32.mrf.mxu0
      %2894 = vmatprep.mubr.f32.mxu0 0.0
      %2895 = vmatmul.mubr.f32.gmra.mxu0 %v2608
      %v2896 = vpop.f32.mrf.mxu0
      %v2897 = vadd.f32 %v2752, %v2896
      %v2898 = vpop.f32.mrf.mxu0
      %2899 = vdwg.mxu0
      %v2900 = vmax.f32 %v2822, 0.0
      %v2901 = vmax.f32 %v2827, 0.0
      %v2902 = vmax.f32 %v2832, 0.0
      %v2903 = vmax.f32 %v2837, 0.0
      %v2904 = vmax.f32 %v2842, 0.0
      %v2905 = vmax.f32 %v2847, 0.0
      %v2906 = vmax.f32 %v2852, 0.0
      %v2907 = vmax.f32 %v2857, 0.0
      %v2908 = vmax.f32 %v2862, 0.0
      %v2909 = vmax.f32 %v2867, 0.0
      %v2910 = vmax.f32 %v2872, 0.0
      %v2911 = vmax.f32 %v2877, 0.0
      %v2912 = vmax.f32 %v2882, 0.0
      %v2913 = vmax.f32 %v2887, 0.0
      %v2914 = vmax.f32 %v2892, 0.0
      %v2915 = vmax.f32 %v2897, 0.0
      %v2917 = vsel %vm1547, %v2900, 0
      %v2920 = vsel %vm1547, %v2901, 0
      %v2923 = vsel %vm1547, %v2902, 0
      %v2926 = vsel %vm1547, %v2903, 0
      %v2929 = vsel %vm1547, %v2904, 0
      %v2932 = vsel %vm1547, %v2905, 0
      %v2935 = vsel %vm1547, %v2906, 0
      %v2938 = vsel %vm1547, %v2907, 0
      %v2941 = vsel %vm1547, %v2908, 0
      %v2944 = vsel %vm1547, %v2909, 0
      %v2947 = vsel %vm1547, %v2910, 0
      %v2950 = vsel %vm1547, %v2911, 0
      %v2953 = vsel %vm1547, %v2912, 0
      %v2956 = vsel %vm1547, %v2913, 0
      %v2959 = vsel %vm1547, %v2914, 0
      %v2962 = vsel %vm1547, %v2915, 0
      %v2965 = vsel %vm1596, %v2563, 0
      %2967 = vmatprep.subr.mxu0 0.0
      %2968 = vmatpush1.msra.mxu0 0.0
      %2969 = vmatprep.subr.mxu0 0.0
      %2970 = vmatpush1.msra.mxu0 0.0
      %2971 = vmatprep.subr.mxu0 0.0
      %2972 = vmatpush1.msra.mxu0 0.0
      %2973 = vmatprep.subr.mxu0 0.0
      %2974 = vmatpush1.msra.mxu0 0.0
      %2975 = vmatprep.subr.mxu0 0.0
      %2976 = vmatpush1.msra.mxu0 0.0
      %2977 = vmatprep.subr.mxu0 0.0
      %2978 = vmatpush1.msra.mxu0 0.0
      %2979 = vmatprep.subr.mxu0 0.0
      %2980 = vmatpush1.msra.mxu0 0.0
      %2981 = vmatprep.subr.mxu0 0.0
      %2982 = vmatpush1.msra.mxu0 0.0
      %2983 = vmatprep.subr.mxu0 0.0
      %2984 = vmatpush1.msra.mxu0 0.0
      %2985 = vmatprep.subr.mxu0 0.0
      %2986 = vmatpush1.msra.mxu0 0.0
      %2987 = vmatprep.subr.mxu0 0.0
      %2988 = vmatpush1.msra.mxu0 0.0
      %2989 = vmatprep.subr.mxu0 0.0
      %2990 = vmatpush1.msra.mxu0 0.0
      %2991 = vmatprep.subr.mxu0 0.0
      %2992 = vmatpush1.msra.mxu0 0.0
      %2993 = vmatprep.subr.mxu0 0.0
      %2994 = vmatpush1.msra.mxu0 0.0
      %2995 = vmatprep.subr.mxu0 0.0
      %2996 = vmatpush1.msra.mxu0 0.0
      %2997 = vmatprep.subr.mxu0 0.0
      %2998 = vmatpush1.msra.mxu0 %v2965
      %2999 = vmatprep.subr.mxu0 0.0
      %3000 = vmatpush2.msra.mxu0 0.0
      %3001 = vmatprep.subr.mxu0 0.0
      %3002 = vmatpush2.msra.mxu0 0.0
      %3003 = vmatprep.subr.mxu0 0.0
      %3004 = vmatpush2.msra.mxu0 0.0
      %3005 = vmatprep.subr.mxu0 0.0
      %3006 = vmatpush2.msra.mxu0 0.0
      %3007 = vmatprep.subr.mxu0 0.0
      %3008 = vmatpush2.msra.mxu0 0.0
      %3009 = vmatprep.subr.mxu0 0.0
      %3010 = vmatpush2.msra.mxu0 0.0
      %3011 = vmatprep.subr.mxu0 0.0
      %3012 = vmatpush2.msra.mxu0 0.0
      %3013 = vmatprep.subr.mxu0 0.0
      %3014 = vmatpush2.msra.mxu0 0.0
      %3015 = vmatprep.subr.mxu0 0.0
      %3016 = vmatpush2.msra.mxu0 0.0
      %3017 = vmatprep.subr.mxu0 0.0
      %3018 = vmatpush2.msra.mxu0 0.0
      %3019 = vmatprep.subr.mxu0 0.0
      %3020 = vmatpush2.msra.mxu0 0.0
      %3021 = vmatprep.subr.mxu0 0.0
      %3022 = vmatpush2.msra.mxu0 0.0
      %3023 = vmatprep.subr.mxu0 0.0
      %3024 = vmatpush2.msra.mxu0 0.0
      %3025 = vmatprep.subr.mxu0 0.0
      %3026 = vmatpush2.msra.mxu0 0.0
      %3027 = vmatprep.subr.mxu0 0.0
      %3028 = vmatpush2.msra.mxu0 0.0
      %3029 = vmatprep.subr.mxu0 0.0
      %3030 = vmatpush2.msra.mxu0 0.0
      %3031 = vmatprep.mubr.f32.mxu0 0.0
      %3032 = vmatmul.mubr.f32.gmra.mxu0 %v2917
      %v3033 = vpop.f32.mrf.mxu0
      %v3034 = vadd.f32 0.0, %v3033
      %v3035 = vpop.f32.mrf.mxu0
      %3036 = vmatprep.mubr.f32.mxu0 0.0
      %3037 = vmatmul.mubr.f32.gmra.mxu0 %v2920
      %v3038 = vpop.f32.mrf.mxu0
      %v3039 = vadd.f32 0.0, %v3038
      %v3040 = vpop.f32.mrf.mxu0
      %3041 = vmatprep.mubr.f32.mxu0 0.0
      %3042 = vmatmul.mubr.f32.gmra.mxu0 %v2923
      %v3043 = vpop.f32.mrf.mxu0
      %v3044 = vadd.f32 0.0, %v3043
      %v3045 = vpop.f32.mrf.mxu0
      %3046 = vmatprep.mubr.f32.mxu0 0.0
      %3047 = vmatmul.mubr.f32.gmra.mxu0 %v2926
      %v3048 = vpop.f32.mrf.mxu0
      %v3049 = vadd.f32 0.0, %v3048
      %v3050 = vpop.f32.mrf.mxu0
      %3051 = vmatprep.mubr.f32.mxu0 0.0
      %3052 = vmatmul.mubr.f32.gmra.mxu0 %v2929
      %v3053 = vpop.f32.mrf.mxu0
      %v3054 = vadd.f32 0.0, %v3053
      %v3055 = vpop.f32.mrf.mxu0
      %3056 = vmatprep.mubr.f32.mxu0 0.0
      %3057 = vmatmul.mubr.f32.gmra.mxu0 %v2932
      %v3058 = vpop.f32.mrf.mxu0
      %v3059 = vadd.f32 0.0, %v3058
      %v3060 = vpop.f32.mrf.mxu0
      %3061 = vmatprep.mubr.f32.mxu0 0.0
      %3062 = vmatmul.mubr.f32.gmra.mxu0 %v2935
      %v3063 = vpop.f32.mrf.mxu0
      %v3064 = vadd.f32 0.0, %v3063
      %v3065 = vpop.f32.mrf.mxu0
      %3066 = vmatprep.mubr.f32.mxu0 0.0
      %3067 = vmatmul.mubr.f32.gmra.mxu0 %v2938
      %v3068 = vpop.f32.mrf.mxu0
      %v3069 = vadd.f32 0.0, %v3068
      %v3070 = vpop.f32.mrf.mxu0
      %3071 = vmatprep.mubr.f32.mxu0 0.0
      %3072 = vmatmul.mubr.f32.gmra.mxu0 %v2941
      %v3073 = vpop.f32.mrf.mxu0
      %v3074 = vadd.f32 0.0, %v3073
      %v3075 = vpop.f32.mrf.mxu0
      %3076 = vmatprep.mubr.f32.mxu0 0.0
      %3077 = vmatmul.mubr.f32.gmra.mxu0 %v2944
      %v3078 = vpop.f32.mrf.mxu0
      %v3079 = vadd.f32 0.0, %v3078
      %v3080 = vpop.f32.mrf.mxu0
      %3081 = vmatprep.mubr.f32.mxu0 0.0
      %3082 = vmatmul.mubr.f32.gmra.mxu0 %v2947
      %v3083 = vpop.f32.mrf.mxu0
      %v3084 = vadd.f32 0.0, %v3083
      %v3085 = vpop.f32.mrf.mxu0
      %3086 = vmatprep.mubr.f32.mxu0 0.0
      %3087 = vmatmul.mubr.f32.gmra.mxu0 %v2950
      %v3088 = vpop.f32.mrf.mxu0
      %v3089 = vadd.f32 0.0, %v3088
      %v3090 = vpop.f32.mrf.mxu0
      %3091 = vmatprep.mubr.f32.mxu0 0.0
      %3092 = vmatmul.mubr.f32.gmra.mxu0 %v2953
      %v3093 = vpop.f32.mrf.mxu0
      %v3094 = vadd.f32 0.0, %v3093
      %v3095 = vpop.f32.mrf.mxu0
      %3096 = vmatprep.mubr.f32.mxu0 0.0
      %3097 = vmatmul.mubr.f32.gmra.mxu0 %v2956
      %v3098 = vpop.f32.mrf.mxu0
      %v3099 = vadd.f32 0.0, %v3098
      %v3100 = vpop.f32.mrf.mxu0
      %3101 = vmatprep.mubr.f32.mxu0 0.0
      %3102 = vmatmul.mubr.f32.gmra.mxu0 %v2959
      %v3103 = vpop.f32.mrf.mxu0
      %v3104 = vadd.f32 0.0, %v3103
      %v3105 = vpop.f32.mrf.mxu0
      %3106 = vmatprep.mubr.f32.mxu0 0.0
      %3107 = vmatmul.mubr.f32.gmra.mxu0 %v2962
      %v3108 = vpop.f32.mrf.mxu0
      %v3109 = vadd.f32 0.0, %v3108
      %v3110 = vpop.f32.mrf.mxu0
      %3111 = vdwg.mxu0
      %v3112 = vadd.f32 %v1863, %v3034
      %v3113 = vadd.f32 %v1868, %v3039
      %v3114 = vadd.f32 %v1873, %v3044
      %v3115 = vadd.f32 %v1878, %v3049
      %v3116 = vadd.f32 %v1883, %v3054
      %v3117 = vadd.f32 %v1888, %v3059
      %v3118 = vadd.f32 %v1893, %v3064
      %v3119 = vadd.f32 %v1898, %v3069
      %v3120 = vadd.f32 %v1903, %v3074
      %v3121 = vadd.f32 %v1908, %v3079
      %v3122 = vadd.f32 %v1913, %v3084
      %v3123 = vadd.f32 %v1918, %v3089
      %v3124 = vadd.f32 %v1923, %v3094
      %v3125 = vadd.f32 %v1928, %v3099
      %v3126 = vadd.f32 %v1933, %v3104
      %v3127 = vadd.f32 %v1938, %v3109
      %s3128 = smul.u32 %s289, 32
      %s3129 = scalar_lea.vmem %s275, %s3128
      %v3130 = vld [vmem:[%s3129] sm:$0xff]
      %v3131 = vld [vmem:[%s3129 + $0x8] sm:$0xff]
      %v3132 = vld [vmem:[%s3129 + $0x20] sm:$0xff]
      %v3133 = vld [vmem:[%s3129 + $0x28] sm:$0xff]
      %v3134 = vld [vmem:[%s3129 + $0x40] sm:$0xff]
      %v3135 = vld [vmem:[%s3129 + $0x48] sm:$0xff]
      %v3136 = vld [vmem:[%s3129 + $0x60] sm:$0xff]
      %v3137 = vld [vmem:[%s3129 + $0x68] sm:$0xff]
      %v3138 = vld [vmem:[%s3129 + $0x80] sm:$0xff]
      %v3139 = vld [vmem:[%s3129 + $0x88] sm:$0xff]
      %v3140 = vld [vmem:[%s3129 + $0xa0] sm:$0xff]
      %v3141 = vld [vmem:[%s3129 + $0xa8] sm:$0xff]
      %v3142 = vld [vmem:[%s3129 + $0xc0] sm:$0xff]
      %v3143 = vld [vmem:[%s3129 + $0xc8] sm:$0xff]
      %v3144 = vld [vmem:[%s3129 + $0xe0] sm:$0xff]
      %v3145 = vld [vmem:[%s3129 + $0xe8] sm:$0xff]
      %v3146 = vld [vmem:[%s3129 + $0x6] sm:$0xff]
      %v3147 = vld [vmem:[%s3129 + $0xe] sm:$0xff]
      %v3148 = vld [vmem:[%s3129 + $0x26] sm:$0xff]
      %v3149 = vld [vmem:[%s3129 + $0x2e] sm:$0xff]
      %v3150 = vld [vmem:[%s3129 + $0x46] sm:$0xff]
      %v3151 = vld [vmem:[%s3129 + $0x4e] sm:$0xff]
      %v3152 = vld [vmem:[%s3129 + $0x66] sm:$0xff]
      %v3153 = vld [vmem:[%s3129 + $0x6e] sm:$0xff]
      %v3154 = vld [vmem:[%s3129 + $0x86] sm:$0xff]
      %v3155 = vld [vmem:[%s3129 + $0x8e] sm:$0xff]
      %v3156 = vld [vmem:[%s3129 + $0xa6] sm:$0xff]
      %v3157 = vld [vmem:[%s3129 + $0xae] sm:$0xff]
      %v3158 = vld [vmem:[%s3129 + $0xc6] sm:$0xff]
      %v3159 = vld [vmem:[%s3129 + $0xce] sm:$0xff]
      %v3160 = vld [vmem:[%s3129 + $0xe6] sm:$0xff]
      %v3161 = vld [vmem:[%s3129 + $0xee] sm:$0xff]
      %v3162 = vld [vmem:[%s3129 + $0xc] sm:$0xff]
      %v3163 = vld [vmem:[%s3129 + $0x14] sm:$0xff]
      %v3164 = vld [vmem:[%s3129 + $0x2c] sm:$0xff]
      %v3165 = vld [vmem:[%s3129 + $0x34] sm:$0xff]
      %v3166 = vld [vmem:[%s3129 + $0x4c] sm:$0xff]
      %v3167 = vld [vmem:[%s3129 + $0x54] sm:$0xff]
      %v3168 = vld [vmem:[%s3129 + $0x6c] sm:$0xff]
      %v3169 = vld [vmem:[%s3129 + $0x74] sm:$0xff]
      %v3170 = vld [vmem:[%s3129 + $0x8c] sm:$0xff]
      %v3171 = vld [vmem:[%s3129 + $0x94] sm:$0xff]
      %v3172 = vld [vmem:[%s3129 + $0xac] sm:$0xff]
      %v3173 = vld [vmem:[%s3129 + $0xb4] sm:$0xff]
      %v3174 = vld [vmem:[%s3129 + $0xcc] sm:$0xff]
      %v3175 = vld [vmem:[%s3129 + $0xd4] sm:$0xff]
      %v3176 = vld [vmem:[%s3129 + $0xec] sm:$0xff]
      %v3177 = vld [vmem:[%s3129 + $0xf4] sm:$0xff]
      %v3178 = vld [vmem:[%s292] sm:$0xff]
      %v3179 = vld [vmem:[%s292 + $0x8] sm:$0xff]
      %v3180 = vld [vmem:[%s292 + $0x20] sm:$0xff]
      %v3181 = vld [vmem:[%s292 + $0x28] sm:$0xff]
      %v3182 = vld [vmem:[%s292 + $0x40] sm:$0xff]
      %v3183 = vld [vmem:[%s292 + $0x48] sm:$0xff]
      %v3184 = vld [vmem:[%s292 + $0x60] sm:$0xff]
      %v3185 = vld [vmem:[%s292 + $0x68] sm:$0xff]
      %v3186 = vld [vmem:[%s292 + $0x80] sm:$0xff]
      %v3187 = vld [vmem:[%s292 + $0x88] sm:$0xff]
      %v3188 = vld [vmem:[%s292 + $0xa0] sm:$0xff]
      %v3189 = vld [vmem:[%s292 + $0xa8] sm:$0xff]
      %v3190 = vld [vmem:[%s292 + $0xc0] sm:$0xff]
      %v3191 = vld [vmem:[%s292 + $0xc8] sm:$0xff]
      %v3192 = vld [vmem:[%s292 + $0xe0] sm:$0xff]
      %v3193 = vld [vmem:[%s292 + $0xe8] sm:$0xff]
      %v3194 = vld [vmem:[%s292 + $0xc] sm:$0xff]
      %v3195 = vld [vmem:[%s292 + $0x14] sm:$0xff]
      %v3196 = vld [vmem:[%s292 + $0x2c] sm:$0xff]
      %v3197 = vld [vmem:[%s292 + $0x34] sm:$0xff]
      %v3198 = vld [vmem:[%s292 + $0x4c] sm:$0xff]
      %v3199 = vld [vmem:[%s292 + $0x54] sm:$0xff]
      %v3200 = vld [vmem:[%s292 + $0x6c] sm:$0xff]
      %v3201 = vld [vmem:[%s292 + $0x74] sm:$0xff]
      %v3202 = vld [vmem:[%s292 + $0x8c] sm:$0xff]
      %v3203 = vld [vmem:[%s292 + $0x94] sm:$0xff]
      %v3204 = vld [vmem:[%s292 + $0xac] sm:$0xff]
      %v3205 = vld [vmem:[%s292 + $0xb4] sm:$0xff]
      %v3206 = vld [vmem:[%s292 + $0xcc] sm:$0xff]
      %v3207 = vld [vmem:[%s292 + $0xd4] sm:$0xff]
      %v3208 = vld [vmem:[%s292 + $0xec] sm:$0xff]
      %v3209 = vld [vmem:[%s292 + $0xf4] sm:$0xff]
      %s3210 = sadd.s32 %s289, 12
      %s3211 = smul.u32 %s3210, 32
      %s3212 = scalar_lea.vmem %s275, %s3211
      %v3213 = vld [vmem:[%s3212] sm:$0xff]
      %v3214 = vld [vmem:[%s3212 + $0x8] sm:$0xff]
      %v3215 = vld [vmem:[%s3212 + $0x20] sm:$0xff]
      %v3216 = vld [vmem:[%s3212 + $0x28] sm:$0xff]
      %v3217 = vld [vmem:[%s3212 + $0x40] sm:$0xff]
      %v3218 = vld [vmem:[%s3212 + $0x48] sm:$0xff]
      %v3219 = vld [vmem:[%s3212 + $0x60] sm:$0xff]
      %v3220 = vld [vmem:[%s3212 + $0x68] sm:$0xff]
      %v3221 = vld [vmem:[%s3212 + $0x80] sm:$0xff]
      %v3222 = vld [vmem:[%s3212 + $0x88] sm:$0xff]
      %v3223 = vld [vmem:[%s3212 + $0xa0] sm:$0xff]
      %v3224 = vld [vmem:[%s3212 + $0xa8] sm:$0xff]
      %v3225 = vld [vmem:[%s3212 + $0xc0] sm:$0xff]
      %v3226 = vld [vmem:[%s3212 + $0xc8] sm:$0xff]
      %v3227 = vld [vmem:[%s3212 + $0xe0] sm:$0xff]
      %v3228 = vld [vmem:[%s3212 + $0xe8] sm:$0xff]
      %v3229 = vld [vmem:[%s3212 + $0x6] sm:$0xff]
      %v3230 = vld [vmem:[%s3212 + $0xe] sm:$0xff]
      %v3231 = vld [vmem:[%s3212 + $0x26] sm:$0xff]
      %v3232 = vld [vmem:[%s3212 + $0x2e] sm:$0xff]
      %v3233 = vld [vmem:[%s3212 + $0x46] sm:$0xff]
      %v3234 = vld [vmem:[%s3212 + $0x4e] sm:$0xff]
      %v3235 = vld [vmem:[%s3212 + $0x66] sm:$0xff]
      %v3236 = vld [vmem:[%s3212 + $0x6e] sm:$0xff]
      %v3237 = vld [vmem:[%s3212 + $0x86] sm:$0xff]
      %v3238 = vld [vmem:[%s3212 + $0x8e] sm:$0xff]
      %v3239 = vld [vmem:[%s3212 + $0xa6] sm:$0xff]
      %v3240 = vld [vmem:[%s3212 + $0xae] sm:$0xff]
      %v3241 = vld [vmem:[%s3212 + $0xc6] sm:$0xff]
      %v3242 = vld [vmem:[%s3212 + $0xce] sm:$0xff]
      %v3243 = vld [vmem:[%s3212 + $0xe6] sm:$0xff]
      %v3244 = vld [vmem:[%s3212 + $0xee] sm:$0xff]
      %v3245 = vld [vmem:[%s3212 + $0xc] sm:$0xff]
      %v3246 = vld [vmem:[%s3212 + $0x14] sm:$0xff]
      %v3247 = vld [vmem:[%s3212 + $0x2c] sm:$0xff]
      %v3248 = vld [vmem:[%s3212 + $0x34] sm:$0xff]
      %v3249 = vld [vmem:[%s3212 + $0x4c] sm:$0xff]
      %v3250 = vld [vmem:[%s3212 + $0x54] sm:$0xff]
      %v3251 = vld [vmem:[%s3212 + $0x6c] sm:$0xff]
      %v3252 = vld [vmem:[%s3212 + $0x74] sm:$0xff]
      %v3253 = vld [vmem:[%s3212 + $0x8c] sm:$0xff]
      %v3254 = vld [vmem:[%s3212 + $0x94] sm:$0xff]
      %v3255 = vld [vmem:[%s3212 + $0xac] sm:$0xff]
      %v3256 = vld [vmem:[%s3212 + $0xb4] sm:$0xff]
      %v3257 = vld [vmem:[%s3212 + $0xcc] sm:$0xff]
      %v3258 = vld [vmem:[%s3212 + $0xd4] sm:$0xff]
      %v3259 = vld [vmem:[%s3212 + $0xec] sm:$0xff]
      %v3260 = vld [vmem:[%s3212 + $0xf4] sm:$0xff]
      %3277 = vrot.lane.b32.xlu0 %v3146, 32
      %v3278 = vpop.permute.xlu0 %3277
      %3279 = vrot.lane.b32.xlu0 %v3147, 32
      %v3280 = vpop.permute.xlu0 %3279
      %3281 = vrot.lane.b32.xlu0 %v3148, 32
      %v3282 = vpop.permute.xlu0 %3281
      %3283 = vrot.lane.b32.xlu0 %v3149, 32
      %v3284 = vpop.permute.xlu0 %3283
      %3285 = vrot.lane.b32.xlu0 %v3150, 32
      %v3286 = vpop.permute.xlu0 %3285
      %3287 = vrot.lane.b32.xlu0 %v3151, 32
      %v3288 = vpop.permute.xlu0 %3287
      %3289 = vrot.lane.b32.xlu0 %v3152, 32
      %v3290 = vpop.permute.xlu0 %3289
      %3291 = vrot.lane.b32.xlu0 %v3153, 32
      %v3292 = vpop.permute.xlu0 %3291
      %3293 = vrot.lane.b32.xlu0 %v3154, 32
      %v3294 = vpop.permute.xlu0 %3293
      %3295 = vrot.lane.b32.xlu0 %v3155, 32
      %v3296 = vpop.permute.xlu0 %3295
      %3297 = vrot.lane.b32.xlu0 %v3156, 32
      %v3298 = vpop.permute.xlu0 %3297
      %3299 = vrot.lane.b32.xlu0 %v3157, 32
      %v3300 = vpop.permute.xlu0 %3299
      %3301 = vrot.lane.b32.xlu0 %v3158, 32
      %v3302 = vpop.permute.xlu0 %3301
      %3303 = vrot.lane.b32.xlu0 %v3159, 32
      %v3304 = vpop.permute.xlu0 %3303
      %3305 = vrot.lane.b32.xlu0 %v3160, 32
      %v3306 = vpop.permute.xlu0 %3305
      %3307 = vrot.lane.b32.xlu0 %v3161, 32
      %v3308 = vpop.permute.xlu0 %3307
      %3341 = vrot.lane.b32.xlu0 %v3162, 64
      %v3342 = vpop.permute.xlu0 %3341
      %3343 = vrot.lane.b32.xlu0 %v3163, 64
      %v3344 = vpop.permute.xlu0 %3343
      %3345 = vrot.lane.b32.xlu0 %v3164, 64
      %v3346 = vpop.permute.xlu0 %3345
      %3347 = vrot.lane.b32.xlu0 %v3165, 64
      %v3348 = vpop.permute.xlu0 %3347
      %3349 = vrot.lane.b32.xlu0 %v3166, 64
      %v3350 = vpop.permute.xlu0 %3349
      %3351 = vrot.lane.b32.xlu0 %v3167, 64
      %v3352 = vpop.permute.xlu0 %3351
      %3353 = vrot.lane.b32.xlu0 %v3168, 64
      %v3354 = vpop.permute.xlu0 %3353
      %3355 = vrot.lane.b32.xlu0 %v3169, 64
      %v3356 = vpop.permute.xlu0 %3355
      %3357 = vrot.lane.b32.xlu0 %v3170, 64
      %v3358 = vpop.permute.xlu0 %3357
      %3359 = vrot.lane.b32.xlu0 %v3171, 64
      %v3360 = vpop.permute.xlu0 %3359
      %3361 = vrot.lane.b32.xlu0 %v3172, 64
      %v3362 = vpop.permute.xlu0 %3361
      %3363 = vrot.lane.b32.xlu0 %v3173, 64
      %v3364 = vpop.permute.xlu0 %3363
      %3365 = vrot.lane.b32.xlu0 %v3174, 64
      %v3366 = vpop.permute.xlu0 %3365
      %3367 = vrot.lane.b32.xlu0 %v3175, 64
      %v3368 = vpop.permute.xlu0 %3367
      %3369 = vrot.lane.b32.xlu0 %v3176, 64
      %v3370 = vpop.permute.xlu0 %3369
      %3371 = vrot.lane.b32.xlu0 %v3177, 64
      %v3372 = vpop.permute.xlu0 %3371
      %3405 = vrot.lane.b32.xlu0 %v3178, 96
      %v3406 = vpop.permute.xlu0 %3405
      %3407 = vrot.lane.b32.xlu0 %v3179, 96
      %v3408 = vpop.permute.xlu0 %3407
      %3409 = vrot.lane.b32.xlu0 %v3180, 96
      %v3410 = vpop.permute.xlu0 %3409
      %3411 = vrot.lane.b32.xlu0 %v3181, 96
      %v3412 = vpop.permute.xlu0 %3411
      %3413 = vrot.lane.b32.xlu0 %v3182, 96
      %v3414 = vpop.permute.xlu0 %3413
      %3415 = vrot.lane.b32.xlu0 %v3183, 96
      %v3416 = vpop.permute.xlu0 %3415
      %3417 = vrot.lane.b32.xlu0 %v3184, 96
      %v3418 = vpop.permute.xlu0 %3417
      %3419 = vrot.lane.b32.xlu0 %v3185, 96
      %v3420 = vpop.permute.xlu0 %3419
      %3421 = vrot.lane.b32.xlu0 %v3186, 96
      %v3422 = vpop.permute.xlu0 %3421
      %3423 = vrot.lane.b32.xlu0 %v3187, 96
      %v3424 = vpop.permute.xlu0 %3423
      %3425 = vrot.lane.b32.xlu0 %v3188, 96
      %v3426 = vpop.permute.xlu0 %3425
      %3427 = vrot.lane.b32.xlu0 %v3189, 96
      %v3428 = vpop.permute.xlu0 %3427
      %3429 = vrot.lane.b32.xlu0 %v3190, 96
      %v3430 = vpop.permute.xlu0 %3429
      %3431 = vrot.lane.b32.xlu0 %v3191, 96
      %v3432 = vpop.permute.xlu0 %3431
      %3433 = vrot.lane.b32.xlu0 %v3192, 96
      %v3434 = vpop.permute.xlu0 %3433
      %3435 = vrot.lane.b32.xlu0 %v3193, 96
      %v3436 = vpop.permute.xlu0 %3435
      %3469 = vrot.lane.b32.xlu0 %v3194, 32
      %v3470 = vpop.permute.xlu0 %3469
      %3471 = vrot.lane.b32.xlu0 %v3195, 32
      %v3472 = vpop.permute.xlu0 %3471
      %3473 = vrot.lane.b32.xlu0 %v3196, 32
      %v3474 = vpop.permute.xlu0 %3473
      %3475 = vrot.lane.b32.xlu0 %v3197, 32
      %v3476 = vpop.permute.xlu0 %3475
      %3477 = vrot.lane.b32.xlu0 %v3198, 32
      %v3478 = vpop.permute.xlu0 %3477
      %3479 = vrot.lane.b32.xlu0 %v3199, 32
      %v3480 = vpop.permute.xlu0 %3479
      %3481 = vrot.lane.b32.xlu0 %v3200, 32
      %v3482 = vpop.permute.xlu0 %3481
      %3483 = vrot.lane.b32.xlu0 %v3201, 32
      %v3484 = vpop.permute.xlu0 %3483
      %3485 = vrot.lane.b32.xlu0 %v3202, 32
      %v3486 = vpop.permute.xlu0 %3485
      %3487 = vrot.lane.b32.xlu0 %v3203, 32
      %v3488 = vpop.permute.xlu0 %3487
      %3489 = vrot.lane.b32.xlu0 %v3204, 32
      %v3490 = vpop.permute.xlu0 %3489
      %3491 = vrot.lane.b32.xlu0 %v3205, 32
      %v3492 = vpop.permute.xlu0 %3491
      %3493 = vrot.lane.b32.xlu0 %v3206, 32
      %v3494 = vpop.permute.xlu0 %3493
      %3495 = vrot.lane.b32.xlu0 %v3207, 32
      %v3496 = vpop.permute.xlu0 %3495
      %3497 = vrot.lane.b32.xlu0 %v3208, 32
      %v3498 = vpop.permute.xlu0 %3497
      %3499 = vrot.lane.b32.xlu0 %v3209, 32
      %v3500 = vpop.permute.xlu0 %3499
      %3533 = vrot.lane.b32.xlu0 %v3213, 64
      %v3534 = vpop.permute.xlu0 %3533
      %3535 = vrot.lane.b32.xlu0 %v3214, 64
      %v3536 = vpop.permute.xlu0 %3535
      %3537 = vrot.lane.b32.xlu0 %v3215, 64
      %v3538 = vpop.permute.xlu0 %3537
      %3539 = vrot.lane.b32.xlu0 %v3216, 64
      %v3540 = vpop.permute.xlu0 %3539
      %3541 = vrot.lane.b32.xlu0 %v3217, 64
      %v3542 = vpop.permute.xlu0 %3541
      %3543 = vrot.lane.b32.xlu0 %v3218, 64
      %v3544 = vpop.permute.xlu0 %3543
      %3545 = vrot.lane.b32.xlu0 %v3219, 64
      %v3546 = vpop.permute.xlu0 %3545
      %3547 = vrot.lane.b32.xlu0 %v3220, 64
      %v3548 = vpop.permute.xlu0 %3547
      %3549 = vrot.lane.b32.xlu0 %v3221, 64
      %v3550 = vpop.permute.xlu0 %3549
      %3551 = vrot.lane.b32.xlu0 %v3222, 64
      %v3552 = vpop.permute.xlu0 %3551
      %3553 = vrot.lane.b32.xlu0 %v3223, 64
      %v3554 = vpop.permute.xlu0 %3553
      %3555 = vrot.lane.b32.xlu0 %v3224, 64
      %v3556 = vpop.permute.xlu0 %3555
      %3557 = vrot.lane.b32.xlu0 %v3225, 64
      %v3558 = vpop.permute.xlu0 %3557
      %3559 = vrot.lane.b32.xlu0 %v3226, 64
      %v3560 = vpop.permute.xlu0 %3559
      %3561 = vrot.lane.b32.xlu0 %v3227, 64
      %v3562 = vpop.permute.xlu0 %3561
      %3563 = vrot.lane.b32.xlu0 %v3228, 64
      %v3564 = vpop.permute.xlu0 %3563
      %3597 = vrot.lane.b32.xlu0 %v3229, 96
      %v3598 = vpop.permute.xlu0 %3597
      %3599 = vrot.lane.b32.xlu0 %v3230, 96
      %v3600 = vpop.permute.xlu0 %3599
      %3601 = vrot.lane.b32.xlu0 %v3231, 96
      %v3602 = vpop.permute.xlu0 %3601
      %3603 = vrot.lane.b32.xlu0 %v3232, 96
      %v3604 = vpop.permute.xlu0 %3603
      %3605 = vrot.lane.b32.xlu0 %v3233, 96
      %v3606 = vpop.permute.xlu0 %3605
      %3607 = vrot.lane.b32.xlu0 %v3234, 96
      %v3608 = vpop.permute.xlu0 %3607
      %3609 = vrot.lane.b32.xlu0 %v3235, 96
      %v3610 = vpop.permute.xlu0 %3609
      %3611 = vrot.lane.b32.xlu0 %v3236, 96
      %v3612 = vpop.permute.xlu0 %3611
      %3613 = vrot.lane.b32.xlu0 %v3237, 96
      %v3614 = vpop.permute.xlu0 %3613
      %3615 = vrot.lane.b32.xlu0 %v3238, 96
      %v3616 = vpop.permute.xlu0 %3615
      %3617 = vrot.lane.b32.xlu0 %v3239, 96
      %v3618 = vpop.permute.xlu0 %3617
      %3619 = vrot.lane.b32.xlu0 %v3240, 96
      %v3620 = vpop.permute.xlu0 %3619
      %3621 = vrot.lane.b32.xlu0 %v3241, 96
      %v3622 = vpop.permute.xlu0 %3621
      %3623 = vrot.lane.b32.xlu0 %v3242, 96
      %v3624 = vpop.permute.xlu0 %3623
      %3625 = vrot.lane.b32.xlu0 %v3243, 96
      %v3626 = vpop.permute.xlu0 %3625
      %3627 = vrot.lane.b32.xlu0 %v3244, 96
      %v3628 = vpop.permute.xlu0 %3627
      %v3645 = vsel %vm321, %v3130, %v3278
      %v3646 = vsel %vm321, %v3131, %v3280
      %v3647 = vsel %vm321, %v3132, %v3282
      %v3648 = vsel %vm321, %v3133, %v3284
      %v3649 = vsel %vm321, %v3134, %v3286
      %v3650 = vsel %vm321, %v3135, %v3288
      %v3651 = vsel %vm321, %v3136, %v3290
      %v3652 = vsel %vm321, %v3137, %v3292
      %v3653 = vsel %vm321, %v3138, %v3294
      %v3654 = vsel %vm321, %v3139, %v3296
      %v3655 = vsel %vm321, %v3140, %v3298
      %v3656 = vsel %vm321, %v3141, %v3300
      %v3657 = vsel %vm321, %v3142, %v3302
      %v3658 = vsel %vm321, %v3143, %v3304
      %v3659 = vsel %vm321, %v3144, %v3306
      %v3660 = vsel %vm321, %v3145, %v3308
      %v3661 = vsel %vm1065, %v3645, %v3342
      %v3662 = vsel %vm1065, %v3646, %v3344
      %v3663 = vsel %vm1065, %v3647, %v3346
      %v3664 = vsel %vm1065, %v3648, %v3348
      %v3665 = vsel %vm1065, %v3649, %v3350
      %v3666 = vsel %vm1065, %v3650, %v3352
      %v3667 = vsel %vm1065, %v3651, %v3354
      %v3668 = vsel %vm1065, %v3652, %v3356
      %v3669 = vsel %vm1065, %v3653, %v3358
      %v3670 = vsel %vm1065, %v3654, %v3360
      %v3671 = vsel %vm1065, %v3655, %v3362
      %v3672 = vsel %vm1065, %v3656, %v3364
      %v3673 = vsel %vm1065, %v3657, %v3366
      %v3674 = vsel %vm1065, %v3658, %v3368
      %v3675 = vsel %vm1065, %v3659, %v3370
      %v3676 = vsel %vm1065, %v3660, %v3372
      %v3677 = vsel %vm1082, %v3661, %v3406
      %v3678 = vsel %vm1082, %v3662, %v3408
      %v3679 = vsel %vm1082, %v3663, %v3410
      %v3680 = vsel %vm1082, %v3664, %v3412
      %v3681 = vsel %vm1082, %v3665, %v3414
      %v3682 = vsel %vm1082, %v3666, %v3416
      %v3683 = vsel %vm1082, %v3667, %v3418
      %v3684 = vsel %vm1082, %v3668, %v3420
      %v3685 = vsel %vm1082, %v3669, %v3422
      %v3686 = vsel %vm1082, %v3670, %v3424
      %v3687 = vsel %vm1082, %v3671, %v3426
      %v3688 = vsel %vm1082, %v3672, %v3428
      %v3689 = vsel %vm1082, %v3673, %v3430
      %v3690 = vsel %vm1082, %v3674, %v3432
      %v3691 = vsel %vm1082, %v3675, %v3434
      %v3692 = vsel %vm1082, %v3676, %v3436
      %v3693 = vsel %vm321, %v293, %v3470
      %v3694 = vsel %vm321, %v294, %v3472
      %v3695 = vsel %vm321, %v295, %v3474
      %v3696 = vsel %vm321, %v296, %v3476
      %v3697 = vsel %vm321, %v297, %v3478
      %v3698 = vsel %vm321, %v298, %v3480
      %v3699 = vsel %vm321, %v299, %v3482
      %v3700 = vsel %vm321, %v300, %v3484
      %v3701 = vsel %vm321, %v301, %v3486
      %v3702 = vsel %vm321, %v302, %v3488
      %v3703 = vsel %vm321, %v303, %v3490
      %v3704 = vsel %vm321, %v304, %v3492
      %v3705 = vsel %vm321, %v305, %v3494
      %v3706 = vsel %vm321, %v306, %v3496
      %v3707 = vsel %vm321, %v307, %v3498
      %v3708 = vsel %vm321, %v308, %v3500
      %v3709 = vsel %vm1065, %v3693, %v3534
      %v3710 = vsel %vm1065, %v3694, %v3536
      %v3711 = vsel %vm1065, %v3695, %v3538
      %v3712 = vsel %vm1065, %v3696, %v3540
      %v3713 = vsel %vm1065, %v3697, %v3542
      %v3714 = vsel %vm1065, %v3698, %v3544
      %v3715 = vsel %vm1065, %v3699, %v3546
      %v3716 = vsel %vm1065, %v3700, %v3548
      %v3717 = vsel %vm1065, %v3701, %v3550
      %v3718 = vsel %vm1065, %v3702, %v3552
      %v3719 = vsel %vm1065, %v3703, %v3554
      %v3720 = vsel %vm1065, %v3704, %v3556
      %v3721 = vsel %vm1065, %v3705, %v3558
      %v3722 = vsel %vm1065, %v3706, %v3560
      %v3723 = vsel %vm1065, %v3707, %v3562
      %v3724 = vsel %vm1065, %v3708, %v3564
      %v3725 = vsel %vm1082, %v3709, %v3598
      %v3726 = vsel %vm1082, %v3710, %v3600
      %v3727 = vsel %vm1082, %v3711, %v3602
      %v3728 = vsel %vm1082, %v3712, %v3604
      %v3729 = vsel %vm1082, %v3713, %v3606
      %v3730 = vsel %vm1082, %v3714, %v3608
      %v3731 = vsel %vm1082, %v3715, %v3610
      %v3732 = vsel %vm1082, %v3716, %v3612
      %v3733 = vsel %vm1082, %v3717, %v3614
      %v3734 = vsel %vm1082, %v3718, %v3616
      %v3735 = vsel %vm1082, %v3719, %v3618
      %v3736 = vsel %vm1082, %v3720, %v3620
      %v3737 = vsel %vm1082, %v3721, %v3622
      %v3738 = vsel %vm1082, %v3722, %v3624
      %v3739 = vsel %vm1082, %v3723, %v3626
      %v3740 = vsel %vm1082, %v3724, %v3628
      %s3741 = scalar_lea.vmem %s2, 576
      %v3742 = vld [vmem:[%s3741] sm:$0xff]
      %v3743 = vld [vmem:[%s3741 + $0x8] sm:$0xff]
      %v3744 = vld [vmem:[%s3741 + $0x10] sm:$0xff]
      %v3745 = vld [vmem:[%s3741 + $0x18] sm:$0xff]
      %v3746 = vld [vmem:[%s3741 + $0x20] sm:$0xff]
      %v3747 = vld [vmem:[%s3741 + $0x28] sm:$0xff]
      %v3748 = vld [vmem:[%s3741 + $0x30] sm:$0xff]
      %v3749 = vld [vmem:[%s3741 + $0x38] sm:$0xff]
      %v3750 = vld [vmem:[%s3741 + $0x40] sm:$0xff]
      %v3751 = vld [vmem:[%s3741 + $0x48] sm:$0xff]
      %v3752 = vld [vmem:[%s3741 + $0x50] sm:$0xff]
      %v3753 = vld [vmem:[%s3741 + $0x58] sm:$0xff]
      %v3754 = vld [vmem:[%s3741 + $0x60] sm:$0xff]
      %v3755 = vld [vmem:[%s3741 + $0x68] sm:$0xff]
      %v3756 = vld [vmem:[%s3741 + $0x70] sm:$0xff]
      %v3757 = vld [vmem:[%s3741 + $0x78] sm:$0xff]
      %v3758 = vld [vmem:[%s3741 + $0x80] sm:$0xff]
      %v3759 = vld [vmem:[%s3741 + $0x88] sm:$0xff]
      %v3760 = vld [vmem:[%s3741 + $0x90] sm:$0xff]
      %v3761 = vld [vmem:[%s3741 + $0x98] sm:$0xff]
      %v3762 = vld [vmem:[%s3741 + $0xa0] sm:$0xff]
      %v3763 = vld [vmem:[%s3741 + $0xa8] sm:$0xff]
      %v3764 = vld [vmem:[%s3741 + $0xb0] sm:$0xff]
      %v3765 = vld [vmem:[%s3741 + $0xb8] sm:$0xff]
      %v3766 = vld [vmem:[%s3741 + $0xc0] sm:$0xff]
      %v3767 = vld [vmem:[%s3741 + $0xc8] sm:$0xff]
      %v3768 = vld [vmem:[%s3741 + $0xd0] sm:$0xff]
      %v3769 = vld [vmem:[%s3741 + $0xd8] sm:$0xff]
      %v3770 = vld [vmem:[%s3741 + $0xe0] sm:$0xff]
      %v3771 = vld [vmem:[%s3741 + $0xe8] sm:$0xff]
      %v3772 = vld [vmem:[%s3741 + $0xf0] sm:$0xff]
      %v3773 = vld [vmem:[%s3741 + $0xf8] sm:$0xff]
      %v3774 = vld [vmem:[%s3741 + $0x100] sm:$0xff]
      %v3775 = vld [vmem:[%s3741 + $0x108] sm:$0xff]
      %v3776 = vld [vmem:[%s3741 + $0x110] sm:$0xff]
      %v3777 = vld [vmem:[%s3741 + $0x118] sm:$0xff]
      %s3778 = scalar_lea.vmem %s3, 3
      %v3779 = vld [vmem:[%s3778] sm:$0x1]
      %s3780 = scalar_lea.vmem %s4, 12
      %v3781 = vld [vmem:[%s3780] sm:$0xf]
      %v3783 = vlaneseq
      %v3784 = vshrl.u32 %v3783, 7
      %v3785 = vsub.s32 0, %v3784
      %v3786 = vrot.slane %v3779, %v3785
      %v3789 = vsel %vm321, %v3245, 0
      %v3792 = vsel %vm321, %v3246, 0
      %v3795 = vsel %vm321, %v3247, 0
      %v3798 = vsel %vm321, %v3248, 0
      %v3801 = vsel %vm321, %v3249, 0
      %v3804 = vsel %vm321, %v3250, 0
      %v3807 = vsel %vm321, %v3251, 0
      %v3810 = vsel %vm321, %v3252, 0
      %v3813 = vsel %vm321, %v3253, 0
      %v3816 = vsel %vm321, %v3254, 0
      %v3819 = vsel %vm321, %v3255, 0
      %v3822 = vsel %vm321, %v3256, 0
      %v3825 = vsel %vm321, %v3257, 0
      %v3828 = vsel %vm321, %v3258, 0
      %v3831 = vsel %vm321, %v3259, 0
      %v3834 = vsel %vm321, %v3260, 0
      %3836 = vmatprep.subr.mxu0 0.0
      %3837 = vmatpush1.msra.mxu0 %v3757
      %3838 = vmatprep.subr.mxu0 0.0
      %3839 = vmatpush1.msra.mxu0 %v3756
      %3840 = vmatprep.subr.mxu0 0.0
      %3841 = vmatpush1.msra.mxu0 %v3755
      %3842 = vmatprep.subr.mxu0 0.0
      %3843 = vmatpush1.msra.mxu0 %v3754
      %3844 = vmatprep.subr.mxu0 0.0
      %3845 = vmatpush1.msra.mxu0 %v3753
      %3846 = vmatprep.subr.mxu0 0.0
      %3847 = vmatpush1.msra.mxu0 %v3752
      %3848 = vmatprep.subr.mxu0 0.0
      %3849 = vmatpush1.msra.mxu0 %v3751
      %3850 = vmatprep.subr.mxu0 0.0
      %3851 = vmatpush1.msra.mxu0 %v3750
      %3852 = vmatprep.subr.mxu0 0.0
      %3853 = vmatpush1.msra.mxu0 %v3749
      %3854 = vmatprep.subr.mxu0 0.0
      %3855 = vmatpush1.msra.mxu0 %v3748
      %3856 = vmatprep.subr.mxu0 0.0
      %3857 = vmatpush1.msra.mxu0 %v3747
      %3858 = vmatprep.subr.mxu0 0.0
      %3859 = vmatpush1.msra.mxu0 %v3746
      %3860 = vmatprep.subr.mxu0 0.0
      %3861 = vmatpush1.msra.mxu0 %v3745
      %3862 = vmatprep.subr.mxu0 0.0
      %3863 = vmatpush1.msra.mxu0 %v3744
      %3864 = vmatprep.subr.mxu0 0.0
      %3865 = vmatpush1.msra.mxu0 %v3743
      %3866 = vmatprep.subr.mxu0 0.0
      %3867 = vmatpush1.msra.mxu0 %v3742
      %3868 = vmatprep.subr.mxu0 0.0
      %3869 = vmatpush2.msra.mxu0 %v3773
      %3870 = vmatprep.subr.mxu0 0.0
      %3871 = vmatpush2.msra.mxu0 %v3772
      %3872 = vmatprep.subr.mxu0 0.0
      %3873 = vmatpush2.msra.mxu0 %v3771
      %3874 = vmatprep.subr.mxu0 0.0
      %3875 = vmatpush2.msra.mxu0 %v3770
      %3876 = vmatprep.subr.mxu0 0.0
      %3877 = vmatpush2.msra.mxu0 %v3769
      %3878 = vmatprep.subr.mxu0 0.0
      %3879 = vmatpush2.msra.mxu0 %v3768
      %3880 = vmatprep.subr.mxu0 0.0
      %3881 = vmatpush2.msra.mxu0 %v3767
      %3882 = vmatprep.subr.mxu0 0.0
      %3883 = vmatpush2.msra.mxu0 %v3766
      %3884 = vmatprep.subr.mxu0 0.0
      %3885 = vmatpush2.msra.mxu0 %v3765
      %3886 = vmatprep.subr.mxu0 0.0
      %3887 = vmatpush2.msra.mxu0 %v3764
      %3888 = vmatprep.subr.mxu0 0.0
      %3889 = vmatpush2.msra.mxu0 %v3763
      %3890 = vmatprep.subr.mxu0 0.0
      %3891 = vmatpush2.msra.mxu0 %v3762
      %3892 = vmatprep.subr.mxu0 0.0
      %3893 = vmatpush2.msra.mxu0 %v3761
      %3894 = vmatprep.subr.mxu0 0.0
      %3895 = vmatpush2.msra.mxu0 %v3760
      %3896 = vmatprep.subr.mxu0 0.0
      %3897 = vmatpush2.msra.mxu0 %v3759
      %3898 = vmatprep.subr.mxu0 0.0
      %3899 = vmatpush2.msra.mxu0 %v3758
      %3900 = vmatprep.mubr.f32.mxu0 %v3725
      %3901 = vmatmul.mubr.f32.gmra.mxu0 %v3677
      %v3902 = vpop.f32.mrf.mxu0
      %v3903 = vadd.f32 %v3786, %v3902
      %v3904 = vpop.f32.mrf.mxu0
      %3905 = vmatprep.mubr.f32.mxu0 %v3726
      %3906 = vmatmul.mubr.f32.gmra.mxu0 %v3678
      %v3907 = vpop.f32.mrf.mxu0
      %v3908 = vadd.f32 %v3786, %v3907
      %v3909 = vpop.f32.mrf.mxu0
      %3910 = vmatprep.mubr.f32.mxu0 %v3727
      %3911 = vmatmul.mubr.f32.gmra.mxu0 %v3679
      %v3912 = vpop.f32.mrf.mxu0
      %v3913 = vadd.f32 %v3786, %v3912
      %v3914 = vpop.f32.mrf.mxu0
      %3915 = vmatprep.mubr.f32.mxu0 %v3728
      %3916 = vmatmul.mubr.f32.gmra.mxu0 %v3680
      %v3917 = vpop.f32.mrf.mxu0
      %v3918 = vadd.f32 %v3786, %v3917
      %v3919 = vpop.f32.mrf.mxu0
      %3920 = vmatprep.mubr.f32.mxu0 %v3729
      %3921 = vmatmul.mubr.f32.gmra.mxu0 %v3681
      %v3922 = vpop.f32.mrf.mxu0
      %v3923 = vadd.f32 %v3786, %v3922
      %v3924 = vpop.f32.mrf.mxu0
      %3925 = vmatprep.mubr.f32.mxu0 %v3730
      %3926 = vmatmul.mubr.f32.gmra.mxu0 %v3682
      %v3927 = vpop.f32.mrf.mxu0
      %v3928 = vadd.f32 %v3786, %v3927
      %v3929 = vpop.f32.mrf.mxu0
      %3930 = vmatprep.mubr.f32.mxu0 %v3731
      %3931 = vmatmul.mubr.f32.gmra.mxu0 %v3683
      %v3932 = vpop.f32.mrf.mxu0
      %v3933 = vadd.f32 %v3786, %v3932
      %v3934 = vpop.f32.mrf.mxu0
      %3935 = vmatprep.mubr.f32.mxu0 %v3732
      %3936 = vmatmul.mubr.f32.gmra.mxu0 %v3684
      %v3937 = vpop.f32.mrf.mxu0
      %v3938 = vadd.f32 %v3786, %v3937
      %v3939 = vpop.f32.mrf.mxu0
      %3940 = vmatprep.mubr.f32.mxu0 %v3733
      %3941 = vmatmul.mubr.f32.gmra.mxu0 %v3685
      %v3942 = vpop.f32.mrf.mxu0
      %v3943 = vadd.f32 %v3786, %v3942
      %v3944 = vpop.f32.mrf.mxu0
      %3945 = vmatprep.mubr.f32.mxu0 %v3734
      %3946 = vmatmul.mubr.f32.gmra.mxu0 %v3686
      %v3947 = vpop.f32.mrf.mxu0
      %v3948 = vadd.f32 %v3786, %v3947
      %v3949 = vpop.f32.mrf.mxu0
      %3950 = vmatprep.mubr.f32.mxu0 %v3735
      %3951 = vmatmul.mubr.f32.gmra.mxu0 %v3687
      %v3952 = vpop.f32.mrf.mxu0
      %v3953 = vadd.f32 %v3786, %v3952
      %v3954 = vpop.f32.mrf.mxu0
      %3955 = vmatprep.mubr.f32.mxu0 %v3736
      %3956 = vmatmul.mubr.f32.gmra.mxu0 %v3688
      %v3957 = vpop.f32.mrf.mxu0
      %v3958 = vadd.f32 %v3786, %v3957
      %v3959 = vpop.f32.mrf.mxu0
      %3960 = vmatprep.mubr.f32.mxu0 %v3737
      %3961 = vmatmul.mubr.f32.gmra.mxu0 %v3689
      %v3962 = vpop.f32.mrf.mxu0
      %v3963 = vadd.f32 %v3786, %v3962
      %v3964 = vpop.f32.mrf.mxu0
      %3965 = vmatprep.mubr.f32.mxu0 %v3738
      %3966 = vmatmul.mubr.f32.gmra.mxu0 %v3690
      %v3967 = vpop.f32.mrf.mxu0
      %v3968 = vadd.f32 %v3786, %v3967
      %v3969 = vpop.f32.mrf.mxu0
      %3970 = vmatprep.mubr.f32.mxu0 %v3739
      %3971 = vmatmul.mubr.f32.gmra.mxu0 %v3691
      %v3972 = vpop.f32.mrf.mxu0
      %v3973 = vadd.f32 %v3786, %v3972
      %v3974 = vpop.f32.mrf.mxu0
      %3975 = vmatprep.mubr.f32.mxu0 %v3740
      %3976 = vmatmul.mubr.f32.gmra.mxu0 %v3692
      %v3977 = vpop.f32.mrf.mxu0
      %v3978 = vadd.f32 %v3786, %v3977
      %v3979 = vpop.f32.mrf.mxu0
      %3980 = vdwg.mxu0
      %3981 = vmatprep.subr.mxu0 0.0
      %3982 = vmatpush1.msra.mxu0 0.0
      %3983 = vmatprep.subr.mxu0 0.0
      %3984 = vmatpush1.msra.mxu0 0.0
      %3985 = vmatprep.subr.mxu0 0.0
      %3986 = vmatpush1.msra.mxu0 0.0
      %3987 = vmatprep.subr.mxu0 0.0
      %3988 = vmatpush1.msra.mxu0 0.0
      %3989 = vmatprep.subr.mxu0 0.0
      %3990 = vmatpush1.msra.mxu0 0.0
      %3991 = vmatprep.subr.mxu0 0.0
      %3992 = vmatpush1.msra.mxu0 0.0
      %3993 = vmatprep.subr.mxu0 0.0
      %3994 = vmatpush1.msra.mxu0 0.0
      %3995 = vmatprep.subr.mxu0 0.0
      %3996 = vmatpush1.msra.mxu0 0.0
      %3997 = vmatprep.subr.mxu0 0.0
      %3998 = vmatpush1.msra.mxu0 0.0
      %3999 = vmatprep.subr.mxu0 0.0
      %4000 = vmatpush1.msra.mxu0 0.0
      %4001 = vmatprep.subr.mxu0 0.0
      %4002 = vmatpush1.msra.mxu0 0.0
      %4003 = vmatprep.subr.mxu0 0.0
      %4004 = vmatpush1.msra.mxu0 0.0
      %4005 = vmatprep.subr.mxu0 0.0
      %4006 = vmatpush1.msra.mxu0 %v3777
      %4007 = vmatprep.subr.mxu0 0.0
      %4008 = vmatpush1.msra.mxu0 %v3776
      %4009 = vmatprep.subr.mxu0 0.0
      %4010 = vmatpush1.msra.mxu0 %v3775
      %4011 = vmatprep.subr.mxu0 0.0
      %4012 = vmatpush1.msra.mxu0 %v3774
      %4013 = vmatprep.subr.mxu0 0.0
      %4014 = vmatpush2.msra.mxu0 0.0
      %4015 = vmatprep.subr.mxu0 0.0
      %4016 = vmatpush2.msra.mxu0 0.0
      %4017 = vmatprep.subr.mxu0 0.0
      %4018 = vmatpush2.msra.mxu0 0.0
      %4019 = vmatprep.subr.mxu0 0.0
      %4020 = vmatpush2.msra.mxu0 0.0
      %4021 = vmatprep.subr.mxu0 0.0
      %4022 = vmatpush2.msra.mxu0 0.0
      %4023 = vmatprep.subr.mxu0 0.0
      %4024 = vmatpush2.msra.mxu0 0.0
      %4025 = vmatprep.subr.mxu0 0.0
      %4026 = vmatpush2.msra.mxu0 0.0
      %4027 = vmatprep.subr.mxu0 0.0
      %4028 = vmatpush2.msra.mxu0 0.0
      %4029 = vmatprep.subr.mxu0 0.0
      %4030 = vmatpush2.msra.mxu0 0.0
      %4031 = vmatprep.subr.mxu0 0.0
      %4032 = vmatpush2.msra.mxu0 0.0
      %4033 = vmatprep.subr.mxu0 0.0
      %4034 = vmatpush2.msra.mxu0 0.0
      %4035 = vmatprep.subr.mxu0 0.0
      %4036 = vmatpush2.msra.mxu0 0.0
      %4037 = vmatprep.subr.mxu0 0.0
      %4038 = vmatpush2.msra.mxu0 0.0
      %4039 = vmatprep.subr.mxu0 0.0
      %4040 = vmatpush2.msra.mxu0 0.0
      %4041 = vmatprep.subr.mxu0 0.0
      %4042 = vmatpush2.msra.mxu0 0.0
      %4043 = vmatprep.subr.mxu0 0.0
      %4044 = vmatpush2.msra.mxu0 0.0
      %4045 = vmatprep.mubr.f32.mxu0 0.0
      %4046 = vmatmul.mubr.f32.gmra.mxu0 %v3789
      %v4047 = vpop.f32.mrf.mxu0
      %v4048 = vadd.f32 %v3903, %v4047
      %v4049 = vpop.f32.mrf.mxu0
      %4050 = vmatprep.mubr.f32.mxu0 0.0
      %4051 = vmatmul.mubr.f32.gmra.mxu0 %v3792
      %v4052 = vpop.f32.mrf.mxu0
      %v4053 = vadd.f32 %v3908, %v4052
      %v4054 = vpop.f32.mrf.mxu0
      %4055 = vmatprep.mubr.f32.mxu0 0.0
      %4056 = vmatmul.mubr.f32.gmra.mxu0 %v3795
      %v4057 = vpop.f32.mrf.mxu0
      %v4058 = vadd.f32 %v3913, %v4057
      %v4059 = vpop.f32.mrf.mxu0
      %4060 = vmatprep.mubr.f32.mxu0 0.0
      %4061 = vmatmul.mubr.f32.gmra.mxu0 %v3798
      %v4062 = vpop.f32.mrf.mxu0
      %v4063 = vadd.f32 %v3918, %v4062
      %v4064 = vpop.f32.mrf.mxu0
      %4065 = vmatprep.mubr.f32.mxu0 0.0
      %4066 = vmatmul.mubr.f32.gmra.mxu0 %v3801
      %v4067 = vpop.f32.mrf.mxu0
      %v4068 = vadd.f32 %v3923, %v4067
      %v4069 = vpop.f32.mrf.mxu0
      %4070 = vmatprep.mubr.f32.mxu0 0.0
      %4071 = vmatmul.mubr.f32.gmra.mxu0 %v3804
      %v4072 = vpop.f32.mrf.mxu0
      %v4073 = vadd.f32 %v3928, %v4072
      %v4074 = vpop.f32.mrf.mxu0
      %4075 = vmatprep.mubr.f32.mxu0 0.0
      %4076 = vmatmul.mubr.f32.gmra.mxu0 %v3807
      %v4077 = vpop.f32.mrf.mxu0
      %v4078 = vadd.f32 %v3933, %v4077
      %v4079 = vpop.f32.mrf.mxu0
      %4080 = vmatprep.mubr.f32.mxu0 0.0
      %4081 = vmatmul.mubr.f32.gmra.mxu0 %v3810
      %v4082 = vpop.f32.mrf.mxu0
      %v4083 = vadd.f32 %v3938, %v4082
      %v4084 = vpop.f32.mrf.mxu0
      %4085 = vmatprep.mubr.f32.mxu0 0.0
      %4086 = vmatmul.mubr.f32.gmra.mxu0 %v3813
      %v4087 = vpop.f32.mrf.mxu0
      %v4088 = vadd.f32 %v3943, %v4087
      %v4089 = vpop.f32.mrf.mxu0
      %4090 = vmatprep.mubr.f32.mxu0 0.0
      %4091 = vmatmul.mubr.f32.gmra.mxu0 %v3816
      %v4092 = vpop.f32.mrf.mxu0
      %v4093 = vadd.f32 %v3948, %v4092
      %v4094 = vpop.f32.mrf.mxu0
      %4095 = vmatprep.mubr.f32.mxu0 0.0
      %4096 = vmatmul.mubr.f32.gmra.mxu0 %v3819
      %v4097 = vpop.f32.mrf.mxu0
      %v4098 = vadd.f32 %v3953, %v4097
      %v4099 = vpop.f32.mrf.mxu0
      %4100 = vmatprep.mubr.f32.mxu0 0.0
      %4101 = vmatmul.mubr.f32.gmra.mxu0 %v3822
      %v4102 = vpop.f32.mrf.mxu0
      %v4103 = vadd.f32 %v3958, %v4102
      %v4104 = vpop.f32.mrf.mxu0
      %4105 = vmatprep.mubr.f32.mxu0 0.0
      %4106 = vmatmul.mubr.f32.gmra.mxu0 %v3825
      %v4107 = vpop.f32.mrf.mxu0
      %v4108 = vadd.f32 %v3963, %v4107
      %v4109 = vpop.f32.mrf.mxu0
      %4110 = vmatprep.mubr.f32.mxu0 0.0
      %4111 = vmatmul.mubr.f32.gmra.mxu0 %v3828
      %v4112 = vpop.f32.mrf.mxu0
      %v4113 = vadd.f32 %v3968, %v4112
      %v4114 = vpop.f32.mrf.mxu0
      %4115 = vmatprep.mubr.f32.mxu0 0.0
      %4116 = vmatmul.mubr.f32.gmra.mxu0 %v3831
      %v4117 = vpop.f32.mrf.mxu0
      %v4118 = vadd.f32 %v3973, %v4117
      %v4119 = vpop.f32.mrf.mxu0
      %4120 = vmatprep.mubr.f32.mxu0 0.0
      %4121 = vmatmul.mubr.f32.gmra.mxu0 %v3834
      %v4122 = vpop.f32.mrf.mxu0
      %v4123 = vadd.f32 %v3978, %v4122
      %v4124 = vpop.f32.mrf.mxu0
      %4125 = vdwg.mxu0
      %v4126 = vmax.f32 %v4048, 0.0
      %v4127 = vmax.f32 %v4053, 0.0
      %v4128 = vmax.f32 %v4058, 0.0
      %v4129 = vmax.f32 %v4063, 0.0
      %v4130 = vmax.f32 %v4068, 0.0
      %v4131 = vmax.f32 %v4073, 0.0
      %v4132 = vmax.f32 %v4078, 0.0
      %v4133 = vmax.f32 %v4083, 0.0
      %v4134 = vmax.f32 %v4088, 0.0
      %v4135 = vmax.f32 %v4093, 0.0
      %v4136 = vmax.f32 %v4098, 0.0
      %v4137 = vmax.f32 %v4103, 0.0
      %v4138 = vmax.f32 %v4108, 0.0
      %v4139 = vmax.f32 %v4113, 0.0
      %v4140 = vmax.f32 %v4118, 0.0
      %v4141 = vmax.f32 %v4123, 0.0
      %v4143 = vsel %vm1547, %v4126, 0
      %v4146 = vsel %vm1547, %v4127, 0
      %v4149 = vsel %vm1547, %v4128, 0
      %v4152 = vsel %vm1547, %v4129, 0
      %v4155 = vsel %vm1547, %v4130, 0
      %v4158 = vsel %vm1547, %v4131, 0
      %v4161 = vsel %vm1547, %v4132, 0
      %v4164 = vsel %vm1547, %v4133, 0
      %v4167 = vsel %vm1547, %v4134, 0
      %v4170 = vsel %vm1547, %v4135, 0
      %v4173 = vsel %vm1547, %v4136, 0
      %v4176 = vsel %vm1547, %v4137, 0
      %v4179 = vsel %vm1547, %v4138, 0
      %v4182 = vsel %vm1547, %v4139, 0
      %v4185 = vsel %vm1547, %v4140, 0
      %v4188 = vsel %vm1547, %v4141, 0
      %v4191 = vsel %vm1596, %v3781, 0
      %4193 = vmatprep.subr.mxu0 0.0
      %4194 = vmatpush1.msra.mxu0 0.0
      %4195 = vmatprep.subr.mxu0 0.0
      %4196 = vmatpush1.msra.mxu0 0.0
      %4197 = vmatprep.subr.mxu0 0.0
      %4198 = vmatpush1.msra.mxu0 0.0
      %4199 = vmatprep.subr.mxu0 0.0
      %4200 = vmatpush1.msra.mxu0 0.0
      %4201 = vmatprep.subr.mxu0 0.0
      %4202 = vmatpush1.msra.mxu0 0.0
      %4203 = vmatprep.subr.mxu0 0.0
      %4204 = vmatpush1.msra.mxu0 0.0
      %4205 = vmatprep.subr.mxu0 0.0
      %4206 = vmatpush1.msra.mxu0 0.0
      %4207 = vmatprep.subr.mxu0 0.0
      %4208 = vmatpush1.msra.mxu0 0.0
      %4209 = vmatprep.subr.mxu0 0.0
      %4210 = vmatpush1.msra.mxu0 0.0
      %4211 = vmatprep.subr.mxu0 0.0
      %4212 = vmatpush1.msra.mxu0 0.0
      %4213 = vmatprep.subr.mxu0 0.0
      %4214 = vmatpush1.msra.mxu0 0.0
      %4215 = vmatprep.subr.mxu0 0.0
      %4216 = vmatpush1.msra.mxu0 0.0
      %4217 = vmatprep.subr.mxu0 0.0
      %4218 = vmatpush1.msra.mxu0 0.0
      %4219 = vmatprep.subr.mxu0 0.0
      %4220 = vmatpush1.msra.mxu0 0.0
      %4221 = vmatprep.subr.mxu0 0.0
      %4222 = vmatpush1.msra.mxu0 0.0
      %4223 = vmatprep.subr.mxu0 0.0
      %4224 = vmatpush1.msra.mxu0 %v4191
      %4225 = vmatprep.subr.mxu0 0.0
      %4226 = vmatpush2.msra.mxu0 0.0
      %4227 = vmatprep.subr.mxu0 0.0
      %4228 = vmatpush2.msra.mxu0 0.0
      %4229 = vmatprep.subr.mxu0 0.0
      %4230 = vmatpush2.msra.mxu0 0.0
      %4231 = vmatprep.subr.mxu0 0.0
      %4232 = vmatpush2.msra.mxu0 0.0
      %4233 = vmatprep.subr.mxu0 0.0
      %4234 = vmatpush2.msra.mxu0 0.0
      %4235 = vmatprep.subr.mxu0 0.0
      %4236 = vmatpush2.msra.mxu0 0.0
      %4237 = vmatprep.subr.mxu0 0.0
      %4238 = vmatpush2.msra.mxu0 0.0
      %4239 = vmatprep.subr.mxu0 0.0
      %4240 = vmatpush2.msra.mxu0 0.0
      %4241 = vmatprep.subr.mxu0 0.0
      %4242 = vmatpush2.msra.mxu0 0.0
      %4243 = vmatprep.subr.mxu0 0.0
      %4244 = vmatpush2.msra.mxu0 0.0
      %4245 = vmatprep.subr.mxu0 0.0
      %4246 = vmatpush2.msra.mxu0 0.0
      %4247 = vmatprep.subr.mxu0 0.0
      %4248 = vmatpush2.msra.mxu0 0.0
      %4249 = vmatprep.subr.mxu0 0.0
      %4250 = vmatpush2.msra.mxu0 0.0
      %4251 = vmatprep.subr.mxu0 0.0
      %4252 = vmatpush2.msra.mxu0 0.0
      %4253 = vmatprep.subr.mxu0 0.0
      %4254 = vmatpush2.msra.mxu0 0.0
      %4255 = vmatprep.subr.mxu0 0.0
      %4256 = vmatpush2.msra.mxu0 0.0
      %4257 = vmatprep.mubr.f32.mxu0 0.0
      %4258 = vmatmul.mubr.f32.gmra.mxu0 %v4143
      %v4259 = vpop.f32.mrf.mxu0
      %v4260 = vadd.f32 0.0, %v4259
      %v4261 = vpop.f32.mrf.mxu0
      %4262 = vmatprep.mubr.f32.mxu0 0.0
      %4263 = vmatmul.mubr.f32.gmra.mxu0 %v4146
      %v4264 = vpop.f32.mrf.mxu0
      %v4265 = vadd.f32 0.0, %v4264
      %v4266 = vpop.f32.mrf.mxu0
      %4267 = vmatprep.mubr.f32.mxu0 0.0
      %4268 = vmatmul.mubr.f32.gmra.mxu0 %v4149
      %v4269 = vpop.f32.mrf.mxu0
      %v4270 = vadd.f32 0.0, %v4269
      %v4271 = vpop.f32.mrf.mxu0
      %4272 = vmatprep.mubr.f32.mxu0 0.0
      %4273 = vmatmul.mubr.f32.gmra.mxu0 %v4152
      %v4274 = vpop.f32.mrf.mxu0
      %v4275 = vadd.f32 0.0, %v4274
      %v4276 = vpop.f32.mrf.mxu0
      %4277 = vmatprep.mubr.f32.mxu0 0.0
      %4278 = vmatmul.mubr.f32.gmra.mxu0 %v4155
      %v4279 = vpop.f32.mrf.mxu0
      %v4280 = vadd.f32 0.0, %v4279
      %v4281 = vpop.f32.mrf.mxu0
      %4282 = vmatprep.mubr.f32.mxu0 0.0
      %4283 = vmatmul.mubr.f32.gmra.mxu0 %v4158
      %v4284 = vpop.f32.mrf.mxu0
      %v4285 = vadd.f32 0.0, %v4284
      %v4286 = vpop.f32.mrf.mxu0
      %4287 = vmatprep.mubr.f32.mxu0 0.0
      %4288 = vmatmul.mubr.f32.gmra.mxu0 %v4161
      %v4289 = vpop.f32.mrf.mxu0
      %v4290 = vadd.f32 0.0, %v4289
      %v4291 = vpop.f32.mrf.mxu0
      %4292 = vmatprep.mubr.f32.mxu0 0.0
      %4293 = vmatmul.mubr.f32.gmra.mxu0 %v4164
      %v4294 = vpop.f32.mrf.mxu0
      %v4295 = vadd.f32 0.0, %v4294
      %v4296 = vpop.f32.mrf.mxu0
      %4297 = vmatprep.mubr.f32.mxu0 0.0
      %4298 = vmatmul.mubr.f32.gmra.mxu0 %v4167
      %v4299 = vpop.f32.mrf.mxu0
      %v4300 = vadd.f32 0.0, %v4299
      %v4301 = vpop.f32.mrf.mxu0
      %4302 = vmatprep.mubr.f32.mxu0 0.0
      %4303 = vmatmul.mubr.f32.gmra.mxu0 %v4170
      %v4304 = vpop.f32.mrf.mxu0
      %v4305 = vadd.f32 0.0, %v4304
      %v4306 = vpop.f32.mrf.mxu0
      %4307 = vmatprep.mubr.f32.mxu0 0.0
      %4308 = vmatmul.mubr.f32.gmra.mxu0 %v4173
      %v4309 = vpop.f32.mrf.mxu0
      %v4310 = vadd.f32 0.0, %v4309
      %v4311 = vpop.f32.mrf.mxu0
      %4312 = vmatprep.mubr.f32.mxu0 0.0
      %4313 = vmatmul.mubr.f32.gmra.mxu0 %v4176
      %v4314 = vpop.f32.mrf.mxu0
      %v4315 = vadd.f32 0.0, %v4314
      %v4316 = vpop.f32.mrf.mxu0
      %4317 = vmatprep.mubr.f32.mxu0 0.0
      %4318 = vmatmul.mubr.f32.gmra.mxu0 %v4179
      %v4319 = vpop.f32.mrf.mxu0
      %v4320 = vadd.f32 0.0, %v4319
      %v4321 = vpop.f32.mrf.mxu0
      %4322 = vmatprep.mubr.f32.mxu0 0.0
      %4323 = vmatmul.mubr.f32.gmra.mxu0 %v4182
      %v4324 = vpop.f32.mrf.mxu0
      %v4325 = vadd.f32 0.0, %v4324
      %v4326 = vpop.f32.mrf.mxu0
      %4327 = vmatprep.mubr.f32.mxu0 0.0
      %4328 = vmatmul.mubr.f32.gmra.mxu0 %v4185
      %v4329 = vpop.f32.mrf.mxu0
      %v4330 = vadd.f32 0.0, %v4329
      %v4331 = vpop.f32.mrf.mxu0
      %4332 = vmatprep.mubr.f32.mxu0 0.0
      %4333 = vmatmul.mubr.f32.gmra.mxu0 %v4188
      %v4334 = vpop.f32.mrf.mxu0
      %v4335 = vadd.f32 0.0, %v4334
      %v4336 = vpop.f32.mrf.mxu0
      %4337 = vdwg.mxu0
      %v4338 = vadd.f32 %v3112, %v4260
      %v4339 = vadd.f32 %v3113, %v4265
      %v4340 = vadd.f32 %v3114, %v4270
      %v4341 = vadd.f32 %v3115, %v4275
      %v4342 = vadd.f32 %v3116, %v4280
      %v4343 = vadd.f32 %v3117, %v4285
      %v4344 = vadd.f32 %v3118, %v4290
      %v4345 = vadd.f32 %v3119, %v4295
      %v4346 = vadd.f32 %v3120, %v4300
      %v4347 = vadd.f32 %v3121, %v4305
      %v4348 = vadd.f32 %v3122, %v4310
      %v4349 = vadd.f32 %v3123, %v4315
      %v4350 = vadd.f32 %v3124, %v4320
      %v4351 = vadd.f32 %v3125, %v4325
      %v4352 = vadd.f32 %v3126, %v4330
      %v4353 = vadd.f32 %v3127, %v4335
      %v4354 = vld [vmem:[%s278] sm:$0x1]
      %v4356 = vlaneseq
      %v4357 = vshrl.u32 %v4356, 7
      %v4358 = vsub.s32 0, %v4357
      %v4359 = vrot.slane %v4354, %v4358
      %v4361 = vadd.f32 %v4338, %v4359
      %v4362 = vadd.f32 %v4339, %v4359
      %v4363 = vadd.f32 %v4340, %v4359
      %v4364 = vadd.f32 %v4341, %v4359
      %v4365 = vadd.f32 %v4342, %v4359
      %v4366 = vadd.f32 %v4343, %v4359
      %v4367 = vadd.f32 %v4344, %v4359
      %v4368 = vadd.f32 %v4345, %v4359
      %v4369 = vadd.f32 %v4346, %v4359
      %v4370 = vadd.f32 %v4347, %v4359
      %v4371 = vadd.f32 %v4348, %v4359
      %v4372 = vadd.f32 %v4349, %v4359
      %v4373 = vadd.f32 %v4350, %v4359
      %v4374 = vadd.f32 %v4351, %v4359
      %v4375 = vadd.f32 %v4352, %v4359
      %v4376 = vadd.f32 %v4353, %v4359
      %v4377 = vmax.f32 %v4361, 0.0
      %v4378 = vmax.f32 %v4362, 0.0
      %v4379 = vmax.f32 %v4363, 0.0
      %v4380 = vmax.f32 %v4364, 0.0
      %v4381 = vmax.f32 %v4365, 0.0
      %v4382 = vmax.f32 %v4366, 0.0
      %v4383 = vmax.f32 %v4367, 0.0
      %v4384 = vmax.f32 %v4368, 0.0
      %v4385 = vmax.f32 %v4369, 0.0
      %v4386 = vmax.f32 %v4370, 0.0
      %v4387 = vmax.f32 %v4371, 0.0
      %v4388 = vmax.f32 %v4372, 0.0
      %v4389 = vmax.f32 %v4373, 0.0
      %v4390 = vmax.f32 %v4374, 0.0
      %v4391 = vmax.f32 %v4375, 0.0
      %v4392 = vmax.f32 %v4376, 0.0
      %4393 = vst.msk [vmem:[%s287] sm:$0xff] %vm1547, %v4377
      %4394 = vst.msk [vmem:[%s287 + $0x8] sm:$0xff] %vm1547, %v4378
      %4395 = vst.msk [vmem:[%s287 + $0x10] sm:$0xff] %vm1547, %v4379
      %4396 = vst.msk [vmem:[%s287 + $0x18] sm:$0xff] %vm1547, %v4380
      %4397 = vst.msk [vmem:[%s287 + $0x20] sm:$0xff] %vm1547, %v4381
      %4398 = vst.msk [vmem:[%s287 + $0x28] sm:$0xff] %vm1547, %v4382
      %4399 = vst.msk [vmem:[%s287 + $0x30] sm:$0xff] %vm1547, %v4383
      %4400 = vst.msk [vmem:[%s287 + $0x38] sm:$0xff] %vm1547, %v4384
      %4401 = vst.msk [vmem:[%s287 + $0x40] sm:$0xff] %vm1547, %v4385
      %4402 = vst.msk [vmem:[%s287 + $0x48] sm:$0xff] %vm1547, %v4386
      %4403 = vst.msk [vmem:[%s287 + $0x50] sm:$0xff] %vm1547, %v4387
      %4404 = vst.msk [vmem:[%s287 + $0x58] sm:$0xff] %vm1547, %v4388
      %4405 = vst.msk [vmem:[%s287 + $0x60] sm:$0xff] %vm1547, %v4389
      %4406 = vst.msk [vmem:[%s287 + $0x68] sm:$0xff] %vm1547, %v4390
      %4407 = vst.msk [vmem:[%s287 + $0x70] sm:$0xff] %vm1547, %v4391
      %4408 = vst.msk [vmem:[%s287 + $0x78] sm:$0xff] %vm1547, %v4392
      %s4409 = smul.u32 16, %s22
      %p4410 = scmp.lt.s32.totalorder %s21, 1
      %s4411 = scalar_select %p4410, %s21, 1
      %p4412 = scmp.lt.s32.totalorder %s4409, 31
      %s4413 = scalar_select %p4412, %s4409, 31
      %s4414 = smul.addr %s4411, 32
      %s4415 = sadd.s32 %s4413, %s4414
      %s4416 = smul.addr %s4415, 8
      %s4417 = scalar_lea.vmem %s6, %s4416
      // Predicated region
      $region45: #{tpu_custom_call.1} parent=43 // pred_check
        %p4418 = pneg %p185
      $region46: #{tpu_custom_call.1} parent=43 // pred_check_branch
        %4420 = sbr.rel (%p4418) target = $region48
      $region47: #{tpu_custom_call.1} parent=43 // pred_region
        %s4421 = smul.u32 16, %s22
      $region48: #{tpu_custom_call.1} parent=43 // pred_fallthru
        _
    $region44: #{tpu_custom_call.1} parent=5 // pred_fallthru
      _
    %p4422 = scmp.le.s32.totalorder 2, %s12
    // Predicated region
    $region49: #{tpu_custom_call.1} parent=5 // pred_check
      %p4423 = pneg %p4422
    $region50: #{tpu_custom_call.1} parent=5 // pred_check_branch
      %4425 = sbr.rel (%p4423) target = $region52
    $region51: #{tpu_custom_call.1} parent=5 // pred_region
      %s4426 = ssub.s32 %s12, 2
      // Predicated region
      $region53: #{tpu_custom_call.1} parent=51 // pred_check
        %p4427 = pneg %p191
      $region54: #{tpu_custom_call.1} parent=51 // pred_check_branch
        %4429 = sbr.rel (%p4427) target = $region56
      $region55: #{tpu_custom_call.1} parent=51 // pred_region
        %s4430 = smul.u32 16, %s24
        %p4431 = scmp.lt.s32.totalorder %s23, 1
        %s4432 = scalar_select %p4431, %s23, 1
        %p4433 = scmp.lt.s32.totalorder %s4430, 31
        %s4434 = scalar_select %p4433, %s4430, 31
        %s4435 = smul.addr %s4432, 32
        %s4436 = sadd.s32 %s4434, %s4435
        %s4437 = smul.addr %s4436, 8
        %s4438 = scalar_lea.vmem %s6, %s4437
      $region56: #{tpu_custom_call.1} parent=51 // pred_fallthru
        _
    $region52: #{tpu_custom_call.1} parent=5 // pred_fallthru
      _
  $region6: #{tpu_custom_call.1} parent=0 // loop_footer
    %s16 = sadd.s32 1, %s12
  $region7: #{tpu_custom_call.1} parent=0 // loop_footer_branch
    %11 = sbr.rel target = $region3
  $region8: #{tpu_custom_call.1} parent=0 // loop_exit
    _

</llo_original>
